<compile_context>
chip_gen: v5e
topology: v5e:2x2
jax: 0.10.0
libtpu: 0.0.40
codegen_flags: <defaults>
</compile_context>

<pallas_src>
import jax
import jax.numpy as jnp
from jax.experimental import pallas as pl
from jax.experimental.pallas import tpu as pltpu

LN_EPS = 1e-5          # torch.nn.LayerNorm default
NEG_SLOPE = 0.2        # F.leaky_relu(x, 0.2)

H1, H2, H3, H4 = 1024, 512, 256, 1


def _layer_norm(h, gamma, beta):
    mu = jnp.mean(h, axis=-1, keepdims=True)
    var = jnp.mean(jnp.square(h - mu), axis=-1, keepdims=True)
    return (h - mu) * jax.lax.rsqrt(var + LN_EPS) * gamma + beta


def _leaky_relu(h):
    # max(h, 0.2*h) == leaky_relu(h, 0.2) for 0 < slope < 1; 2 VALU ops/elem.
    return jnp.maximum(h, NEG_SLOPE * h)


def discriminator_kernel(
    x_ref,
    w1_ref, b1_ref, g1_ref, be1_ref,
    w2_ref, b2_ref, g2_ref, be2_ref,
    w3_ref, b3_ref, g3_ref, be3_ref,
    w4_ref, b4_ref,
    o_ref,
):
    # bf16 operands on the MXU, f32 accumulation; LN / activation math in f32.
    x = x_ref[...].astype(jnp.bfloat16)

    # fc1 -> ln1 -> leaky_relu
    h = jnp.dot(x, w1_ref[...], preferred_element_type=jnp.float32) + b1_ref[...]
    h = _leaky_relu(_layer_norm(h, g1_ref[...], be1_ref[...]))

    # fc2 -> ln2 -> leaky_relu
    h = jnp.dot(h.astype(jnp.bfloat16), w2_ref[...],
                preferred_element_type=jnp.float32) + b2_ref[...]
    h = _leaky_relu(_layer_norm(h, g2_ref[...], be2_ref[...]))

    # fc3 -> ln3 -> leaky_relu
    h = jnp.dot(h.astype(jnp.bfloat16), w3_ref[...],
                preferred_element_type=jnp.float32) + b3_ref[...]
    h = _leaky_relu(_layer_norm(h, g3_ref[...], be3_ref[...]))

    # fc4 (out_features == 1): VPU multiply + lane reduction instead of a
    # 1-column MXU matmul.  Emit the per-tile result lane-dense as (1, bt):
    # the (bt,) per-row sums are moved sublanes->lanes via the XLU (slack),
    # so the final store is a dense vst instead of masked 1-lane stores.
    row = jnp.sum(h * w4_ref[...], axis=-1)                 # (bt,)
    out = row.reshape(1, o_ref.shape[1]) + b4_ref[...]      # (1, bt)
    o_ref[...] = out.astype(o_ref.dtype)


def _pad_to_multiple(n, m):
    return ((n + m - 1) // m) * m


def prepare_params(params):
    """One-time transform of f32 PyTorch-layout params into kernel operands.

    - fc1..fc3 weights cast to bf16 (MXU operands, half the resident bytes).
    - fc1 weight K-dim zero-padded to a multiple of 128 (full MXU passes).
    - fc4 weight reshaped to a (1, 256) f32 row (VPU broadcast multiply).
    Done once at init so repeated forward calls pay no extra HBM cast pass.
    """
    (w1, b1, g1, be1, w2, b2, g2, be2, w3, b3, g3, be3, w4, b4) = params
    d_in = w1.shape[0]
    d_pad = _pad_to_multiple(d_in, 128)
    if d_pad != d_in:
        w1 = jnp.pad(w1, ((0, d_pad - d_in), (0, 0)))
    w1b = w1.astype(jnp.bfloat16)
    w2b = w2.astype(jnp.bfloat16)
    w3b = w3.astype(jnp.bfloat16)
    w4r = w4.reshape(1, H3).astype(jnp.float32)
    return (w1b, b1, g1, be1, w2b, b2, g2, be2, w3b, b3, g3, be3, w4r, b4)


def _pick_batch_tile(B, batch_tile):
    if B > batch_tile:
        return batch_tile
    # Small/medium batch: give the grid 2 steps when each half stays
    # lane-dense (multiple of 128) so v7x's two TensorCores both get work.
    half = B // 2
    if B % 2 == 0 and half >= 128 and half % 128 == 0:
        return half
    return B


def _vmem_limit_bytes(bt, d_pad, ops):
    # Resident params are double-buffered by default; x / out tiles too.
    resident = sum(2 * int(o.size) * o.dtype.itemsize for o in ops)
    streamed = 2 * bt * d_pad * 4 + 2 * bt * 4
    act_headroom = 6 * bt * H1 * 4          # fused LN chain temporaries
    total = resident + streamed + act_headroom + (8 << 20)
    return int(min(max(total, 16 << 20), 64 << 20))


def discriminator_forward(x, prepared_params, *, batch_tile=512):
    """x: [B, d_input_dim] float32; returns [B, 1] float32.

    prepared_params: output of prepare_params() (bf16 weights, padded fc1).
    batch_tile: rows per grid step; large (512-1024) tiles amortize per-step
    overhead for big batches, small batches collapse to one (or two) steps.
    """
    B, D = x.shape
    ops = prepared_params
    d_pad = ops[0].shape[0]               # fc1 K dim (possibly zero-padded)
    assert d_pad >= D and d_pad % 128 == 0

    bt = _pick_batch_tile(B, batch_tile)
    assert B % bt == 0, "batch must be divisible by the batch tile"
    # Multi-tile case: bt must be lane-dense for the (1, bt) output block
    # (this also covers bf16 sublane packing, 16 rows/vreg).
    assert bt == B or bt % 128 == 0, "batch tile must be a multiple of 128"

    if d_pad != D:
        # Zero-pad K to the MXU-friendly width (numerically exact).
        x = jnp.pad(x, ((0, 0), (0, d_pad - D)))

    def resident(arr):
        # Full-array block, constant index map: fetched once, stays in VMEM
        # across all batch tiles.
        return pl.BlockSpec(arr.shape, lambda i: (0, 0))

    grid = (B // bt,)
    in_specs = [pl.BlockSpec((bt, d_pad), lambda i: (i, 0))]
    in_specs += [resident(p) for p in ops]
    # Lane-dense output: (1, bt) blocks tiled along lanes; reshaped to (B, 1)
    # in the wrapper (pure reshape, same element order).
    out_specs = pl.BlockSpec((1, bt), lambda i: (0, i))

    out_row = pl.pallas_call(
        discriminator_kernel,
        out_shape=jax.ShapeDtypeStruct((1, B), jnp.float32),
        grid=grid,
        in_specs=in_specs,
        out_specs=out_specs,
        compiler_params=pltpu.CompilerParams(
            dimension_semantics=("parallel",),
            vmem_limit_bytes=_vmem_limit_bytes(bt, d_pad, ops),
        ),
    )(x, *ops)
    return out_row.reshape(B, 1)


def init_params(key, d_input_dim):
    """Deterministic synthetic init (PyTorch-like uniform +/- 1/sqrt(fan_in))."""
    dims = [(d_input_dim, H1), (H1, H2), (H2, H3), (H3, H4)]
    keys = jax.random.split(key, 2 * len(dims))
    params = []
    for li, (fin, fout) in enumerate(dims):
        bound = 1.0 / jnp.sqrt(jnp.float32(fin))
        w = jax.random.uniform(keys[2 * li], (fin, fout), jnp.float32,
                               minval=-bound, maxval=bound)
        b = jax.random.uniform(keys[2 * li + 1], (1, fout), jnp.float32,
                               minval=-bound, maxval=bound)
        params += [w, b]
        if li < 3:  # LayerNorm gamma=1, beta=0 (PyTorch default init)
            params += [jnp.ones((1, fout), jnp.float32),
                       jnp.zeros((1, fout), jnp.float32)]
    return tuple(params)


def reference_forward(x, params):
    """Pure-JAX reference mirroring the kernel's bf16-matmul / f32-accum math."""
    (w1, b1, g1, be1, w2, b2, g2, be2, w3, b3, g3, be3, w4, b4) = params

    def mm(h, w):
        return jnp.dot(h.astype(jnp.bfloat16), w.astype(jnp.bfloat16),
                       preferred_element_type=jnp.float32)

    h = _leaky_relu(_layer_norm(mm(x, w1) + b1, g1, be1))
    h = _leaky_relu(_layer_norm(mm(h, w2) + b2, g2, be2))
    h = _leaky_relu(_layer_norm(mm(h, w3) + b3, g3, be3))
    return jnp.sum(h * w4.reshape(1, -1), axis=-1, keepdims=True) + b4


if __name__ == "__main__":
    key = jax.random.PRNGKey(0)
    k_x, k_p = jax.random.split(key)

    B, D_IN = 16, 64          # small test: batch=16, d_input_dim=64
    x = jax.random.normal(k_x, (B, D_IN), jnp.float32)
    params = init_params(k_p, D_IN)
    ops = prepare_params(params)   # one-time bf16 cast / pad / reshape

    out = discriminator_forward(x, ops)   # bt collapses to B=16, 1 grid step
    out = jax.block_until_ready(out)

    ref = reference_forward(x, params)
    assert out.shape == (B, 1)
    max_err = jnp.max(jnp.abs(out - ref))
    assert jnp.allclose(out, ref, atol=2e-3, rtol=2e-3), f"max abs err {max_err}"

    print("KERNEL_OK")
</pallas_src>

<mosaic_0001>
module attributes {stable_mosaic.version = 11 : i64} {
  func.func @discriminator_kernel(%arg0: i32, %arg1: memref<16x128xf32, #tpu.memory_space<vmem>>, %arg2: memref<128x1024xbf16, #tpu.memory_space<vmem>>, %arg3: memref<1x1024xf32, #tpu.memory_space<vmem>>, %arg4: memref<1x1024xf32, #tpu.memory_space<vmem>>, %arg5: memref<1x1024xf32, #tpu.memory_space<vmem>>, %arg6: memref<1024x512xbf16, #tpu.memory_space<vmem>>, %arg7: memref<1x512xf32, #tpu.memory_space<vmem>>, %arg8: memref<1x512xf32, #tpu.memory_space<vmem>>, %arg9: memref<1x512xf32, #tpu.memory_space<vmem>>, %arg10: memref<512x256xbf16, #tpu.memory_space<vmem>>, %arg11: memref<1x256xf32, #tpu.memory_space<vmem>>, %arg12: memref<1x256xf32, #tpu.memory_space<vmem>>, %arg13: memref<1x256xf32, #tpu.memory_space<vmem>>, %arg14: memref<1x256xf32, #tpu.memory_space<vmem>>, %arg15: memref<1x1xf32, #tpu.memory_space<vmem>>, %arg16: memref<1x16xf32, #tpu.memory_space<vmem>>) attributes {dimension_semantics = [#tpu.dimension_semantics<parallel>], iteration_bounds = array<i64: 1>, scalar_prefetch = 0 : i64, scratch_operands = 0 : i64, tpu.core_type = #tpu.core_type<tc>, window_params = [{transform_indices = @transform_0, window_bounds = array<i64: 16, 128>}, {pipeline_mode = #tpu.pipeline_mode<synchronous>, transform_indices = @transform_1, window_bounds = array<i64: 128, 1024>}, {pipeline_mode = #tpu.pipeline_mode<synchronous>, transform_indices = @transform_2, window_bounds = array<i64: 1, 1024>}, {pipeline_mode = #tpu.pipeline_mode<synchronous>, transform_indices = @transform_3, window_bounds = array<i64: 1, 1024>}, {pipeline_mode = #tpu.pipeline_mode<synchronous>, transform_indices = @transform_4, window_bounds = array<i64: 1, 1024>}, {pipeline_mode = #tpu.pipeline_mode<synchronous>, transform_indices = @transform_5, window_bounds = array<i64: 1024, 512>}, {pipeline_mode = #tpu.pipeline_mode<synchronous>, transform_indices = @transform_6, window_bounds = array<i64: 1, 512>}, {pipeline_mode = #tpu.pipeline_mode<synchronous>, transform_indices = @transform_7, window_bounds = array<i64: 1, 512>}, {pipeline_mode = #tpu.pipeline_mode<synchronous>, transform_indices = @transform_8, window_bounds = array<i64: 1, 512>}, {pipeline_mode = #tpu.pipeline_mode<synchronous>, transform_indices = @transform_9, window_bounds = array<i64: 512, 256>}, {pipeline_mode = #tpu.pipeline_mode<synchronous>, transform_indices = @transform_10, window_bounds = array<i64: 1, 256>}, {pipeline_mode = #tpu.pipeline_mode<synchronous>, transform_indices = @transform_11, window_bounds = array<i64: 1, 256>}, {pipeline_mode = #tpu.pipeline_mode<synchronous>, transform_indices = @transform_12, window_bounds = array<i64: 1, 256>}, {pipeline_mode = #tpu.pipeline_mode<synchronous>, transform_indices = @transform_13, window_bounds = array<i64: 1, 256>}, {pipeline_mode = #tpu.pipeline_mode<synchronous>, transform_indices = @transform_14, window_bounds = array<i64: 1, 1>}, {transform_indices = @transform_15, window_bounds = array<i64: 1, 16>}]} {
    %c0 = arith.constant 0 : index
    %c0_0 = arith.constant 0 : index
    %0 = vector.load %arg1[%c0, %c0_0] : memref<16x128xf32, #tpu.memory_space<vmem>>, vector<16x128xf32>
    %1 = arith.truncf %0 : vector<16x128xf32> to vector<16x128xbf16>
    %c0_1 = arith.constant 0 : index
    %c0_2 = arith.constant 0 : index
    %2 = vector.load %arg2[%c0_1, %c0_2] : memref<128x1024xbf16, #tpu.memory_space<vmem>>, vector<128x1024xbf16>
    %cst = arith.constant dense<0.000000e+00> : vector<16x1024xf32>
    %3 = tpu.matmul %1, %2, %cst {dimension_numbers = #tpu.dot_dimension_numbers<[1], [0], [0], [1], [0, 0, 1, 1], [], []>} : vector<16x128xbf16>, vector<128x1024xbf16>, vector<16x1024xf32> -> vector<16x1024xf32>
    %c0_3 = arith.constant 0 : index
    %c0_4 = arith.constant 0 : index
    %4 = vector.load %arg3[%c0_3, %c0_4] : memref<1x1024xf32, #tpu.memory_space<vmem>>, vector<1x1024xf32>
    %5 = vector.broadcast %4 : vector<1x1024xf32> to vector<16x1024xf32>
    %6 = arith.addf %3, %5 : vector<16x1024xf32>
    %c0_5 = arith.constant 0 : index
    %c0_6 = arith.constant 0 : index
    %7 = vector.load %arg4[%c0_5, %c0_6] : memref<1x1024xf32, #tpu.memory_space<vmem>>, vector<1x1024xf32>
    %c0_7 = arith.constant 0 : index
    %c0_8 = arith.constant 0 : index
    %8 = vector.load %arg5[%c0_7, %c0_8] : memref<1x1024xf32, #tpu.memory_space<vmem>>, vector<1x1024xf32>
    %cst_9 = arith.constant dense<0.000000e+00> : vector<16xf32>
    %9 = vector.multi_reduction <add>, %6, %cst_9 [1] : vector<16x1024xf32> to vector<16xf32>
    %10 = vector.shape_cast %9 : vector<16xf32> to vector<16x1xf32>
    %cst_10 = arith.constant 1.024000e+03 : f32
    %11 = vector.broadcast %cst_10 : f32 to vector<16x1xf32>
    %12 = arith.divf %10, %11 : vector<16x1xf32>
    %13 = vector.broadcast %12 : vector<16x1xf32> to vector<16x1024xf32>
    %14 = arith.subf %6, %13 : vector<16x1024xf32>
    %15 = arith.mulf %14, %14 : vector<16x1024xf32>
    %cst_11 = arith.constant dense<0.000000e+00> : vector<16xf32>
    %16 = vector.multi_reduction <add>, %15, %cst_11 [1] : vector<16x1024xf32> to vector<16xf32>
    %17 = vector.shape_cast %16 : vector<16xf32> to vector<16x1xf32>
    %cst_12 = arith.constant 1.024000e+03 : f32
    %18 = vector.broadcast %cst_12 : f32 to vector<16x1xf32>
    %19 = arith.divf %17, %18 : vector<16x1xf32>
    %20 = vector.broadcast %12 : vector<16x1xf32> to vector<16x1024xf32>
    %21 = arith.subf %6, %20 : vector<16x1024xf32>
    %cst_13 = arith.constant 9.99999974E-6 : f32
    %22 = vector.broadcast %cst_13 : f32 to vector<16x1xf32>
    %23 = arith.addf %19, %22 : vector<16x1xf32>
    %24 = math.rsqrt %23 : vector<16x1xf32>
    %25 = vector.broadcast %24 : vector<16x1xf32> to vector<16x1024xf32>
    %26 = arith.mulf %21, %25 : vector<16x1024xf32>
    %27 = vector.broadcast %7 : vector<1x1024xf32> to vector<16x1024xf32>
    %28 = arith.mulf %26, %27 : vector<16x1024xf32>
    %29 = vector.broadcast %8 : vector<1x1024xf32> to vector<16x1024xf32>
    %30 = arith.addf %28, %29 : vector<16x1024xf32>
    %cst_14 = arith.constant 2.000000e-01 : f32
    %31 = vector.broadcast %cst_14 : f32 to vector<16x1024xf32>
    %32 = arith.mulf %31, %30 : vector<16x1024xf32>
    %33 = arith.maximumf %30, %32 : vector<16x1024xf32>
    %34 = arith.truncf %33 : vector<16x1024xf32> to vector<16x1024xbf16>
    %c0_15 = arith.constant 0 : index
    %c0_16 = arith.constant 0 : index
    %35 = vector.load %arg6[%c0_15, %c0_16] : memref<1024x512xbf16, #tpu.memory_space<vmem>>, vector<1024x512xbf16>
    %cst_17 = arith.constant dense<0.000000e+00> : vector<16x512xf32>
    %36 = tpu.matmul %34, %35, %cst_17 {dimension_numbers = #tpu.dot_dimension_numbers<[1], [0], [0], [1], [0, 0, 1, 1], [], []>} : vector<16x1024xbf16>, vector<1024x512xbf16>, vector<16x512xf32> -> vector<16x512xf32>
    %c0_18 = arith.constant 0 : index
    %c0_19 = arith.constant 0 : index
    %37 = vector.load %arg7[%c0_18, %c0_19] : memref<1x512xf32, #tpu.memory_space<vmem>>, vector<1x512xf32>
    %38 = vector.broadcast %37 : vector<1x512xf32> to vector<16x512xf32>
    %39 = arith.addf %36, %38 : vector<16x512xf32>
    %c0_20 = arith.constant 0 : index
    %c0_21 = arith.constant 0 : index
    %40 = vector.load %arg8[%c0_20, %c0_21] : memref<1x512xf32, #tpu.memory_space<vmem>>, vector<1x512xf32>
    %c0_22 = arith.constant 0 : index
    %c0_23 = arith.constant 0 : index
    %41 = vector.load %arg9[%c0_22, %c0_23] : memref<1x512xf32, #tpu.memory_space<vmem>>, vector<1x512xf32>
    %cst_24 = arith.constant dense<0.000000e+00> : vector<16xf32>
    %42 = vector.multi_reduction <add>, %39, %cst_24 [1] : vector<16x512xf32> to vector<16xf32>
    %43 = vector.shape_cast %42 : vector<16xf32> to vector<16x1xf32>
    %cst_25 = arith.constant 5.120000e+02 : f32
    %44 = vector.broadcast %cst_25 : f32 to vector<16x1xf32>
    %45 = arith.divf %43, %44 : vector<16x1xf32>
    %46 = vector.broadcast %45 : vector<16x1xf32> to vector<16x512xf32>
    %47 = arith.subf %39, %46 : vector<16x512xf32>
    %48 = arith.mulf %47, %47 : vector<16x512xf32>
    %cst_26 = arith.constant dense<0.000000e+00> : vector<16xf32>
    %49 = vector.multi_reduction <add>, %48, %cst_26 [1] : vector<16x512xf32> to vector<16xf32>
    %50 = vector.shape_cast %49 : vector<16xf32> to vector<16x1xf32>
    %cst_27 = arith.constant 5.120000e+02 : f32
    %51 = vector.broadcast %cst_27 : f32 to vector<16x1xf32>
    %52 = arith.divf %50, %51 : vector<16x1xf32>
    %53 = vector.broadcast %45 : vector<16x1xf32> to vector<16x512xf32>
    %54 = arith.subf %39, %53 : vector<16x512xf32>
    %cst_28 = arith.constant 9.99999974E-6 : f32
    %55 = vector.broadcast %cst_28 : f32 to vector<16x1xf32>
    %56 = arith.addf %52, %55 : vector<16x1xf32>
    %57 = math.rsqrt %56 : vector<16x1xf32>
    %58 = vector.broadcast %57 : vector<16x1xf32> to vector<16x512xf32>
    %59 = arith.mulf %54, %58 : vector<16x512xf32>
    %60 = vector.broadcast %40 : vector<1x512xf32> to vector<16x512xf32>
    %61 = arith.mulf %59, %60 : vector<16x512xf32>
    %62 = vector.broadcast %41 : vector<1x512xf32> to vector<16x512xf32>
    %63 = arith.addf %61, %62 : vector<16x512xf32>
    %cst_29 = arith.constant 2.000000e-01 : f32
    %64 = vector.broadcast %cst_29 : f32 to vector<16x512xf32>
    %65 = arith.mulf %64, %63 : vector<16x512xf32>
    %66 = arith.maximumf %63, %65 : vector<16x512xf32>
    %67 = arith.truncf %66 : vector<16x512xf32> to vector<16x512xbf16>
    %c0_30 = arith.constant 0 : index
    %c0_31 = arith.constant 0 : index
    %68 = vector.load %arg10[%c0_30, %c0_31] : memref<512x256xbf16, #tpu.memory_space<vmem>>, vector<512x256xbf16>
    %cst_32 = arith.constant dense<0.000000e+00> : vector<16x256xf32>
    %69 = tpu.matmul %67, %68, %cst_32 {dimension_numbers = #tpu.dot_dimension_numbers<[1], [0], [0], [1], [0, 0, 1, 1], [], []>} : vector<16x512xbf16>, vector<512x256xbf16>, vector<16x256xf32> -> vector<16x256xf32>
    %c0_33 = arith.constant 0 : index
    %c0_34 = arith.constant 0 : index
    %70 = vector.load %arg11[%c0_33, %c0_34] : memref<1x256xf32, #tpu.memory_space<vmem>>, vector<1x256xf32>
    %71 = vector.broadcast %70 : vector<1x256xf32> to vector<16x256xf32>
    %72 = arith.addf %69, %71 : vector<16x256xf32>
    %c0_35 = arith.constant 0 : index
    %c0_36 = arith.constant 0 : index
    %73 = vector.load %arg12[%c0_35, %c0_36] : memref<1x256xf32, #tpu.memory_space<vmem>>, vector<1x256xf32>
    %c0_37 = arith.constant 0 : index
    %c0_38 = arith.constant 0 : index
    %74 = vector.load %arg13[%c0_37, %c0_38] : memref<1x256xf32, #tpu.memory_space<vmem>>, vector<1x256xf32>
    %cst_39 = arith.constant dense<0.000000e+00> : vector<16xf32>
    %75 = vector.multi_reduction <add>, %72, %cst_39 [1] : vector<16x256xf32> to vector<16xf32>
    %76 = vector.shape_cast %75 : vector<16xf32> to vector<16x1xf32>
    %cst_40 = arith.constant 2.560000e+02 : f32
    %77 = vector.broadcast %cst_40 : f32 to vector<16x1xf32>
    %78 = arith.divf %76, %77 : vector<16x1xf32>
    %79 = vector.broadcast %78 : vector<16x1xf32> to vector<16x256xf32>
    %80 = arith.subf %72, %79 : vector<16x256xf32>
    %81 = arith.mulf %80, %80 : vector<16x256xf32>
    %cst_41 = arith.constant dense<0.000000e+00> : vector<16xf32>
    %82 = vector.multi_reduction <add>, %81, %cst_41 [1] : vector<16x256xf32> to vector<16xf32>
    %83 = vector.shape_cast %82 : vector<16xf32> to vector<16x1xf32>
    %cst_42 = arith.constant 2.560000e+02 : f32
    %84 = vector.broadcast %cst_42 : f32 to vector<16x1xf32>
    %85 = arith.divf %83, %84 : vector<16x1xf32>
    %86 = vector.broadcast %78 : vector<16x1xf32> to vector<16x256xf32>
    %87 = arith.subf %72, %86 : vector<16x256xf32>
    %cst_43 = arith.constant 9.99999974E-6 : f32
    %88 = vector.broadcast %cst_43 : f32 to vector<16x1xf32>
    %89 = arith.addf %85, %88 : vector<16x1xf32>
    %90 = math.rsqrt %89 : vector<16x1xf32>
    %91 = vector.broadcast %90 : vector<16x1xf32> to vector<16x256xf32>
    %92 = arith.mulf %87, %91 : vector<16x256xf32>
    %93 = vector.broadcast %73 : vector<1x256xf32> to vector<16x256xf32>
    %94 = arith.mulf %92, %93 : vector<16x256xf32>
    %95 = vector.broadcast %74 : vector<1x256xf32> to vector<16x256xf32>
    %96 = arith.addf %94, %95 : vector<16x256xf32>
    %cst_44 = arith.constant 2.000000e-01 : f32
    %97 = vector.broadcast %cst_44 : f32 to vector<16x256xf32>
    %98 = arith.mulf %97, %96 : vector<16x256xf32>
    %99 = arith.maximumf %96, %98 : vector<16x256xf32>
    %c0_45 = arith.constant 0 : index
    %c0_46 = arith.constant 0 : index
    %100 = vector.load %arg14[%c0_45, %c0_46] : memref<1x256xf32, #tpu.memory_space<vmem>>, vector<1x256xf32>
    %101 = vector.broadcast %100 : vector<1x256xf32> to vector<16x256xf32>
    %102 = arith.mulf %99, %101 : vector<16x256xf32>
    %cst_47 = arith.constant dense<0.000000e+00> : vector<16xf32>
    %103 = vector.multi_reduction <add>, %102, %cst_47 [1] : vector<16x256xf32> to vector<16xf32>
    %104 = vector.shape_cast %103 : vector<16xf32> to vector<1x16xf32>
    %c0_48 = arith.constant 0 : index
    %c0_49 = arith.constant 0 : index
    %105 = vector.load %arg15[%c0_48, %c0_49] : memref<1x1xf32, #tpu.memory_space<vmem>>, vector<1x1xf32>
    %106 = vector.broadcast %105 : vector<1x1xf32> to vector<1x16xf32>
    %107 = arith.addf %104, %106 : vector<1x16xf32>
    %c0_50 = arith.constant 0 : index
    %c0_51 = arith.constant 0 : index
    %108 = vector.load %arg16[%c0_50, %c0_51] : memref<1x16xf32, #tpu.memory_space<vmem>>, vector<1x16xf32>
    tpu.vector_store %arg16[%c0_50, %c0_51], %107 {strides = array<i32>} : memref<1x16xf32, #tpu.memory_space<vmem>>, vector<1x16xf32>,
    return
  }
  func.func @transform_0(%arg0: i32) -> (i32, i32) {
    %c0_i32 = arith.constant 0 : i32
    %c0_i32_0 = arith.constant 0 : i32
    return %arg0, %c0_i32 : i32, i32
  }
  func.func @transform_1(%arg0: i32) -> (i32, i32) {
    %c0_i32 = arith.constant 0 : i32
    %c0_i32_0 = arith.constant 0 : i32
    %c0_i32_1 = arith.constant 0 : i32
    return %c0_i32, %c0_i32_0 : i32, i32
  }
  func.func @transform_2(%arg0: i32) -> (i32, i32) {
    %c0_i32 = arith.constant 0 : i32
    %c0_i32_0 = arith.constant 0 : i32
    %c0_i32_1 = arith.constant 0 : i32
    return %c0_i32, %c0_i32_0 : i32, i32
  }
  func.func @transform_3(%arg0: i32) -> (i32, i32) {
    %c0_i32 = arith.constant 0 : i32
    %c0_i32_0 = arith.constant 0 : i32
    %c0_i32_1 = arith.constant 0 : i32
    return %c0_i32, %c0_i32_0 : i32, i32
  }
  func.func @transform_4(%arg0: i32) -> (i32, i32) {
    %c0_i32 = arith.constant 0 : i32
    %c0_i32_0 = arith.constant 0 : i32
    %c0_i32_1 = arith.constant 0 : i32
    return %c0_i32, %c0_i32_0 : i32, i32
  }
  func.func @transform_5(%arg0: i32) -> (i32, i32) {
    %c0_i32 = arith.constant 0 : i32
    %c0_i32_0 = arith.constant 0 : i32
    %c0_i32_1 = arith.constant 0 : i32
    return %c0_i32, %c0_i32_0 : i32, i32
  }
  func.func @transform_6(%arg0: i32) -> (i32, i32) {
    %c0_i32 = arith.constant 0 : i32
    %c0_i32_0 = arith.constant 0 : i32
    %c0_i32_1 = arith.constant 0 : i32
    return %c0_i32, %c0_i32_0 : i32, i32
  }
  func.func @transform_7(%arg0: i32) -> (i32, i32) {
    %c0_i32 = arith.constant 0 : i32
    %c0_i32_0 = arith.constant 0 : i32
    %c0_i32_1 = arith.constant 0 : i32
    return %c0_i32, %c0_i32_0 : i32, i32
  }
  func.func @transform_8(%arg0: i32) -> (i32, i32) {
    %c0_i32 = arith.constant 0 : i32
    %c0_i32_0 = arith.constant 0 : i32
    %c0_i32_1 = arith.constant 0 : i32
    return %c0_i32, %c0_i32_0 : i32, i32
  }
  func.func @transform_9(%arg0: i32) -> (i32, i32) {
    %c0_i32 = arith.constant 0 : i32
    %c0_i32_0 = arith.constant 0 : i32
    %c0_i32_1 = arith.constant 0 : i32
    return %c0_i32, %c0_i32_0 : i32, i32
  }
  func.func @transform_10(%arg0: i32) -> (i32, i32) {
    %c0_i32 = arith.constant 0 : i32
    %c0_i32_0 = arith.constant 0 : i32
    %c0_i32_1 = arith.constant 0 : i32
    return %c0_i32, %c0_i32_0 : i32, i32
  }
  func.func @transform_11(%arg0: i32) -> (i32, i32) {
    %c0_i32 = arith.constant 0 : i32
    %c0_i32_0 = arith.constant 0 : i32
    %c0_i32_1 = arith.constant 0 : i32
    return %c0_i32, %c0_i32_0 : i32, i32
  }
  func.func @transform_12(%arg0: i32) -> (i32, i32) {
    %c0_i32 = arith.constant 0 : i32
    %c0_i32_0 = arith.constant 0 : i32
    %c0_i32_1 = arith.constant 0 : i32
    return %c0_i32, %c0_i32_0 : i32, i32
  }
  func.func @transform_13(%arg0: i32) -> (i32, i32) {
    %c0_i32 = arith.constant 0 : i32
    %c0_i32_0 = arith.constant 0 : i32
    %c0_i32_1 = arith.constant 0 : i32
    return %c0_i32, %c0_i32_0 : i32, i32
  }
  func.func @transform_14(%arg0: i32) -> (i32, i32) {
    %c0_i32 = arith.constant 0 : i32
    %c0_i32_0 = arith.constant 0 : i32
    %c0_i32_1 = arith.constant 0 : i32
    return %c0_i32, %c0_i32_0 : i32, i32
  }
  func.func @transform_15(%arg0: i32) -> (i32, i32) {
    %c0_i32 = arith.constant 0 : i32
    %c0_i32_0 = arith.constant 0 : i32
    return %c0_i32, %arg0 : i32, i32
  }
}

</mosaic_0001>

<llo_original>
// kernel: tpu_custom_call.1
$region0: #{tpu_custom_call.1}
  #allocation0 [shape = 'u32[]', space=smem, size = 0x4, offset = 0x4, fixed_abs, tag = 'smem constant byte address 0x4 - core index']
  #allocation1 [shape = 'u32[72,128]{1,0:T(1,128)}', space=vmem, size = 0x9000, scoped, tag = 'internal scratch']
  #allocation2 [shape = 'f32[1,1]{1,0:T(1,128)S(1)}', space=vmem, size = 0x200, scoped, tag = 'scoped memory for tpu_custom_call.1']
  %s0 = inlined_call_operand.hbm [shape: f32[16,128], index: 0, kind: input, shape index: {}]
  %s1 = inlined_call_operand.hbm [shape: bf16[128,1024], index: 1, kind: input, shape index: {}]
  %s2 = inlined_call_operand.hbm [shape: f32[1,1024], index: 2, kind: input, shape index: {}]
  %s3 = inlined_call_operand.hbm [shape: f32[1,1024], index: 3, kind: input, shape index: {}]
  %s4 = inlined_call_operand.hbm [shape: f32[1,1024], index: 4, kind: input, shape index: {}]
  %s5 = inlined_call_operand.hbm [shape: bf16[1024,512], index: 5, kind: input, shape index: {}]
  %s6 = inlined_call_operand.vmem [shape: f32[1,512], index: 6, kind: input, shape index: {}]
  %s7 = inlined_call_operand.vmem [shape: f32[1,512], index: 7, kind: input, shape index: {}]
  %s8 = inlined_call_operand.hbm [shape: f32[1,512], index: 8, kind: input, shape index: {}]
  %s9 = inlined_call_operand.hbm [shape: bf16[512,256], index: 9, kind: input, shape index: {}]
  %s10 = inlined_call_operand.vmem [shape: f32[1,256], index: 10, kind: input, shape index: {}]
  %s11 = inlined_call_operand.vmem [shape: f32[1,256], index: 11, kind: input, shape index: {}]
  %s12 = inlined_call_operand.hbm [shape: f32[1,256], index: 12, kind: input, shape index: {}]
  %s13 = inlined_call_operand.vmem [shape: f32[1,256], index: 13, kind: input, shape index: {}]
  %s14 = inlined_call_operand.<no memory space> [shape: f32[1,1], index: 14, kind: input, shape index: {}]
  %s15 = inlined_call_operand.hbm [shape: f32[1,16], index: 15, kind: output, shape index: {}]
  %s16 = sld [smem:[#allocation0]]
  $region106: #{tpu_custom_call.1} parent=0
    _
  %s18 = ssub.s32 1, %s16
  %s19 = scalar_select 0, %s18, %s16
  %v20 = vstv %s14
  %21 = vst [vmem:[#allocation2] sm:$0x1] %v20
  $region1: #{tpu_custom_call.1} parent=0
    #allocation3 [shape = 'u8[8192]{0}', space=vmem, size = 0x2000, scoped, tag = 'input window, operand 0, single buffered']
    #allocation4 [shape = 's32[1]{0}', space=sflag, size = 0x4, scoped, tag = 'scoped memory for tpu_custom_call.1']
    #allocation5 [shape = 's32[1]{0}', space=sflag, size = 0x4, scoped, tag = 'scoped memory for tpu_custom_call.1']
    #allocation6 [shape = 'u8[262144]{0}', space=vmem, size = 0x40000, scoped, tag = 'input window, operand 1, single buffered']
    #allocation7 [shape = 's32[1]{0}', space=sflag, size = 0x4, scoped, tag = 'scoped memory for tpu_custom_call.1']
    #allocation8 [shape = 'u8[4096]{0}', space=vmem, size = 0x1000, scoped, tag = 'input window, operand 2, single buffered']
    #allocation9 [shape = 'u8[4096]{0}', space=vmem, size = 0x1000, scoped, tag = 'input window, operand 3, single buffered']
    #allocation10 [shape = 's32[1]{0}', space=sflag, size = 0x4, scoped, tag = 'scoped memory for tpu_custom_call.1']
    #allocation11 [shape = 'u8[4096]{0}', space=vmem, size = 0x1000, scoped, tag = 'input window, operand 4, single buffered']
    #allocation12 [shape = 'u8[1048576]{0}', space=vmem, size = 0x100000, scoped, tag = 'input window, operand 5, single buffered']
    #allocation13 [shape = 's32[1]{0}', space=sflag, size = 0x4, scoped, tag = 'scoped memory for tpu_custom_call.1']
    #allocation14 [shape = 'u8[2048]{0}', space=vmem, size = 0x800, scoped, tag = 'input window, operand 8, single buffered']
    #allocation15 [shape = 'u8[262144]{0}', space=vmem, size = 0x40000, scoped, tag = 'input window, operand 9, single buffered']
    #allocation16 [shape = 's32[1]{0}', space=sflag, size = 0x4, scoped, tag = 'scoped memory for tpu_custom_call.1']
    #allocation17 [shape = 'u8[1024]{0}', space=vmem, size = 0x400, scoped, tag = 'input window, operand 12, single buffered']
    #allocation18 [shape = 'u8[512]{0}', space=vmem, size = 0x400, scoped, tag = 'output window, operand 0, single buffered']
    %22 = vsyncpa [#allocation4], 0
    %23 = vsyncpa [#allocation7], 0
    %24 = vsyncpa [#allocation10], 0
    %25 = vsyncpa [#allocation13], 0
    %26 = vsyncpa [#allocation16], 0
    %27 = vsyncpa [#allocation5], 0
    // Predicated region
    $region2: #{tpu_custom_call.1} parent=1 // pred_check
      _
    $region3: #{tpu_custom_call.1} parent=1 // pred_check_branch
      %29 = sbr.rel (0) target = $region5
    $region4: #{tpu_custom_call.1} parent=1 // pred_region
      %31 = vsyncadd [#allocation4], 0
      %s32 = sshll.u32 %s0, 4
      %s33 = int_to_ptr.hbm [resolvable:$true] %s32
      %s34 = sshll.u32 [#allocation3], 4
      %s35 = int_to_ptr.vmem [resolvable:$true] %s34
      %40 = dma.hbm_to_vmem [thread:$0]  %s33, 256, %s35, [#allocation4], 128, 128, 8
    $region5: #{tpu_custom_call.1} parent=1 // pred_fallthru
      _
    // Predicated region
    $region6: #{tpu_custom_call.1} parent=1 // pred_check
      _
    $region7: #{tpu_custom_call.1} parent=1 // pred_check_branch
      %42 = sbr.rel (0) target = $region9
    $region8: #{tpu_custom_call.1} parent=1 // pred_region
      %44 = vsyncadd [#allocation7], 0
      %s45 = sshll.u32 %s1, 4
      %s46 = int_to_ptr.hbm [resolvable:$true] %s45
      %s47 = sshll.u32 [#allocation6], 4
      %s48 = int_to_ptr.vmem [resolvable:$true] %s47
      %53 = dma.hbm_to_vmem [thread:$0]  %s46, 8192, %s48, [#allocation7], 512, 512, 32
    $region9: #{tpu_custom_call.1} parent=1 // pred_fallthru
      _
    // Predicated region
    $region10: #{tpu_custom_call.1} parent=1 // pred_check
      _
    $region11: #{tpu_custom_call.1} parent=1 // pred_check_branch
      %55 = sbr.rel (0) target = $region13
    $region12: #{tpu_custom_call.1} parent=1 // pred_region
      %57 = vsyncadd [#allocation7], 0
      %s59 = sshll.u32 %s2, 4
      %s60 = int_to_ptr.hbm [resolvable:$true] %s59
      %s61 = sshll.u32 [#allocation8], 4
      %s62 = int_to_ptr.vmem [resolvable:$true] %s61
      %64 = dma.hbm_to_vmem [thread:$0]  %s60, 128, %s62, [#allocation7]
    $region13: #{tpu_custom_call.1} parent=1 // pred_fallthru
      _
    // Predicated region
    $region14: #{tpu_custom_call.1} parent=1 // pred_check
      _
    $region15: #{tpu_custom_call.1} parent=1 // pred_check_branch
      %66 = sbr.rel (0) target = $region17
    $region16: #{tpu_custom_call.1} parent=1 // pred_region
      %68 = vsyncadd [#allocation10], 0
      %s70 = sshll.u32 %s3, 4
      %s71 = int_to_ptr.hbm [resolvable:$true] %s70
      %s72 = sshll.u32 [#allocation9], 4
      %s73 = int_to_ptr.vmem [resolvable:$true] %s72
      %75 = dma.hbm_to_vmem [thread:$0]  %s71, 128, %s73, [#allocation10]
    $region17: #{tpu_custom_call.1} parent=1 // pred_fallthru
      _
    // Predicated region
    $region18: #{tpu_custom_call.1} parent=1 // pred_check
      _
    $region19: #{tpu_custom_call.1} parent=1 // pred_check_branch
      %77 = sbr.rel (0) target = $region21
    $region20: #{tpu_custom_call.1} parent=1 // pred_region
      %79 = vsyncadd [#allocation10], 0
      %s81 = sshll.u32 %s4, 4
      %s82 = int_to_ptr.hbm [resolvable:$true] %s81
      %s83 = sshll.u32 [#allocation11], 4
      %s84 = int_to_ptr.vmem [resolvable:$true] %s83
      %86 = dma.hbm_to_vmem [thread:$0]  %s82, 128, %s84, [#allocation10]
    $region21: #{tpu_custom_call.1} parent=1 // pred_fallthru
      _
    // Predicated region
    $region22: #{tpu_custom_call.1} parent=1 // pred_check
      _
    $region23: #{tpu_custom_call.1} parent=1 // pred_check_branch
      %88 = sbr.rel (0) target = $region25
    $region24: #{tpu_custom_call.1} parent=1 // pred_region
      %90 = vsyncadd [#allocation13], 0
      %s91 = sshll.u32 %s5, 4
      %s92 = int_to_ptr.hbm [resolvable:$true] %s91
      %s93 = sshll.u32 [#allocation12], 4
      %s94 = int_to_ptr.vmem [resolvable:$true] %s93
      %99 = dma.hbm_to_vmem [thread:$0]  %s92, 32768, %s94, [#allocation13], 256, 256, 16
    $region25: #{tpu_custom_call.1} parent=1 // pred_fallthru
      _
    // Predicated region
    $region26: #{tpu_custom_call.1} parent=1 // pred_check
      _
    $region27: #{tpu_custom_call.1} parent=1 // pred_check_branch
      %101 = sbr.rel (0) target = $region29
    $region28: #{tpu_custom_call.1} parent=1 // pred_region
      _
    $region29: #{tpu_custom_call.1} parent=1 // pred_fallthru
      _
    // Predicated region
    $region30: #{tpu_custom_call.1} parent=1 // pred_check
      _
    $region31: #{tpu_custom_call.1} parent=1 // pred_check_branch
      %103 = sbr.rel (0) target = $region33
    $region32: #{tpu_custom_call.1} parent=1 // pred_region
      _
    $region33: #{tpu_custom_call.1} parent=1 // pred_fallthru
      _
    // Predicated region
    $region34: #{tpu_custom_call.1} parent=1 // pred_check
      _
    $region35: #{tpu_custom_call.1} parent=1 // pred_check_branch
      %105 = sbr.rel (0) target = $region37
    $region36: #{tpu_custom_call.1} parent=1 // pred_region
      %107 = vsyncadd [#allocation13], 0
      %s109 = sshll.u32 %s8, 4
      %s110 = int_to_ptr.hbm [resolvable:$true] %s109
      %s111 = sshll.u32 [#allocation14], 4
      %s112 = int_to_ptr.vmem [resolvable:$true] %s111
      %114 = dma.hbm_to_vmem [thread:$0]  %s110, 64, %s112, [#allocation13]
    $region37: #{tpu_custom_call.1} parent=1 // pred_fallthru
      _
    // Predicated region
    $region38: #{tpu_custom_call.1} parent=1 // pred_check
      _
    $region39: #{tpu_custom_call.1} parent=1 // pred_check_branch
      %116 = sbr.rel (0) target = $region41
    $region40: #{tpu_custom_call.1} parent=1 // pred_region
      %118 = vsyncadd [#allocation16], 0
      %s119 = sshll.u32 %s9, 4
      %s120 = int_to_ptr.hbm [resolvable:$true] %s119
      %s121 = sshll.u32 [#allocation15], 4
      %s122 = int_to_ptr.vmem [resolvable:$true] %s121
      %127 = dma.hbm_to_vmem [thread:$0]  %s120, 8192, %s122, [#allocation16], 128, 128, 8
    $region41: #{tpu_custom_call.1} parent=1 // pred_fallthru
      _
    // Predicated region
    $region42: #{tpu_custom_call.1} parent=1 // pred_check
      _
    $region43: #{tpu_custom_call.1} parent=1 // pred_check_branch
      %129 = sbr.rel (0) target = $region45
    $region44: #{tpu_custom_call.1} parent=1 // pred_region
      _
    $region45: #{tpu_custom_call.1} parent=1 // pred_fallthru
      _
    // Predicated region
    $region46: #{tpu_custom_call.1} parent=1 // pred_check
      _
    $region47: #{tpu_custom_call.1} parent=1 // pred_check_branch
      %131 = sbr.rel (0) target = $region49
    $region48: #{tpu_custom_call.1} parent=1 // pred_region
      _
    $region49: #{tpu_custom_call.1} parent=1 // pred_fallthru
      _
    // Predicated region
    $region50: #{tpu_custom_call.1} parent=1 // pred_check
      _
    $region51: #{tpu_custom_call.1} parent=1 // pred_check_branch
      %133 = sbr.rel (0) target = $region53
    $region52: #{tpu_custom_call.1} parent=1 // pred_region
      %135 = vsyncadd [#allocation16], 0
      %s137 = sshll.u32 %s12, 4
      %s138 = int_to_ptr.hbm [resolvable:$true] %s137
      %s139 = sshll.u32 [#allocation17], 4
      %s140 = int_to_ptr.vmem [resolvable:$true] %s139
      %142 = dma.hbm_to_vmem [thread:$0]  %s138, 32, %s140, [#allocation16]
    $region53: #{tpu_custom_call.1} parent=1 // pred_fallthru
      _
    // Predicated region
    $region54: #{tpu_custom_call.1} parent=1 // pred_check
      _
    $region55: #{tpu_custom_call.1} parent=1 // pred_check_branch
      %144 = sbr.rel (0) target = $region57
    $region56: #{tpu_custom_call.1} parent=1 // pred_region
      _
    $region57: #{tpu_custom_call.1} parent=1 // pred_fallthru
      _
    // Predicated region
    $region58: #{tpu_custom_call.1} parent=1 // pred_check
      _
    $region59: #{tpu_custom_call.1} parent=1 // pred_check_branch
      %146 = sbr.rel (0) target = $region61
    $region60: #{tpu_custom_call.1} parent=1 // pred_region
      _
    $region61: #{tpu_custom_call.1} parent=1 // pred_fallthru
      _
    // Predicated region
    $region62: #{tpu_custom_call.1} parent=1 // pred_check
      _
    $region63: #{tpu_custom_call.1} parent=1 // pred_check_branch
      %148 = sbr.rel (0) target = $region65
    $region64: #{tpu_custom_call.1} parent=1 // pred_region
      %150 = dma.done [#allocation4], 256
    $region65: #{tpu_custom_call.1} parent=1 // pred_fallthru
      _
    // Predicated region
    $region66: #{tpu_custom_call.1} parent=1 // pred_check
      _
    $region67: #{tpu_custom_call.1} parent=1 // pred_check_branch
      %152 = sbr.rel (0) target = $region69
    $region68: #{tpu_custom_call.1} parent=1 // pred_region
      %154 = dma.done [#allocation7], 8192
    $region69: #{tpu_custom_call.1} parent=1 // pred_fallthru
      _
    // Predicated region
    $region70: #{tpu_custom_call.1} parent=1 // pred_check
      _
    $region71: #{tpu_custom_call.1} parent=1 // pred_check_branch
      %156 = sbr.rel (0) target = $region73
    $region72: #{tpu_custom_call.1} parent=1 // pred_region
      %158 = dma.done [#allocation7], 128
    $region73: #{tpu_custom_call.1} parent=1 // pred_fallthru
      _
    // Predicated region
    $region74: #{tpu_custom_call.1} parent=1 // pred_check
      _
    $region75: #{tpu_custom_call.1} parent=1 // pred_check_branch
      %160 = sbr.rel (0) target = $region77
    $region76: #{tpu_custom_call.1} parent=1 // pred_region
      %162 = dma.done [#allocation10], 128
    $region77: #{tpu_custom_call.1} parent=1 // pred_fallthru
      _
    // Predicated region
    $region78: #{tpu_custom_call.1} parent=1 // pred_check
      _
    $region79: #{tpu_custom_call.1} parent=1 // pred_check_branch
      %164 = sbr.rel (0) target = $region81
    $region80: #{tpu_custom_call.1} parent=1 // pred_region
      %166 = dma.done [#allocation10], 128
    $region81: #{tpu_custom_call.1} parent=1 // pred_fallthru
      _
    // Predicated region
    $region82: #{tpu_custom_call.1} parent=1 // pred_check
      _
    $region83: #{tpu_custom_call.1} parent=1 // pred_check_branch
      %168 = sbr.rel (0) target = $region85
    $region84: #{tpu_custom_call.1} parent=1 // pred_region
      %170 = dma.done [#allocation13], 32768
    $region85: #{tpu_custom_call.1} parent=1 // pred_fallthru
      _
    // Predicated region
    $region86: #{tpu_custom_call.1} parent=1 // pred_check
      _
    $region87: #{tpu_custom_call.1} parent=1 // pred_check_branch
      %172 = sbr.rel (0) target = $region89
    $region88: #{tpu_custom_call.1} parent=1 // pred_region
      %174 = dma.done [#allocation13], 64
    $region89: #{tpu_custom_call.1} parent=1 // pred_fallthru
      _
    // Predicated region
    $region90: #{tpu_custom_call.1} parent=1 // pred_check
      _
    $region91: #{tpu_custom_call.1} parent=1 // pred_check_branch
      %176 = sbr.rel (0) target = $region93
    $region92: #{tpu_custom_call.1} parent=1 // pred_region
      %178 = dma.done [#allocation16], 8192
    $region93: #{tpu_custom_call.1} parent=1 // pred_fallthru
      _
    // Predicated region
    $region94: #{tpu_custom_call.1} parent=1 // pred_check
      _
    $region95: #{tpu_custom_call.1} parent=1 // pred_check_branch
      %180 = sbr.rel (0) target = $region97
    $region96: #{tpu_custom_call.1} parent=1 // pred_region
      %182 = dma.done [#allocation16], 32
    $region97: #{tpu_custom_call.1} parent=1 // pred_fallthru
      _
    %v183 = vld [vmem:[#allocation3] sm:$0xff]
    %v184 = vld [vmem:[#allocation3 + $0x8] sm:$0xff]
    %v185 = vpack.c.bf16 %v184, %v183
    %v186 = vld [vmem:[#allocation6] sm:$0xff]
    %v187 = vld [vmem:[#allocation6 + $0x8] sm:$0xff]
    %v188 = vld [vmem:[#allocation6 + $0x10] sm:$0xff]
    %v189 = vld [vmem:[#allocation6 + $0x18] sm:$0xff]
    %v190 = vld [vmem:[#allocation6 + $0x20] sm:$0xff]
    %v191 = vld [vmem:[#allocation6 + $0x28] sm:$0xff]
    %v192 = vld [vmem:[#allocation6 + $0x30] sm:$0xff]
    %v193 = vld [vmem:[#allocation6 + $0x38] sm:$0xff]
    %v194 = vld [vmem:[#allocation6 + $0x40] sm:$0xff]
    %v195 = vld [vmem:[#allocation6 + $0x48] sm:$0xff]
    %v196 = vld [vmem:[#allocation6 + $0x50] sm:$0xff]
    %v197 = vld [vmem:[#allocation6 + $0x58] sm:$0xff]
    %v198 = vld [vmem:[#allocation6 + $0x60] sm:$0xff]
    %v199 = vld [vmem:[#allocation6 + $0x68] sm:$0xff]
    %v200 = vld [vmem:[#allocation6 + $0x70] sm:$0xff]
    %v201 = vld [vmem:[#allocation6 + $0x78] sm:$0xff]
    %v202 = vld [vmem:[#allocation6 + $0x80] sm:$0xff]
    %v203 = vld [vmem:[#allocation6 + $0x88] sm:$0xff]
    %v204 = vld [vmem:[#allocation6 + $0x90] sm:$0xff]
    %v205 = vld [vmem:[#allocation6 + $0x98] sm:$0xff]
    %v206 = vld [vmem:[#allocation6 + $0xa0] sm:$0xff]
    %v207 = vld [vmem:[#allocation6 + $0xa8] sm:$0xff]
    %v208 = vld [vmem:[#allocation6 + $0xb0] sm:$0xff]
    %v209 = vld [vmem:[#allocation6 + $0xb8] sm:$0xff]
    %v210 = vld [vmem:[#allocation6 + $0xc0] sm:$0xff]
    %v211 = vld [vmem:[#allocation6 + $0xc8] sm:$0xff]
    %v212 = vld [vmem:[#allocation6 + $0xd0] sm:$0xff]
    %v213 = vld [vmem:[#allocation6 + $0xd8] sm:$0xff]
    %v214 = vld [vmem:[#allocation6 + $0xe0] sm:$0xff]
    %v215 = vld [vmem:[#allocation6 + $0xe8] sm:$0xff]
    %v216 = vld [vmem:[#allocation6 + $0xf0] sm:$0xff]
    %v217 = vld [vmem:[#allocation6 + $0xf8] sm:$0xff]
    %v218 = vld [vmem:[#allocation6 + $0x100] sm:$0xff]
    %v219 = vld [vmem:[#allocation6 + $0x108] sm:$0xff]
    %v220 = vld [vmem:[#allocation6 + $0x110] sm:$0xff]
    %v221 = vld [vmem:[#allocation6 + $0x118] sm:$0xff]
    %v222 = vld [vmem:[#allocation6 + $0x120] sm:$0xff]
    %v223 = vld [vmem:[#allocation6 + $0x128] sm:$0xff]
    %v224 = vld [vmem:[#allocation6 + $0x130] sm:$0xff]
    %v225 = vld [vmem:[#allocation6 + $0x138] sm:$0xff]
    %v226 = vld [vmem:[#allocation6 + $0x140] sm:$0xff]
    %v227 = vld [vmem:[#allocation6 + $0x148] sm:$0xff]
    %v228 = vld [vmem:[#allocation6 + $0x150] sm:$0xff]
    %v229 = vld [vmem:[#allocation6 + $0x158] sm:$0xff]
    %v230 = vld [vmem:[#allocation6 + $0x160] sm:$0xff]
    %v231 = vld [vmem:[#allocation6 + $0x168] sm:$0xff]
    %v232 = vld [vmem:[#allocation6 + $0x170] sm:$0xff]
    %v233 = vld [vmem:[#allocation6 + $0x178] sm:$0xff]
    %v234 = vld [vmem:[#allocation6 + $0x180] sm:$0xff]
    %v235 = vld [vmem:[#allocation6 + $0x188] sm:$0xff]
    %v236 = vld [vmem:[#allocation6 + $0x190] sm:$0xff]
    %v237 = vld [vmem:[#allocation6 + $0x198] sm:$0xff]
    %v238 = vld [vmem:[#allocation6 + $0x1a0] sm:$0xff]
    %v239 = vld [vmem:[#allocation6 + $0x1a8] sm:$0xff]
    %v240 = vld [vmem:[#allocation6 + $0x1b0] sm:$0xff]
    %v241 = vld [vmem:[#allocation6 + $0x1b8] sm:$0xff]
    %v242 = vld [vmem:[#allocation6 + $0x1c0] sm:$0xff]
    %v243 = vld [vmem:[#allocation6 + $0x1c8] sm:$0xff]
    %v244 = vld [vmem:[#allocation6 + $0x1d0] sm:$0xff]
    %v245 = vld [vmem:[#allocation6 + $0x1d8] sm:$0xff]
    %v246 = vld [vmem:[#allocation6 + $0x1e0] sm:$0xff]
    %v247 = vld [vmem:[#allocation6 + $0x1e8] sm:$0xff]
    %v248 = vld [vmem:[#allocation6 + $0x1f0] sm:$0xff]
    %v249 = vld [vmem:[#allocation6 + $0x1f8] sm:$0xff]
    %v250 = vld [vmem:[#allocation8] sm:$0xff]
    %v252 = vperm.slane %v250, 0
    %v253 = vperm.slane %v250, 1
    %v254 = vperm.slane %v250, 2
    %v255 = vperm.slane %v250, 3
    %v256 = vperm.slane %v250, 4
    %v257 = vperm.slane %v250, 5
    %v258 = vperm.slane %v250, 6
    %v259 = vperm.slane %v250, 7
    %v332 = vunpack.c.l.b16 %v186
    %v333 = vunpack.c.h.b16 %v186
    %v334 = vunpack.c.l.b16 %v187
    %v335 = vunpack.c.h.b16 %v187
    %v336 = vunpack.c.l.b16 %v188
    %v337 = vunpack.c.h.b16 %v188
    %v338 = vunpack.c.l.b16 %v189
    %v339 = vunpack.c.h.b16 %v189
    %v340 = vunpack.c.l.b16 %v190
    %v341 = vunpack.c.h.b16 %v190
    %v342 = vunpack.c.l.b16 %v191
    %v343 = vunpack.c.h.b16 %v191
    %v344 = vunpack.c.l.b16 %v192
    %v345 = vunpack.c.h.b16 %v192
    %v346 = vunpack.c.l.b16 %v193
    %v347 = vunpack.c.h.b16 %v193
    %v348 = vunpack.c.l.b16 %v194
    %v349 = vunpack.c.h.b16 %v194
    %v350 = vunpack.c.l.b16 %v195
    %v351 = vunpack.c.h.b16 %v195
    %v352 = vunpack.c.l.b16 %v196
    %v353 = vunpack.c.h.b16 %v196
    %v354 = vunpack.c.l.b16 %v197
    %v355 = vunpack.c.h.b16 %v197
    %v356 = vunpack.c.l.b16 %v198
    %v357 = vunpack.c.h.b16 %v198
    %v358 = vunpack.c.l.b16 %v199
    %v359 = vunpack.c.h.b16 %v199
    %v360 = vunpack.c.l.b16 %v200
    %v361 = vunpack.c.h.b16 %v200
    %v362 = vunpack.c.l.b16 %v201
    %v363 = vunpack.c.h.b16 %v201
    %v364 = vunpack.c.l.b16 %v202
    %v365 = vunpack.c.h.b16 %v202
    %v366 = vunpack.c.l.b16 %v203
    %v367 = vunpack.c.h.b16 %v203
    %v368 = vunpack.c.l.b16 %v204
    %v369 = vunpack.c.h.b16 %v204
    %v370 = vunpack.c.l.b16 %v205
    %v371 = vunpack.c.h.b16 %v205
    %v372 = vunpack.c.l.b16 %v206
    %v373 = vunpack.c.h.b16 %v206
    %v374 = vunpack.c.l.b16 %v207
    %v375 = vunpack.c.h.b16 %v207
    %v376 = vunpack.c.l.b16 %v208
    %v377 = vunpack.c.h.b16 %v208
    %v378 = vunpack.c.l.b16 %v209
    %v379 = vunpack.c.h.b16 %v209
    %v380 = vunpack.c.l.b16 %v210
    %v381 = vunpack.c.h.b16 %v210
    %v382 = vunpack.c.l.b16 %v211
    %v383 = vunpack.c.h.b16 %v211
    %v384 = vunpack.c.l.b16 %v212
    %v385 = vunpack.c.h.b16 %v212
    %v386 = vunpack.c.l.b16 %v213
    %v387 = vunpack.c.h.b16 %v213
    %v388 = vunpack.c.l.b16 %v214
    %v389 = vunpack.c.h.b16 %v214
    %v390 = vunpack.c.l.b16 %v215
    %v391 = vunpack.c.h.b16 %v215
    %v392 = vunpack.c.l.b16 %v216
    %v393 = vunpack.c.h.b16 %v216
    %v394 = vunpack.c.l.b16 %v217
    %v395 = vunpack.c.h.b16 %v217
    %v396 = vunpack.c.l.b16 %v218
    %v397 = vunpack.c.h.b16 %v218
    %v398 = vunpack.c.l.b16 %v219
    %v399 = vunpack.c.h.b16 %v219
    %v400 = vunpack.c.l.b16 %v220
    %v401 = vunpack.c.h.b16 %v220
    %v402 = vunpack.c.l.b16 %v221
    %v403 = vunpack.c.h.b16 %v221
    %v404 = vunpack.c.l.b16 %v222
    %v405 = vunpack.c.h.b16 %v222
    %v406 = vunpack.c.l.b16 %v223
    %v407 = vunpack.c.h.b16 %v223
    %v408 = vunpack.c.l.b16 %v224
    %v409 = vunpack.c.h.b16 %v224
    %v410 = vunpack.c.l.b16 %v225
    %v411 = vunpack.c.h.b16 %v225
    %v412 = vunpack.c.l.b16 %v226
    %v413 = vunpack.c.h.b16 %v226
    %v414 = vunpack.c.l.b16 %v227
    %v415 = vunpack.c.h.b16 %v227
    %v416 = vunpack.c.l.b16 %v228
    %v417 = vunpack.c.h.b16 %v228
    %v418 = vunpack.c.l.b16 %v229
    %v419 = vunpack.c.h.b16 %v229
    %v420 = vunpack.c.l.b16 %v230
    %v421 = vunpack.c.h.b16 %v230
    %v422 = vunpack.c.l.b16 %v231
    %v423 = vunpack.c.h.b16 %v231
    %v424 = vunpack.c.l.b16 %v232
    %v425 = vunpack.c.h.b16 %v232
    %v426 = vunpack.c.l.b16 %v233
    %v427 = vunpack.c.h.b16 %v233
    %v428 = vunpack.c.l.b16 %v234
    %v429 = vunpack.c.h.b16 %v234
    %v430 = vunpack.c.l.b16 %v235
    %v431 = vunpack.c.h.b16 %v235
    %v432 = vunpack.c.l.b16 %v236
    %v433 = vunpack.c.h.b16 %v236
    %v434 = vunpack.c.l.b16 %v237
    %v435 = vunpack.c.h.b16 %v237
    %v436 = vunpack.c.l.b16 %v238
    %v437 = vunpack.c.h.b16 %v238
    %v438 = vunpack.c.l.b16 %v239
    %v439 = vunpack.c.h.b16 %v239
    %v440 = vunpack.c.l.b16 %v240
    %v441 = vunpack.c.h.b16 %v240
    %v442 = vunpack.c.l.b16 %v241
    %v443 = vunpack.c.h.b16 %v241
    %v444 = vunpack.c.l.b16 %v242
    %v445 = vunpack.c.h.b16 %v242
    %v446 = vunpack.c.l.b16 %v243
    %v447 = vunpack.c.h.b16 %v243
    %v448 = vunpack.c.l.b16 %v244
    %v449 = vunpack.c.h.b16 %v244
    %v450 = vunpack.c.l.b16 %v245
    %v451 = vunpack.c.h.b16 %v245
    %v452 = vunpack.c.l.b16 %v246
    %v453 = vunpack.c.h.b16 %v246
    %v454 = vunpack.c.l.b16 %v247
    %v455 = vunpack.c.h.b16 %v247
    %v456 = vunpack.c.l.b16 %v248
    %v457 = vunpack.c.h.b16 %v248
    %v458 = vunpack.c.l.b16 %v249
    %v459 = vunpack.c.h.b16 %v249
    %v460 = vpack.c.b16 %v340, %v332
    %v461 = vpack.c.b16 %v341, %v333
    %v462 = vpack.c.b16 %v342, %v334
    %v463 = vpack.c.b16 %v343, %v335
    %v464 = vpack.c.b16 %v344, %v336
    %v465 = vpack.c.b16 %v345, %v337
    %v466 = vpack.c.b16 %v346, %v338
    %v467 = vpack.c.b16 %v347, %v339
    %v468 = vpack.c.b16 %v356, %v348
    %v469 = vpack.c.b16 %v357, %v349
    %v470 = vpack.c.b16 %v358, %v350
    %v471 = vpack.c.b16 %v359, %v351
    %v472 = vpack.c.b16 %v360, %v352
    %v473 = vpack.c.b16 %v361, %v353
    %v474 = vpack.c.b16 %v362, %v354
    %v475 = vpack.c.b16 %v363, %v355
    %v476 = vpack.c.b16 %v372, %v364
    %v477 = vpack.c.b16 %v373, %v365
    %v478 = vpack.c.b16 %v374, %v366
    %v479 = vpack.c.b16 %v375, %v367
    %v480 = vpack.c.b16 %v376, %v368
    %v481 = vpack.c.b16 %v377, %v369
    %v482 = vpack.c.b16 %v378, %v370
    %v483 = vpack.c.b16 %v379, %v371
    %v484 = vpack.c.b16 %v388, %v380
    %v485 = vpack.c.b16 %v389, %v381
    %v486 = vpack.c.b16 %v390, %v382
    %v487 = vpack.c.b16 %v391, %v383
    %v488 = vpack.c.b16 %v392, %v384
    %v489 = vpack.c.b16 %v393, %v385
    %v490 = vpack.c.b16 %v394, %v386
    %v491 = vpack.c.b16 %v395, %v387
    %v492 = vpack.c.b16 %v404, %v396
    %v493 = vpack.c.b16 %v405, %v397
    %v494 = vpack.c.b16 %v406, %v398
    %v495 = vpack.c.b16 %v407, %v399
    %v496 = vpack.c.b16 %v408, %v400
    %v497 = vpack.c.b16 %v409, %v401
    %v498 = vpack.c.b16 %v410, %v402
    %v499 = vpack.c.b16 %v411, %v403
    %v500 = vpack.c.b16 %v420, %v412
    %v501 = vpack.c.b16 %v421, %v413
    %v502 = vpack.c.b16 %v422, %v414
    %v503 = vpack.c.b16 %v423, %v415
    %v504 = vpack.c.b16 %v424, %v416
    %v505 = vpack.c.b16 %v425, %v417
    %v506 = vpack.c.b16 %v426, %v418
    %v507 = vpack.c.b16 %v427, %v419
    %v508 = vpack.c.b16 %v436, %v428
    %v509 = vpack.c.b16 %v437, %v429
    %v510 = vpack.c.b16 %v438, %v430
    %v511 = vpack.c.b16 %v439, %v431
    %v512 = vpack.c.b16 %v440, %v432
    %v513 = vpack.c.b16 %v441, %v433
    %v514 = vpack.c.b16 %v442, %v434
    %v515 = vpack.c.b16 %v443, %v435
    %v516 = vpack.c.b16 %v452, %v444
    %v517 = vpack.c.b16 %v453, %v445
    %v518 = vpack.c.b16 %v454, %v446
    %v519 = vpack.c.b16 %v455, %v447
    %v520 = vpack.c.b16 %v456, %v448
    %v521 = vpack.c.b16 %v457, %v449
    %v522 = vpack.c.b16 %v458, %v450
    %v523 = vpack.c.b16 %v459, %v451
    %588 = vmatpush.bf16.msra.mxu0 %v516
    %589 = vmatpush.bf16.msra.mxu0 %v508
    %590 = vmatpush.bf16.msra.mxu0 %v500
    %591 = vmatpush.bf16.msra.mxu0 %v492
    %592 = vmatpush.bf16.msra.mxu0 %v484
    %593 = vmatpush.bf16.msra.mxu0 %v476
    %594 = vmatpush.bf16.msra.mxu0 %v468
    %595 = vmatpush.bf16.msra.mxu0 %v460
    %596 = vmatmul.bf16.gmra.mxu0 %v185
    %v597 = vpop.f32.mrf.mxu0
    %v598 = vadd.f32 %v252, %v597
    %v599 = vpop.f32.mrf.mxu0
    %v600 = vadd.f32 %v252, %v599
    %601 = vdwg.mxu0
    %602 = vmatpush.bf16.msra.mxu0 %v517
    %603 = vmatpush.bf16.msra.mxu0 %v509
    %604 = vmatpush.bf16.msra.mxu0 %v501
    %605 = vmatpush.bf16.msra.mxu0 %v493
    %606 = vmatpush.bf16.msra.mxu0 %v485
    %607 = vmatpush.bf16.msra.mxu0 %v477
    %608 = vmatpush.bf16.msra.mxu0 %v469
    %609 = vmatpush.bf16.msra.mxu0 %v461
    %610 = vmatmul.bf16.gmra.mxu0 %v185
    %v611 = vpop.f32.mrf.mxu0
    %v612 = vadd.f32 %v253, %v611
    %v613 = vpop.f32.mrf.mxu0
    %v614 = vadd.f32 %v253, %v613
    %615 = vdwg.mxu0
    %616 = vmatpush.bf16.msra.mxu0 %v518
    %617 = vmatpush.bf16.msra.mxu0 %v510
    %618 = vmatpush.bf16.msra.mxu0 %v502
    %619 = vmatpush.bf16.msra.mxu0 %v494
    %620 = vmatpush.bf16.msra.mxu0 %v486
    %621 = vmatpush.bf16.msra.mxu0 %v478
    %622 = vmatpush.bf16.msra.mxu0 %v470
    %623 = vmatpush.bf16.msra.mxu0 %v462
    %624 = vmatmul.bf16.gmra.mxu0 %v185
    %v625 = vpop.f32.mrf.mxu0
    %v626 = vadd.f32 %v254, %v625
    %v627 = vpop.f32.mrf.mxu0
    %v628 = vadd.f32 %v254, %v627
    %629 = vdwg.mxu0
    %630 = vmatpush.bf16.msra.mxu0 %v519
    %631 = vmatpush.bf16.msra.mxu0 %v511
    %632 = vmatpush.bf16.msra.mxu0 %v503
    %633 = vmatpush.bf16.msra.mxu0 %v495
    %634 = vmatpush.bf16.msra.mxu0 %v487
    %635 = vmatpush.bf16.msra.mxu0 %v479
    %636 = vmatpush.bf16.msra.mxu0 %v471
    %637 = vmatpush.bf16.msra.mxu0 %v463
    %638 = vmatmul.bf16.gmra.mxu0 %v185
    %v639 = vpop.f32.mrf.mxu0
    %v640 = vadd.f32 %v255, %v639
    %v641 = vpop.f32.mrf.mxu0
    %v642 = vadd.f32 %v255, %v641
    %643 = vdwg.mxu0
    %644 = vmatpush.bf16.msra.mxu0 %v520
    %645 = vmatpush.bf16.msra.mxu0 %v512
    %646 = vmatpush.bf16.msra.mxu0 %v504
    %647 = vmatpush.bf16.msra.mxu0 %v496
    %648 = vmatpush.bf16.msra.mxu0 %v488
    %649 = vmatpush.bf16.msra.mxu0 %v480
    %650 = vmatpush.bf16.msra.mxu0 %v472
    %651 = vmatpush.bf16.msra.mxu0 %v464
    %652 = vmatmul.bf16.gmra.mxu0 %v185
    %v653 = vpop.f32.mrf.mxu0
    %v654 = vadd.f32 %v256, %v653
    %v655 = vpop.f32.mrf.mxu0
    %v656 = vadd.f32 %v256, %v655
    %657 = vdwg.mxu0
    %658 = vmatpush.bf16.msra.mxu0 %v521
    %659 = vmatpush.bf16.msra.mxu0 %v513
    %660 = vmatpush.bf16.msra.mxu0 %v505
    %661 = vmatpush.bf16.msra.mxu0 %v497
    %662 = vmatpush.bf16.msra.mxu0 %v489
    %663 = vmatpush.bf16.msra.mxu0 %v481
    %664 = vmatpush.bf16.msra.mxu0 %v473
    %665 = vmatpush.bf16.msra.mxu0 %v465
    %666 = vmatmul.bf16.gmra.mxu0 %v185
    %v667 = vpop.f32.mrf.mxu0
    %v668 = vadd.f32 %v257, %v667
    %v669 = vpop.f32.mrf.mxu0
    %v670 = vadd.f32 %v257, %v669
    %671 = vdwg.mxu0
    %672 = vmatpush.bf16.msra.mxu0 %v522
    %673 = vmatpush.bf16.msra.mxu0 %v514
    %674 = vmatpush.bf16.msra.mxu0 %v506
    %675 = vmatpush.bf16.msra.mxu0 %v498
    %676 = vmatpush.bf16.msra.mxu0 %v490
    %677 = vmatpush.bf16.msra.mxu0 %v482
    %678 = vmatpush.bf16.msra.mxu0 %v474
    %679 = vmatpush.bf16.msra.mxu0 %v466
    %680 = vmatmul.bf16.gmra.mxu0 %v185
    %v681 = vpop.f32.mrf.mxu0
    %v682 = vadd.f32 %v258, %v681
    %v683 = vpop.f32.mrf.mxu0
    %v684 = vadd.f32 %v258, %v683
    %685 = vdwg.mxu0
    %686 = vmatpush.bf16.msra.mxu0 %v523
    %687 = vmatpush.bf16.msra.mxu0 %v515
    %688 = vmatpush.bf16.msra.mxu0 %v507
    %689 = vmatpush.bf16.msra.mxu0 %v499
    %690 = vmatpush.bf16.msra.mxu0 %v491
    %691 = vmatpush.bf16.msra.mxu0 %v483
    %692 = vmatpush.bf16.msra.mxu0 %v475
    %693 = vmatpush.bf16.msra.mxu0 %v467
    %694 = vmatmul.bf16.gmra.mxu0 %v185
    %v695 = vpop.f32.mrf.mxu0
    %v696 = vadd.f32 %v259, %v695
    %v697 = vpop.f32.mrf.mxu0
    %v698 = vadd.f32 %v259, %v697
    %699 = vdwg.mxu0
    %v700 = vld [vmem:[#allocation9] sm:$0xff]
    %v701 = vld [vmem:[#allocation11] sm:$0xff]
    %v702 = vadd.f32 %v598, %v612
    %v703 = vadd.f32 %v702, %v626
    %v704 = vadd.f32 %v703, %v640
    %v705 = vadd.f32 %v704, %v654
    %v706 = vadd.f32 %v705, %v668
    %v707 = vadd.f32 %v706, %v682
    %v708 = vadd.f32 %v707, %v696
    %709 = vadd.xlane.f32.xlu0 %v708
    %v710 = vpop.xlane.xlu0 %709
    %v711 = vadd.f32 %v600, %v614
    %v712 = vadd.f32 %v711, %v628
    %v713 = vadd.f32 %v712, %v642
    %v714 = vadd.f32 %v713, %v656
    %v715 = vadd.f32 %v714, %v670
    %v716 = vadd.f32 %v715, %v684
    %v717 = vadd.f32 %v716, %v698
    %718 = vadd.xlane.f32.xlu0 %v717
    %v719 = vpop.xlane.xlu0 %718
    %v720 = vrcp.pop 1024.0
    %v721 = vmul.f32 1024.0, %v720
    %v722 = vsub.f32 1.0, %v721
    %v723 = vmul.f32 %v720, %v722
    %v724 = vadd.f32 %v720, %v723
    %vm725 = vweird.f32 %v720
    %v726 = vsel %vm725, %v720, %v724
    %v727 = vmul.f32 %v710, %v726
    %v728 = vmul.f32 %v719, %v726
    %v729 = vsub.f32 %v598, %v727
    %v730 = vsub.f32 %v612, %v727
    %v731 = vsub.f32 %v626, %v727
    %v732 = vsub.f32 %v640, %v727
    %v733 = vsub.f32 %v654, %v727
    %v734 = vsub.f32 %v668, %v727
    %v735 = vsub.f32 %v682, %v727
    %v736 = vsub.f32 %v696, %v727
    %v737 = vsub.f32 %v600, %v728
    %v738 = vsub.f32 %v614, %v728
    %v739 = vsub.f32 %v628, %v728
    %v740 = vsub.f32 %v642, %v728
    %v741 = vsub.f32 %v656, %v728
    %v742 = vsub.f32 %v670, %v728
    %v743 = vsub.f32 %v684, %v728
    %v744 = vsub.f32 %v698, %v728
    %v745 = vmul.f32 %v729, %v729
    %v746 = vmul.f32 %v730, %v730
    %v747 = vmul.f32 %v731, %v731
    %v748 = vmul.f32 %v732, %v732
    %v749 = vmul.f32 %v733, %v733
    %v750 = vmul.f32 %v734, %v734
    %v751 = vmul.f32 %v735, %v735
    %v752 = vmul.f32 %v736, %v736
    %v753 = vmul.f32 %v737, %v737
    %v754 = vmul.f32 %v738, %v738
    %v755 = vmul.f32 %v739, %v739
    %v756 = vmul.f32 %v740, %v740
    %v757 = vmul.f32 %v741, %v741
    %v758 = vmul.f32 %v742, %v742
    %v759 = vmul.f32 %v743, %v743
    %v760 = vmul.f32 %v744, %v744
    %v761 = vadd.f32 %v745, %v746
    %v762 = vadd.f32 %v761, %v747
    %v763 = vadd.f32 %v762, %v748
    %v764 = vadd.f32 %v763, %v749
    %v765 = vadd.f32 %v764, %v750
    %v766 = vadd.f32 %v765, %v751
    %v767 = vadd.f32 %v766, %v752
    %768 = vadd.xlane.f32.xlu0 %v767
    %v769 = vpop.xlane.xlu0 %768
    %v770 = vadd.f32 %v753, %v754
    %v771 = vadd.f32 %v770, %v755
    %v772 = vadd.f32 %v771, %v756
    %v773 = vadd.f32 %v772, %v757
    %v774 = vadd.f32 %v773, %v758
    %v775 = vadd.f32 %v774, %v759
    %v776 = vadd.f32 %v775, %v760
    %777 = vadd.xlane.f32.xlu0 %v776
    %v778 = vpop.xlane.xlu0 %777
    %v779 = vmul.f32 %v769, %v726
    %v780 = vmul.f32 %v778, %v726
    %v781 = vadd.f32 %v779, 1e-05
    %v782 = vadd.f32 %v780, 1e-05
    %v783 = vrsqrt.pop %v781
    %v784 = vmul.f32 %v783, %v781
    %v785 = vmul.f32 %v784, %v783
    %v786 = vmul.f32 0.5, %v785
    %v787 = vsub.f32 1.5, %v786
    %v788 = vmul.f32 %v783, %v787
    %vm789 = vweird.f32 %v781
    %vm790 = vweird.f32 %v783
    %vm791 = vmor %vm789, %vm790
    %v792 = vsel %vm791, %v783, %v788
    %v793 = vrsqrt.pop %v782
    %v794 = vmul.f32 %v793, %v782
    %v795 = vmul.f32 %v794, %v793
    %v796 = vmul.f32 0.5, %v795
    %v797 = vsub.f32 1.5, %v796
    %v798 = vmul.f32 %v793, %v797
    %vm799 = vweird.f32 %v782
    %vm800 = vweird.f32 %v793
    %vm801 = vmor %vm799, %vm800
    %v802 = vsel %vm801, %v793, %v798
    %v803 = vmul.f32 %v729, %v792
    %v804 = vmul.f32 %v730, %v792
    %v805 = vmul.f32 %v731, %v792
    %v806 = vmul.f32 %v732, %v792
    %v807 = vmul.f32 %v733, %v792
    %v808 = vmul.f32 %v734, %v792
    %v809 = vmul.f32 %v735, %v792
    %v810 = vmul.f32 %v736, %v792
    %v811 = vmul.f32 %v737, %v802
    %v812 = vmul.f32 %v738, %v802
    %v813 = vmul.f32 %v739, %v802
    %v814 = vmul.f32 %v740, %v802
    %v815 = vmul.f32 %v741, %v802
    %v816 = vmul.f32 %v742, %v802
    %v817 = vmul.f32 %v743, %v802
    %v818 = vmul.f32 %v744, %v802
    %v820 = vperm.slane %v700, 0
    %v821 = vperm.slane %v700, 1
    %v822 = vperm.slane %v700, 2
    %v823 = vperm.slane %v700, 3
    %v824 = vperm.slane %v700, 4
    %v825 = vperm.slane %v700, 5
    %v826 = vperm.slane %v700, 6
    %v827 = vperm.slane %v700, 7
    %v836 = vmul.f32 %v803, %v820
    %v837 = vmul.f32 %v804, %v821
    %v838 = vmul.f32 %v805, %v822
    %v839 = vmul.f32 %v806, %v823
    %v840 = vmul.f32 %v807, %v824
    %v841 = vmul.f32 %v808, %v825
    %v842 = vmul.f32 %v809, %v826
    %v843 = vmul.f32 %v810, %v827
    %v844 = vmul.f32 %v811, %v820
    %v845 = vmul.f32 %v812, %v821
    %v846 = vmul.f32 %v813, %v822
    %v847 = vmul.f32 %v814, %v823
    %v848 = vmul.f32 %v815, %v824
    %v849 = vmul.f32 %v816, %v825
    %v850 = vmul.f32 %v817, %v826
    %v851 = vmul.f32 %v818, %v827
    %v853 = vperm.slane %v701, 0
    %v854 = vperm.slane %v701, 1
    %v855 = vperm.slane %v701, 2
    %v856 = vperm.slane %v701, 3
    %v857 = vperm.slane %v701, 4
    %v858 = vperm.slane %v701, 5
    %v859 = vperm.slane %v701, 6
    %v860 = vperm.slane %v701, 7
    %v869 = vadd.f32 %v836, %v853
    %v870 = vadd.f32 %v837, %v854
    %v871 = vadd.f32 %v838, %v855
    %v872 = vadd.f32 %v839, %v856
    %v873 = vadd.f32 %v840, %v857
    %v874 = vadd.f32 %v841, %v858
    %v875 = vadd.f32 %v842, %v859
    %v876 = vadd.f32 %v843, %v860
    %v877 = vadd.f32 %v844, %v853
    %v878 = vadd.f32 %v845, %v854
    %v879 = vadd.f32 %v846, %v855
    %v880 = vadd.f32 %v847, %v856
    %v881 = vadd.f32 %v848, %v857
    %v882 = vadd.f32 %v849, %v858
    %v883 = vadd.f32 %v850, %v859
    %v884 = vadd.f32 %v851, %v860
    %v885 = vmul.f32 %v869, 0.2
    %v886 = vmul.f32 %v870, 0.2
    %v887 = vmul.f32 %v871, 0.2
    %v888 = vmul.f32 %v872, 0.2
    %v889 = vmul.f32 %v873, 0.2
    %v890 = vmul.f32 %v874, 0.2
    %v891 = vmul.f32 %v875, 0.2
    %v892 = vmul.f32 %v876, 0.2
    %v893 = vmul.f32 %v877, 0.2
    %v894 = vmul.f32 %v878, 0.2
    %v895 = vmul.f32 %v879, 0.2
    %v896 = vmul.f32 %v880, 0.2
    %v897 = vmul.f32 %v881, 0.2
    %v898 = vmul.f32 %v882, 0.2
    %v899 = vmul.f32 %v883, 0.2
    %v900 = vmul.f32 %v884, 0.2
    %v901 = vmax.f32 %v869, %v885
    %v902 = vmax.f32 %v870, %v886
    %v903 = vmax.f32 %v871, %v887
    %v904 = vmax.f32 %v872, %v888
    %v905 = vmax.f32 %v873, %v889
    %v906 = vmax.f32 %v874, %v890
    %v907 = vmax.f32 %v875, %v891
    %v908 = vmax.f32 %v876, %v892
    %v909 = vmax.f32 %v877, %v893
    %v910 = vmax.f32 %v878, %v894
    %v911 = vmax.f32 %v879, %v895
    %v912 = vmax.f32 %v880, %v896
    %v913 = vmax.f32 %v881, %v897
    %v914 = vmax.f32 %v882, %v898
    %v915 = vmax.f32 %v883, %v899
    %v916 = vmax.f32 %v884, %v900
    %v917 = vpack.c.bf16 %v909, %v901
    %v918 = vpack.c.bf16 %v910, %v902
    %v919 = vpack.c.bf16 %v911, %v903
    %v920 = vpack.c.bf16 %v912, %v904
    %v921 = vpack.c.bf16 %v913, %v905
    %v922 = vpack.c.bf16 %v914, %v906
    %v923 = vpack.c.bf16 %v915, %v907
    %v924 = vpack.c.bf16 %v916, %v908
    %v925 = vld [vmem:[#allocation12] sm:$0xff]
    %v926 = vld [vmem:[#allocation12 + $0x8] sm:$0xff]
    %v927 = vld [vmem:[#allocation12 + $0x10] sm:$0xff]
    %v928 = vld [vmem:[#allocation12 + $0x18] sm:$0xff]
    %v929 = vld [vmem:[#allocation12 + $0x20] sm:$0xff]
    %v930 = vld [vmem:[#allocation12 + $0x28] sm:$0xff]
    %v931 = vld [vmem:[#allocation12 + $0x30] sm:$0xff]
    %v932 = vld [vmem:[#allocation12 + $0x38] sm:$0xff]
    %v933 = vld [vmem:[#allocation12 + $0x40] sm:$0xff]
    %v934 = vld [vmem:[#allocation12 + $0x48] sm:$0xff]
    %v935 = vld [vmem:[#allocation12 + $0x50] sm:$0xff]
    %v936 = vld [vmem:[#allocation12 + $0x58] sm:$0xff]
    %v937 = vld [vmem:[#allocation12 + $0x60] sm:$0xff]
    %v938 = vld [vmem:[#allocation12 + $0x68] sm:$0xff]
    %v939 = vld [vmem:[#allocation12 + $0x70] sm:$0xff]
    %v940 = vld [vmem:[#allocation12 + $0x78] sm:$0xff]
    %v941 = vld [vmem:[#allocation12 + $0x80] sm:$0xff]
    %v942 = vld [vmem:[#allocation12 + $0x88] sm:$0xff]
    %v943 = vld [vmem:[#allocation12 + $0x90] sm:$0xff]
    %v944 = vld [vmem:[#allocation12 + $0x98] sm:$0xff]
    %v945 = vld [vmem:[#allocation12 + $0xa0] sm:$0xff]
    %v946 = vld [vmem:[#allocation12 + $0xa8] sm:$0xff]
    %v947 = vld [vmem:[#allocation12 + $0xb0] sm:$0xff]
    %v948 = vld [vmem:[#allocation12 + $0xb8] sm:$0xff]
    %v949 = vld [vmem:[#allocation12 + $0xc0] sm:$0xff]
    %v950 = vld [vmem:[#allocation12 + $0xc8] sm:$0xff]
    %v951 = vld [vmem:[#allocation12 + $0xd0] sm:$0xff]
    %v952 = vld [vmem:[#allocation12 + $0xd8] sm:$0xff]
    %v953 = vld [vmem:[#allocation12 + $0xe0] sm:$0xff]
    %v954 = vld [vmem:[#allocation12 + $0xe8] sm:$0xff]
    %v955 = vld [vmem:[#allocation12 + $0xf0] sm:$0xff]
    %v956 = vld [vmem:[#allocation12 + $0xf8] sm:$0xff]
    %v957 = vld [vmem:[#allocation12 + $0x100] sm:$0xff]
    %v958 = vld [vmem:[#allocation12 + $0x108] sm:$0xff]
    %v959 = vld [vmem:[#allocation12 + $0x110] sm:$0xff]
    %v960 = vld [vmem:[#allocation12 + $0x118] sm:$0xff]
    %v961 = vld [vmem:[#allocation12 + $0x120] sm:$0xff]
    %v962 = vld [vmem:[#allocation12 + $0x128] sm:$0xff]
    %v963 = vld [vmem:[#allocation12 + $0x130] sm:$0xff]
    %v964 = vld [vmem:[#allocation12 + $0x138] sm:$0xff]
    %v965 = vld [vmem:[#allocation12 + $0x140] sm:$0xff]
    %v966 = vld [vmem:[#allocation12 + $0x148] sm:$0xff]
    %v967 = vld [vmem:[#allocation12 + $0x150] sm:$0xff]
    %v968 = vld [vmem:[#allocation12 + $0x158] sm:$0xff]
    %v969 = vld [vmem:[#allocation12 + $0x160] sm:$0xff]
    %v970 = vld [vmem:[#allocation12 + $0x168] sm:$0xff]
    %v971 = vld [vmem:[#allocation12 + $0x170] sm:$0xff]
    %v972 = vld [vmem:[#allocation12 + $0x178] sm:$0xff]
    %v973 = vld [vmem:[#allocation12 + $0x180] sm:$0xff]
    %v974 = vld [vmem:[#allocation12 + $0x188] sm:$0xff]
    %v975 = vld [vmem:[#allocation12 + $0x190] sm:$0xff]
    %v976 = vld [vmem:[#allocation12 + $0x198] sm:$0xff]
    %v977 = vld [vmem:[#allocation12 + $0x1a0] sm:$0xff]
    %v978 = vld [vmem:[#allocation12 + $0x1a8] sm:$0xff]
    %v979 = vld [vmem:[#allocation12 + $0x1b0] sm:$0xff]
    %v980 = vld [vmem:[#allocation12 + $0x1b8] sm:$0xff]
    %v981 = vld [vmem:[#allocation12 + $0x1c0] sm:$0xff]
    %v982 = vld [vmem:[#allocation12 + $0x1c8] sm:$0xff]
    %v983 = vld [vmem:[#allocation12 + $0x1d0] sm:$0xff]
    %v984 = vld [vmem:[#allocation12 + $0x1d8] sm:$0xff]
    %v985 = vld [vmem:[#allocation12 + $0x1e0] sm:$0xff]
    %v986 = vld [vmem:[#allocation12 + $0x1e8] sm:$0xff]
    %v987 = vld [vmem:[#allocation12 + $0x1f0] sm:$0xff]
    %v988 = vld [vmem:[#allocation12 + $0x1f8] sm:$0xff]
    %v989 = vld [vmem:[#allocation12 + $0x200] sm:$0xff]
    %v990 = vld [vmem:[#allocation12 + $0x208] sm:$0xff]
    %v991 = vld [vmem:[#allocation12 + $0x210] sm:$0xff]
    %v992 = vld [vmem:[#allocation12 + $0x218] sm:$0xff]
    %v993 = vld [vmem:[#allocation12 + $0x220] sm:$0xff]
    %v994 = vld [vmem:[#allocation12 + $0x228] sm:$0xff]
    %v995 = vld [vmem:[#allocation12 + $0x230] sm:$0xff]
    %v996 = vld [vmem:[#allocation12 + $0x238] sm:$0xff]
    %v997 = vld [vmem:[#allocation12 + $0x240] sm:$0xff]
    %v998 = vld [vmem:[#allocation12 + $0x248] sm:$0xff]
    %v999 = vld [vmem:[#allocation12 + $0x250] sm:$0xff]
    %v1000 = vld [vmem:[#allocation12 + $0x258] sm:$0xff]
    %v1001 = vld [vmem:[#allocation12 + $0x260] sm:$0xff]
    %v1002 = vld [vmem:[#allocation12 + $0x268] sm:$0xff]
    %v1003 = vld [vmem:[#allocation12 + $0x270] sm:$0xff]
    %v1004 = vld [vmem:[#allocation12 + $0x278] sm:$0xff]
    %v1005 = vld [vmem:[#allocation12 + $0x280] sm:$0xff]
    %v1006 = vld [vmem:[#allocation12 + $0x288] sm:$0xff]
    %v1007 = vld [vmem:[#allocation12 + $0x290] sm:$0xff]
    %v1008 = vld [vmem:[#allocation12 + $0x298] sm:$0xff]
    %v1009 = vld [vmem:[#allocation12 + $0x2a0] sm:$0xff]
    %v1010 = vld [vmem:[#allocation12 + $0x2a8] sm:$0xff]
    %v1011 = vld [vmem:[#allocation12 + $0x2b0] sm:$0xff]
    %v1012 = vld [vmem:[#allocation12 + $0x2b8] sm:$0xff]
    %v1013 = vld [vmem:[#allocation12 + $0x2c0] sm:$0xff]
    %v1014 = vld [vmem:[#allocation12 + $0x2c8] sm:$0xff]
    %v1015 = vld [vmem:[#allocation12 + $0x2d0] sm:$0xff]
    %v1016 = vld [vmem:[#allocation12 + $0x2d8] sm:$0xff]
    %v1017 = vld [vmem:[#allocation12 + $0x2e0] sm:$0xff]
    %v1018 = vld [vmem:[#allocation12 + $0x2e8] sm:$0xff]
    %v1019 = vld [vmem:[#allocation12 + $0x2f0] sm:$0xff]
    %v1020 = vld [vmem:[#allocation12 + $0x2f8] sm:$0xff]
    %v1021 = vld [vmem:[#allocation12 + $0x300] sm:$0xff]
    %v1022 = vld [vmem:[#allocation12 + $0x308] sm:$0xff]
    %v1023 = vld [vmem:[#allocation12 + $0x310] sm:$0xff]
    %v1024 = vld [vmem:[#allocation12 + $0x318] sm:$0xff]
    %v1025 = vld [vmem:[#allocation12 + $0x320] sm:$0xff]
    %v1026 = vld [vmem:[#allocation12 + $0x328] sm:$0xff]
    %v1027 = vld [vmem:[#allocation12 + $0x330] sm:$0xff]
    %v1028 = vld [vmem:[#allocation12 + $0x338] sm:$0xff]
    %v1029 = vld [vmem:[#allocation12 + $0x340] sm:$0xff]
    %v1030 = vld [vmem:[#allocation12 + $0x348] sm:$0xff]
    %v1031 = vld [vmem:[#allocation12 + $0x350] sm:$0xff]
    %v1032 = vld [vmem:[#allocation12 + $0x358] sm:$0xff]
    %v1033 = vld [vmem:[#allocation12 + $0x360] sm:$0xff]
    %v1034 = vld [vmem:[#allocation12 + $0x368] sm:$0xff]
    %v1035 = vld [vmem:[#allocation12 + $0x370] sm:$0xff]
    %v1036 = vld [vmem:[#allocation12 + $0x378] sm:$0xff]
    %v1037 = vld [vmem:[#allocation12 + $0x380] sm:$0xff]
    %v1038 = vld [vmem:[#allocation12 + $0x388] sm:$0xff]
    %v1039 = vld [vmem:[#allocation12 + $0x390] sm:$0xff]
    %v1040 = vld [vmem:[#allocation12 + $0x398] sm:$0xff]
    %v1041 = vld [vmem:[#allocation12 + $0x3a0] sm:$0xff]
    %v1042 = vld [vmem:[#allocation12 + $0x3a8] sm:$0xff]
    %v1043 = vld [vmem:[#allocation12 + $0x3b0] sm:$0xff]
    %v1044 = vld [vmem:[#allocation12 + $0x3b8] sm:$0xff]
    %v1045 = vld [vmem:[#allocation12 + $0x3c0] sm:$0xff]
    %v1046 = vld [vmem:[#allocation12 + $0x3c8] sm:$0xff]
    %v1047 = vld [vmem:[#allocation12 + $0x3d0] sm:$0xff]
    %v1048 = vld [vmem:[#allocation12 + $0x3d8] sm:$0xff]
    %v1049 = vld [vmem:[#allocation12 + $0x3e0] sm:$0xff]
    %v1050 = vld [vmem:[#allocation12 + $0x3e8] sm:$0xff]
    %v1051 = vld [vmem:[#allocation12 + $0x3f0] sm:$0xff]
    %v1052 = vld [vmem:[#allocation12 + $0x3f8] sm:$0xff]
    %v1053 = vld [vmem:[#allocation12 + $0x400] sm:$0xff]
    %v1054 = vld [vmem:[#allocation12 + $0x408] sm:$0xff]
    %v1055 = vld [vmem:[#allocation12 + $0x410] sm:$0xff]
    %v1056 = vld [vmem:[#allocation12 + $0x418] sm:$0xff]
    %v1057 = vld [vmem:[#allocation12 + $0x420] sm:$0xff]
    %v1058 = vld [vmem:[#allocation12 + $0x428] sm:$0xff]
    %v1059 = vld [vmem:[#allocation12 + $0x430] sm:$0xff]
    %v1060 = vld [vmem:[#allocation12 + $0x438] sm:$0xff]
    %v1061 = vld [vmem:[#allocation12 + $0x440] sm:$0xff]
    %v1062 = vld [vmem:[#allocation12 + $0x448] sm:$0xff]
    %v1063 = vld [vmem:[#allocation12 + $0x450] sm:$0xff]
    %v1064 = vld [vmem:[#allocation12 + $0x458] sm:$0xff]
    %v1065 = vld [vmem:[#allocation12 + $0x460] sm:$0xff]
    %v1066 = vld [vmem:[#allocation12 + $0x468] sm:$0xff]
    %v1067 = vld [vmem:[#allocation12 + $0x470] sm:$0xff]
    %v1068 = vld [vmem:[#allocation12 + $0x478] sm:$0xff]
    %v1069 = vld [vmem:[#allocation12 + $0x480] sm:$0xff]
    %v1070 = vld [vmem:[#allocation12 + $0x488] sm:$0xff]
    %v1071 = vld [vmem:[#allocation12 + $0x490] sm:$0xff]
    %v1072 = vld [vmem:[#allocation12 + $0x498] sm:$0xff]
    %v1073 = vld [vmem:[#allocation12 + $0x4a0] sm:$0xff]
    %v1074 = vld [vmem:[#allocation12 + $0x4a8] sm:$0xff]
    %v1075 = vld [vmem:[#allocation12 + $0x4b0] sm:$0xff]
    %v1076 = vld [vmem:[#allocation12 + $0x4b8] sm:$0xff]
    %v1077 = vld [vmem:[#allocation12 + $0x4c0] sm:$0xff]
    %v1078 = vld [vmem:[#allocation12 + $0x4c8] sm:$0xff]
    %v1079 = vld [vmem:[#allocation12 + $0x4d0] sm:$0xff]
    %v1080 = vld [vmem:[#allocation12 + $0x4d8] sm:$0xff]
    %v1081 = vld [vmem:[#allocation12 + $0x4e0] sm:$0xff]
    %v1082 = vld [vmem:[#allocation12 + $0x4e8] sm:$0xff]
    %v1083 = vld [vmem:[#allocation12 + $0x4f0] sm:$0xff]
    %v1084 = vld [vmem:[#allocation12 + $0x4f8] sm:$0xff]
    %v1085 = vld [vmem:[#allocation12 + $0x500] sm:$0xff]
    %v1086 = vld [vmem:[#allocation12 + $0x508] sm:$0xff]
    %v1087 = vld [vmem:[#allocation12 + $0x510] sm:$0xff]
    %v1088 = vld [vmem:[#allocation12 + $0x518] sm:$0xff]
    %v1089 = vld [vmem:[#allocation12 + $0x520] sm:$0xff]
    %v1090 = vld [vmem:[#allocation12 + $0x528] sm:$0xff]
    %v1091 = vld [vmem:[#allocation12 + $0x530] sm:$0xff]
    %v1092 = vld [vmem:[#allocation12 + $0x538] sm:$0xff]
    %v1093 = vld [vmem:[#allocation12 + $0x540] sm:$0xff]
    %v1094 = vld [vmem:[#allocation12 + $0x548] sm:$0xff]
    %v1095 = vld [vmem:[#allocation12 + $0x550] sm:$0xff]
    %v1096 = vld [vmem:[#allocation12 + $0x558] sm:$0xff]
    %v1097 = vld [vmem:[#allocation12 + $0x560] sm:$0xff]
    %v1098 = vld [vmem:[#allocation12 + $0x568] sm:$0xff]
    %v1099 = vld [vmem:[#allocation12 + $0x570] sm:$0xff]
    %v1100 = vld [vmem:[#allocation12 + $0x578] sm:$0xff]
    %v1101 = vld [vmem:[#allocation12 + $0x580] sm:$0xff]
    %v1102 = vld [vmem:[#allocation12 + $0x588] sm:$0xff]
    %v1103 = vld [vmem:[#allocation12 + $0x590] sm:$0xff]
    %v1104 = vld [vmem:[#allocation12 + $0x598] sm:$0xff]
    %v1105 = vld [vmem:[#allocation12 + $0x5a0] sm:$0xff]
    %v1106 = vld [vmem:[#allocation12 + $0x5a8] sm:$0xff]
    %v1107 = vld [vmem:[#allocation12 + $0x5b0] sm:$0xff]
    %v1108 = vld [vmem:[#allocation12 + $0x5b8] sm:$0xff]
    %v1109 = vld [vmem:[#allocation12 + $0x5c0] sm:$0xff]
    %v1110 = vld [vmem:[#allocation12 + $0x5c8] sm:$0xff]
    %v1111 = vld [vmem:[#allocation12 + $0x5d0] sm:$0xff]
    %v1112 = vld [vmem:[#allocation12 + $0x5d8] sm:$0xff]
    %v1113 = vld [vmem:[#allocation12 + $0x5e0] sm:$0xff]
    %v1114 = vld [vmem:[#allocation12 + $0x5e8] sm:$0xff]
    %v1115 = vld [vmem:[#allocation12 + $0x5f0] sm:$0xff]
    %v1116 = vld [vmem:[#allocation12 + $0x5f8] sm:$0xff]
    %v1117 = vld [vmem:[#allocation12 + $0x600] sm:$0xff]
    %v1118 = vld [vmem:[#allocation12 + $0x608] sm:$0xff]
    %v1119 = vld [vmem:[#allocation12 + $0x610] sm:$0xff]
    %v1120 = vld [vmem:[#allocation12 + $0x618] sm:$0xff]
    %v1121 = vld [vmem:[#allocation12 + $0x620] sm:$0xff]
    %v1122 = vld [vmem:[#allocation12 + $0x628] sm:$0xff]
    %v1123 = vld [vmem:[#allocation12 + $0x630] sm:$0xff]
    %v1124 = vld [vmem:[#allocation12 + $0x638] sm:$0xff]
    %v1125 = vld [vmem:[#allocation12 + $0x640] sm:$0xff]
    %v1126 = vld [vmem:[#allocation12 + $0x648] sm:$0xff]
    %v1127 = vld [vmem:[#allocation12 + $0x650] sm:$0xff]
    %v1128 = vld [vmem:[#allocation12 + $0x658] sm:$0xff]
    %v1129 = vld [vmem:[#allocation12 + $0x660] sm:$0xff]
    %v1130 = vld [vmem:[#allocation12 + $0x668] sm:$0xff]
    %v1131 = vld [vmem:[#allocation12 + $0x670] sm:$0xff]
    %v1132 = vld [vmem:[#allocation12 + $0x678] sm:$0xff]
    %v1133 = vld [vmem:[#allocation12 + $0x680] sm:$0xff]
    %v1134 = vld [vmem:[#allocation12 + $0x688] sm:$0xff]
    %v1135 = vld [vmem:[#allocation12 + $0x690] sm:$0xff]
    %v1136 = vld [vmem:[#allocation12 + $0x698] sm:$0xff]
    %v1137 = vld [vmem:[#allocation12 + $0x6a0] sm:$0xff]
    %v1138 = vld [vmem:[#allocation12 + $0x6a8] sm:$0xff]
    %v1139 = vld [vmem:[#allocation12 + $0x6b0] sm:$0xff]
    %v1140 = vld [vmem:[#allocation12 + $0x6b8] sm:$0xff]
    %v1141 = vld [vmem:[#allocation12 + $0x6c0] sm:$0xff]
    %v1142 = vld [vmem:[#allocation12 + $0x6c8] sm:$0xff]
    %v1143 = vld [vmem:[#allocation12 + $0x6d0] sm:$0xff]
    %v1144 = vld [vmem:[#allocation12 + $0x6d8] sm:$0xff]
    %v1145 = vld [vmem:[#allocation12 + $0x6e0] sm:$0xff]
    %v1146 = vld [vmem:[#allocation12 + $0x6e8] sm:$0xff]
    %v1147 = vld [vmem:[#allocation12 + $0x6f0] sm:$0xff]
    %v1148 = vld [vmem:[#allocation12 + $0x6f8] sm:$0xff]
    %v1149 = vld [vmem:[#allocation12 + $0x700] sm:$0xff]
    %v1150 = vld [vmem:[#allocation12 + $0x708] sm:$0xff]
    %v1151 = vld [vmem:[#allocation12 + $0x710] sm:$0xff]
    %v1152 = vld [vmem:[#allocation12 + $0x718] sm:$0xff]
    %v1153 = vld [vmem:[#allocation12 + $0x720] sm:$0xff]
    %v1154 = vld [vmem:[#allocation12 + $0x728] sm:$0xff]
    %v1155 = vld [vmem:[#allocation12 + $0x730] sm:$0xff]
    %v1156 = vld [vmem:[#allocation12 + $0x738] sm:$0xff]
    %v1157 = vld [vmem:[#allocation12 + $0x740] sm:$0xff]
    %v1158 = vld [vmem:[#allocation12 + $0x748] sm:$0xff]
    %v1159 = vld [vmem:[#allocation12 + $0x750] sm:$0xff]
    %v1160 = vld [vmem:[#allocation12 + $0x758] sm:$0xff]
    %v1161 = vld [vmem:[#allocation12 + $0x760] sm:$0xff]
    %v1162 = vld [vmem:[#allocation12 + $0x768] sm:$0xff]
    %v1163 = vld [vmem:[#allocation12 + $0x770] sm:$0xff]
    %v1164 = vld [vmem:[#allocation12 + $0x778] sm:$0xff]
    %v1165 = vld [vmem:[#allocation12 + $0x780] sm:$0xff]
    %v1166 = vld [vmem:[#allocation12 + $0x788] sm:$0xff]
    %v1167 = vld [vmem:[#allocation12 + $0x790] sm:$0xff]
    %v1168 = vld [vmem:[#allocation12 + $0x798] sm:$0xff]
    %v1169 = vld [vmem:[#allocation12 + $0x7a0] sm:$0xff]
    %v1170 = vld [vmem:[#allocation12 + $0x7a8] sm:$0xff]
    %v1171 = vld [vmem:[#allocation12 + $0x7b0] sm:$0xff]
    %v1172 = vld [vmem:[#allocation12 + $0x7b8] sm:$0xff]
    %v1173 = vld [vmem:[#allocation12 + $0x7c0] sm:$0xff]
    %v1174 = vld [vmem:[#allocation12 + $0x7c8] sm:$0xff]
    %v1175 = vld [vmem:[#allocation12 + $0x7d0] sm:$0xff]
    %v1176 = vld [vmem:[#allocation12 + $0x7d8] sm:$0xff]
    %v1177 = vld [vmem:[#allocation12 + $0x7e0] sm:$0xff]
    %v1178 = vld [vmem:[#allocation12 + $0x7e8] sm:$0xff]
    %v1179 = vld [vmem:[#allocation12 + $0x7f0] sm:$0xff]
    %v1180 = vld [vmem:[#allocation12 + $0x7f8] sm:$0xff]
    %v1181 = vld [vmem:[%s6] sm:$0xf]
    %v1183 = vperm.slane %v1181, 0
    %v1184 = vperm.slane %v1181, 1
    %v1185 = vperm.slane %v1181, 2
    %v1186 = vperm.slane %v1181, 3
    %v1447 = vunpack.c.l.b16 %v925
    %v1448 = vunpack.c.h.b16 %v925
    %v1449 = vunpack.c.l.b16 %v926
    %v1450 = vunpack.c.h.b16 %v926
    %v1451 = vunpack.c.l.b16 %v927
    %v1452 = vunpack.c.h.b16 %v927
    %v1453 = vunpack.c.l.b16 %v928
    %v1454 = vunpack.c.h.b16 %v928
    %v1455 = vunpack.c.l.b16 %v929
    %v1456 = vunpack.c.h.b16 %v929
    %v1457 = vunpack.c.l.b16 %v930
    %v1458 = vunpack.c.h.b16 %v930
    %v1459 = vunpack.c.l.b16 %v931
    %v1460 = vunpack.c.h.b16 %v931
    %v1461 = vunpack.c.l.b16 %v932
    %v1462 = vunpack.c.h.b16 %v932
    %v1463 = vunpack.c.l.b16 %v933
    %v1464 = vunpack.c.h.b16 %v933
    %v1465 = vunpack.c.l.b16 %v934
    %v1466 = vunpack.c.h.b16 %v934
    %v1467 = vunpack.c.l.b16 %v935
    %v1468 = vunpack.c.h.b16 %v935
    %v1469 = vunpack.c.l.b16 %v936
    %v1470 = vunpack.c.h.b16 %v936
    %v1471 = vunpack.c.l.b16 %v937
    %v1472 = vunpack.c.h.b16 %v937
    %v1473 = vunpack.c.l.b16 %v938
    %v1474 = vunpack.c.h.b16 %v938
    %v1475 = vunpack.c.l.b16 %v939
    %v1476 = vunpack.c.h.b16 %v939
    %v1477 = vunpack.c.l.b16 %v940
    %v1478 = vunpack.c.h.b16 %v940
    %v1479 = vunpack.c.l.b16 %v941
    %v1480 = vunpack.c.h.b16 %v941
    %v1481 = vunpack.c.l.b16 %v942
    %v1482 = vunpack.c.h.b16 %v942
    %v1483 = vunpack.c.l.b16 %v943
    %v1484 = vunpack.c.h.b16 %v943
    %v1485 = vunpack.c.l.b16 %v944
    %v1486 = vunpack.c.h.b16 %v944
    %v1487 = vunpack.c.l.b16 %v945
    %v1488 = vunpack.c.h.b16 %v945
    %v1489 = vunpack.c.l.b16 %v946
    %v1490 = vunpack.c.h.b16 %v946
    %v1491 = vunpack.c.l.b16 %v947
    %v1492 = vunpack.c.h.b16 %v947
    %v1493 = vunpack.c.l.b16 %v948
    %v1494 = vunpack.c.h.b16 %v948
    %v1495 = vunpack.c.l.b16 %v949
    %v1496 = vunpack.c.h.b16 %v949
    %v1497 = vunpack.c.l.b16 %v950
    %v1498 = vunpack.c.h.b16 %v950
    %v1499 = vunpack.c.l.b16 %v951
    %v1500 = vunpack.c.h.b16 %v951
    %v1501 = vunpack.c.l.b16 %v952
    %v1502 = vunpack.c.h.b16 %v952
    %v1503 = vunpack.c.l.b16 %v953
    %v1504 = vunpack.c.h.b16 %v953
    %v1505 = vunpack.c.l.b16 %v954
    %v1506 = vunpack.c.h.b16 %v954
    %v1507 = vunpack.c.l.b16 %v955
    %v1508 = vunpack.c.h.b16 %v955
    %v1509 = vunpack.c.l.b16 %v956
    %v1510 = vunpack.c.h.b16 %v956
    %v1511 = vunpack.c.l.b16 %v957
    %v1512 = vunpack.c.h.b16 %v957
    %v1513 = vunpack.c.l.b16 %v958
    %v1514 = vunpack.c.h.b16 %v958
    %v1515 = vunpack.c.l.b16 %v959
    %v1516 = vunpack.c.h.b16 %v959
    %v1517 = vunpack.c.l.b16 %v960
    %v1518 = vunpack.c.h.b16 %v960
    %v1519 = vunpack.c.l.b16 %v961
    %v1520 = vunpack.c.h.b16 %v961
    %v1521 = vunpack.c.l.b16 %v962
    %v1522 = vunpack.c.h.b16 %v962
    %v1523 = vunpack.c.l.b16 %v963
    %v1524 = vunpack.c.h.b16 %v963
    %v1525 = vunpack.c.l.b16 %v964
    %v1526 = vunpack.c.h.b16 %v964
    %v1527 = vunpack.c.l.b16 %v965
    %v1528 = vunpack.c.h.b16 %v965
    %v1529 = vunpack.c.l.b16 %v966
    %v1530 = vunpack.c.h.b16 %v966
    %v1531 = vunpack.c.l.b16 %v967
    %v1532 = vunpack.c.h.b16 %v967
    %v1533 = vunpack.c.l.b16 %v968
    %v1534 = vunpack.c.h.b16 %v968
    %v1535 = vunpack.c.l.b16 %v969
    %v1536 = vunpack.c.h.b16 %v969
    %v1537 = vunpack.c.l.b16 %v970
    %v1538 = vunpack.c.h.b16 %v970
    %v1539 = vunpack.c.l.b16 %v971
    %v1540 = vunpack.c.h.b16 %v971
    %v1541 = vunpack.c.l.b16 %v972
    %v1542 = vunpack.c.h.b16 %v972
    %v1543 = vunpack.c.l.b16 %v973
    %v1544 = vunpack.c.h.b16 %v973
    %v1545 = vunpack.c.l.b16 %v974
    %v1546 = vunpack.c.h.b16 %v974
    %v1547 = vunpack.c.l.b16 %v975
    %v1548 = vunpack.c.h.b16 %v975
    %v1549 = vunpack.c.l.b16 %v976
    %v1550 = vunpack.c.h.b16 %v976
    %v1551 = vunpack.c.l.b16 %v977
    %v1552 = vunpack.c.h.b16 %v977
    %v1553 = vunpack.c.l.b16 %v978
    %v1554 = vunpack.c.h.b16 %v978
    %v1555 = vunpack.c.l.b16 %v979
    %v1556 = vunpack.c.h.b16 %v979
    %v1557 = vunpack.c.l.b16 %v980
    %v1558 = vunpack.c.h.b16 %v980
    %v1559 = vunpack.c.l.b16 %v981
    %v1560 = vunpack.c.h.b16 %v981
    %v1561 = vunpack.c.l.b16 %v982
    %v1562 = vunpack.c.h.b16 %v982
    %v1563 = vunpack.c.l.b16 %v983
    %v1564 = vunpack.c.h.b16 %v983
    %v1565 = vunpack.c.l.b16 %v984
    %v1566 = vunpack.c.h.b16 %v984
    %v1567 = vunpack.c.l.b16 %v985
    %v1568 = vunpack.c.h.b16 %v985
    %v1569 = vunpack.c.l.b16 %v986
    %v1570 = vunpack.c.h.b16 %v986
    %v1571 = vunpack.c.l.b16 %v987
    %v1572 = vunpack.c.h.b16 %v987
    %v1573 = vunpack.c.l.b16 %v988
    %v1574 = vunpack.c.h.b16 %v988
    %v1575 = vunpack.c.l.b16 %v989
    %v1576 = vunpack.c.h.b16 %v989
    %v1577 = vunpack.c.l.b16 %v990
    %v1578 = vunpack.c.h.b16 %v990
    %v1579 = vunpack.c.l.b16 %v991
    %v1580 = vunpack.c.h.b16 %v991
    %v1581 = vunpack.c.l.b16 %v992
    %v1582 = vunpack.c.h.b16 %v992
    %v1583 = vunpack.c.l.b16 %v993
    %v1584 = vunpack.c.h.b16 %v993
    %v1585 = vunpack.c.l.b16 %v994
    %v1586 = vunpack.c.h.b16 %v994
    %v1587 = vunpack.c.l.b16 %v995
    %v1588 = vunpack.c.h.b16 %v995
    %v1589 = vunpack.c.l.b16 %v996
    %v1590 = vunpack.c.h.b16 %v996
    %v1591 = vunpack.c.l.b16 %v997
    %v1592 = vunpack.c.h.b16 %v997
    %v1593 = vunpack.c.l.b16 %v998
    %v1594 = vunpack.c.h.b16 %v998
    %v1595 = vunpack.c.l.b16 %v999
    %v1596 = vunpack.c.h.b16 %v999
    %v1597 = vunpack.c.l.b16 %v1000
    %v1598 = vunpack.c.h.b16 %v1000
    %v1599 = vunpack.c.l.b16 %v1001
    %v1600 = vunpack.c.h.b16 %v1001
    %v1601 = vunpack.c.l.b16 %v1002
    %v1602 = vunpack.c.h.b16 %v1002
    %v1603 = vunpack.c.l.b16 %v1003
    %v1604 = vunpack.c.h.b16 %v1003
    %v1605 = vunpack.c.l.b16 %v1004
    %v1606 = vunpack.c.h.b16 %v1004
    %v1607 = vunpack.c.l.b16 %v1005
    %v1608 = vunpack.c.h.b16 %v1005
    %v1609 = vunpack.c.l.b16 %v1006
    %v1610 = vunpack.c.h.b16 %v1006
    %v1611 = vunpack.c.l.b16 %v1007
    %v1612 = vunpack.c.h.b16 %v1007
    %v1613 = vunpack.c.l.b16 %v1008
    %v1614 = vunpack.c.h.b16 %v1008
    %v1615 = vunpack.c.l.b16 %v1009
    %v1616 = vunpack.c.h.b16 %v1009
    %v1617 = vunpack.c.l.b16 %v1010
    %v1618 = vunpack.c.h.b16 %v1010
    %v1619 = vunpack.c.l.b16 %v1011
    %v1620 = vunpack.c.h.b16 %v1011
    %v1621 = vunpack.c.l.b16 %v1012
    %v1622 = vunpack.c.h.b16 %v1012
    %v1623 = vunpack.c.l.b16 %v1013
    %v1624 = vunpack.c.h.b16 %v1013
    %v1625 = vunpack.c.l.b16 %v1014
    %v1626 = vunpack.c.h.b16 %v1014
    %v1627 = vunpack.c.l.b16 %v1015
    %v1628 = vunpack.c.h.b16 %v1015
    %v1629 = vunpack.c.l.b16 %v1016
    %v1630 = vunpack.c.h.b16 %v1016
    %v1631 = vunpack.c.l.b16 %v1017
    %v1632 = vunpack.c.h.b16 %v1017
    %v1633 = vunpack.c.l.b16 %v1018
    %v1634 = vunpack.c.h.b16 %v1018
    %v1635 = vunpack.c.l.b16 %v1019
    %v1636 = vunpack.c.h.b16 %v1019
    %v1637 = vunpack.c.l.b16 %v1020
    %v1638 = vunpack.c.h.b16 %v1020
    %v1639 = vunpack.c.l.b16 %v1021
    %v1640 = vunpack.c.h.b16 %v1021
    %v1641 = vunpack.c.l.b16 %v1022
    %v1642 = vunpack.c.h.b16 %v1022
    %v1643 = vunpack.c.l.b16 %v1023
    %v1644 = vunpack.c.h.b16 %v1023
    %v1645 = vunpack.c.l.b16 %v1024
    %v1646 = vunpack.c.h.b16 %v1024
    %v1647 = vunpack.c.l.b16 %v1025
    %v1648 = vunpack.c.h.b16 %v1025
    %v1649 = vunpack.c.l.b16 %v1026
    %v1650 = vunpack.c.h.b16 %v1026
    %v1651 = vunpack.c.l.b16 %v1027
    %v1652 = vunpack.c.h.b16 %v1027
    %v1653 = vunpack.c.l.b16 %v1028
    %v1654 = vunpack.c.h.b16 %v1028
    %v1655 = vunpack.c.l.b16 %v1029
    %v1656 = vunpack.c.h.b16 %v1029
    %v1657 = vunpack.c.l.b16 %v1030
    %v1658 = vunpack.c.h.b16 %v1030
    %v1659 = vunpack.c.l.b16 %v1031
    %v1660 = vunpack.c.h.b16 %v1031
    %v1661 = vunpack.c.l.b16 %v1032
    %v1662 = vunpack.c.h.b16 %v1032
    %v1663 = vunpack.c.l.b16 %v1033
    %v1664 = vunpack.c.h.b16 %v1033
    %v1665 = vunpack.c.l.b16 %v1034
    %v1666 = vunpack.c.h.b16 %v1034
    %v1667 = vunpack.c.l.b16 %v1035
    %v1668 = vunpack.c.h.b16 %v1035
    %v1669 = vunpack.c.l.b16 %v1036
    %v1670 = vunpack.c.h.b16 %v1036
    %v1671 = vunpack.c.l.b16 %v1037
    %v1672 = vunpack.c.h.b16 %v1037
    %v1673 = vunpack.c.l.b16 %v1038
    %v1674 = vunpack.c.h.b16 %v1038
    %v1675 = vunpack.c.l.b16 %v1039
    %v1676 = vunpack.c.h.b16 %v1039
    %v1677 = vunpack.c.l.b16 %v1040
    %v1678 = vunpack.c.h.b16 %v1040
    %v1679 = vunpack.c.l.b16 %v1041
    %v1680 = vunpack.c.h.b16 %v1041
    %v1681 = vunpack.c.l.b16 %v1042
    %v1682 = vunpack.c.h.b16 %v1042
    %v1683 = vunpack.c.l.b16 %v1043
    %v1684 = vunpack.c.h.b16 %v1043
    %v1685 = vunpack.c.l.b16 %v1044
    %v1686 = vunpack.c.h.b16 %v1044
    %v1687 = vunpack.c.l.b16 %v1045
    %v1688 = vunpack.c.h.b16 %v1045
    %v1689 = vunpack.c.l.b16 %v1046
    %v1690 = vunpack.c.h.b16 %v1046
    %v1691 = vunpack.c.l.b16 %v1047
    %v1692 = vunpack.c.h.b16 %v1047
    %v1693 = vunpack.c.l.b16 %v1048
    %v1694 = vunpack.c.h.b16 %v1048
    %v1695 = vunpack.c.l.b16 %v1049
    %v1696 = vunpack.c.h.b16 %v1049
    %v1697 = vunpack.c.l.b16 %v1050
    %v1698 = vunpack.c.h.b16 %v1050
    %v1699 = vunpack.c.l.b16 %v1051
    %v1700 = vunpack.c.h.b16 %v1051
    %v1701 = vunpack.c.l.b16 %v1052
    %v1702 = vunpack.c.h.b16 %v1052
    %v1703 = vunpack.c.l.b16 %v1053
    %v1704 = vunpack.c.h.b16 %v1053
    %v1705 = vunpack.c.l.b16 %v1054
    %v1706 = vunpack.c.h.b16 %v1054
    %v1707 = vunpack.c.l.b16 %v1055
    %v1708 = vunpack.c.h.b16 %v1055
    %v1709 = vunpack.c.l.b16 %v1056
    %v1710 = vunpack.c.h.b16 %v1056
    %v1711 = vunpack.c.l.b16 %v1057
    %v1712 = vunpack.c.h.b16 %v1057
    %v1713 = vunpack.c.l.b16 %v1058
    %v1714 = vunpack.c.h.b16 %v1058
    %v1715 = vunpack.c.l.b16 %v1059
    %v1716 = vunpack.c.h.b16 %v1059
    %v1717 = vunpack.c.l.b16 %v1060
    %v1718 = vunpack.c.h.b16 %v1060
    %v1719 = vunpack.c.l.b16 %v1061
    %v1720 = vunpack.c.h.b16 %v1061
    %v1721 = vunpack.c.l.b16 %v1062
    %v1722 = vunpack.c.h.b16 %v1062
    %v1723 = vunpack.c.l.b16 %v1063
    %v1724 = vunpack.c.h.b16 %v1063
    %v1725 = vunpack.c.l.b16 %v1064
    %v1726 = vunpack.c.h.b16 %v1064
    %v1727 = vunpack.c.l.b16 %v1065
    %v1728 = vunpack.c.h.b16 %v1065
    %v1729 = vunpack.c.l.b16 %v1066
    %v1730 = vunpack.c.h.b16 %v1066
    %v1731 = vunpack.c.l.b16 %v1067
    %v1732 = vunpack.c.h.b16 %v1067
    %v1733 = vunpack.c.l.b16 %v1068
    %v1734 = vunpack.c.h.b16 %v1068
    %v1735 = vunpack.c.l.b16 %v1069
    %v1736 = vunpack.c.h.b16 %v1069
    %v1737 = vunpack.c.l.b16 %v1070
    %v1738 = vunpack.c.h.b16 %v1070
    %v1739 = vunpack.c.l.b16 %v1071
    %v1740 = vunpack.c.h.b16 %v1071
    %v1741 = vunpack.c.l.b16 %v1072
    %v1742 = vunpack.c.h.b16 %v1072
    %v1743 = vunpack.c.l.b16 %v1073
    %v1744 = vunpack.c.h.b16 %v1073
    %v1745 = vunpack.c.l.b16 %v1074
    %v1746 = vunpack.c.h.b16 %v1074
    %v1747 = vunpack.c.l.b16 %v1075
    %v1748 = vunpack.c.h.b16 %v1075
    %v1749 = vunpack.c.l.b16 %v1076
    %v1750 = vunpack.c.h.b16 %v1076
    %v1751 = vunpack.c.l.b16 %v1077
    %v1752 = vunpack.c.h.b16 %v1077
    %v1753 = vunpack.c.l.b16 %v1078
    %v1754 = vunpack.c.h.b16 %v1078
    %v1755 = vunpack.c.l.b16 %v1079
    %v1756 = vunpack.c.h.b16 %v1079
    %v1757 = vunpack.c.l.b16 %v1080
    %v1758 = vunpack.c.h.b16 %v1080
    %v1759 = vunpack.c.l.b16 %v1081
    %v1760 = vunpack.c.h.b16 %v1081
    %v1761 = vunpack.c.l.b16 %v1082
    %v1762 = vunpack.c.h.b16 %v1082
    %v1763 = vunpack.c.l.b16 %v1083
    %v1764 = vunpack.c.h.b16 %v1083
    %v1765 = vunpack.c.l.b16 %v1084
    %v1766 = vunpack.c.h.b16 %v1084
    %v1767 = vunpack.c.l.b16 %v1085
    %v1768 = vunpack.c.h.b16 %v1085
    %v1769 = vunpack.c.l.b16 %v1086
    %v1770 = vunpack.c.h.b16 %v1086
    %v1771 = vunpack.c.l.b16 %v1087
    %v1772 = vunpack.c.h.b16 %v1087
    %v1773 = vunpack.c.l.b16 %v1088
    %v1774 = vunpack.c.h.b16 %v1088
    %v1775 = vunpack.c.l.b16 %v1089
    %v1776 = vunpack.c.h.b16 %v1089
    %v1777 = vunpack.c.l.b16 %v1090
    %v1778 = vunpack.c.h.b16 %v1090
    %v1779 = vunpack.c.l.b16 %v1091
    %v1780 = vunpack.c.h.b16 %v1091
    %v1781 = vunpack.c.l.b16 %v1092
    %v1782 = vunpack.c.h.b16 %v1092
    %v1783 = vunpack.c.l.b16 %v1093
    %v1784 = vunpack.c.h.b16 %v1093
    %v1785 = vunpack.c.l.b16 %v1094
    %v1786 = vunpack.c.h.b16 %v1094
    %v1787 = vunpack.c.l.b16 %v1095
    %v1788 = vunpack.c.h.b16 %v1095
    %v1789 = vunpack.c.l.b16 %v1096
    %v1790 = vunpack.c.h.b16 %v1096
    %v1791 = vunpack.c.l.b16 %v1097
    %v1792 = vunpack.c.h.b16 %v1097
    %v1793 = vunpack.c.l.b16 %v1098
    %v1794 = vunpack.c.h.b16 %v1098
    %v1795 = vunpack.c.l.b16 %v1099
    %v1796 = vunpack.c.h.b16 %v1099
    %v1797 = vunpack.c.l.b16 %v1100
    %v1798 = vunpack.c.h.b16 %v1100
    %v1799 = vunpack.c.l.b16 %v1101
    %v1800 = vunpack.c.h.b16 %v1101
    %v1801 = vunpack.c.l.b16 %v1102
    %v1802 = vunpack.c.h.b16 %v1102
    %v1803 = vunpack.c.l.b16 %v1103
    %v1804 = vunpack.c.h.b16 %v1103
    %v1805 = vunpack.c.l.b16 %v1104
    %v1806 = vunpack.c.h.b16 %v1104
    %v1807 = vunpack.c.l.b16 %v1105
    %v1808 = vunpack.c.h.b16 %v1105
    %v1809 = vunpack.c.l.b16 %v1106
    %v1810 = vunpack.c.h.b16 %v1106
    %v1811 = vunpack.c.l.b16 %v1107
    %v1812 = vunpack.c.h.b16 %v1107
    %v1813 = vunpack.c.l.b16 %v1108
    %v1814 = vunpack.c.h.b16 %v1108
    %v1815 = vunpack.c.l.b16 %v1109
    %v1816 = vunpack.c.h.b16 %v1109
    %v1817 = vunpack.c.l.b16 %v1110
    %v1818 = vunpack.c.h.b16 %v1110
    %v1819 = vunpack.c.l.b16 %v1111
    %v1820 = vunpack.c.h.b16 %v1111
    %v1821 = vunpack.c.l.b16 %v1112
    %v1822 = vunpack.c.h.b16 %v1112
    %v1823 = vunpack.c.l.b16 %v1113
    %v1824 = vunpack.c.h.b16 %v1113
    %v1825 = vunpack.c.l.b16 %v1114
    %v1826 = vunpack.c.h.b16 %v1114
    %v1827 = vunpack.c.l.b16 %v1115
    %v1828 = vunpack.c.h.b16 %v1115
    %v1829 = vunpack.c.l.b16 %v1116
    %v1830 = vunpack.c.h.b16 %v1116
    %v1831 = vunpack.c.l.b16 %v1117
    %v1832 = vunpack.c.h.b16 %v1117
    %v1833 = vunpack.c.l.b16 %v1118
    %v1834 = vunpack.c.h.b16 %v1118
    %v1835 = vunpack.c.l.b16 %v1119
    %v1836 = vunpack.c.h.b16 %v1119
    %v1837 = vunpack.c.l.b16 %v1120
    %v1838 = vunpack.c.h.b16 %v1120
    %v1839 = vunpack.c.l.b16 %v1121
    %v1840 = vunpack.c.h.b16 %v1121
    %v1841 = vunpack.c.l.b16 %v1122
    %v1842 = vunpack.c.h.b16 %v1122
    %v1843 = vunpack.c.l.b16 %v1123
    %v1844 = vunpack.c.h.b16 %v1123
    %v1845 = vunpack.c.l.b16 %v1124
    %v1846 = vunpack.c.h.b16 %v1124
    %v1847 = vunpack.c.l.b16 %v1125
    %v1848 = vunpack.c.h.b16 %v1125
    %v1849 = vunpack.c.l.b16 %v1126
    %v1850 = vunpack.c.h.b16 %v1126
    %v1851 = vunpack.c.l.b16 %v1127
    %v1852 = vunpack.c.h.b16 %v1127
    %v1853 = vunpack.c.l.b16 %v1128
    %v1854 = vunpack.c.h.b16 %v1128
    %v1855 = vunpack.c.l.b16 %v1129
    %v1856 = vunpack.c.h.b16 %v1129
    %v1857 = vunpack.c.l.b16 %v1130
    %v1858 = vunpack.c.h.b16 %v1130
    %v1859 = vunpack.c.l.b16 %v1131
    %v1860 = vunpack.c.h.b16 %v1131
    %v1861 = vunpack.c.l.b16 %v1132
    %v1862 = vunpack.c.h.b16 %v1132
    %v1863 = vunpack.c.l.b16 %v1133
    %v1864 = vunpack.c.h.b16 %v1133
    %v1865 = vunpack.c.l.b16 %v1134
    %v1866 = vunpack.c.h.b16 %v1134
    %v1867 = vunpack.c.l.b16 %v1135
    %v1868 = vunpack.c.h.b16 %v1135
    %v1869 = vunpack.c.l.b16 %v1136
    %v1870 = vunpack.c.h.b16 %v1136
    %v1871 = vunpack.c.l.b16 %v1137
    %v1872 = vunpack.c.h.b16 %v1137
    %v1873 = vunpack.c.l.b16 %v1138
    %v1874 = vunpack.c.h.b16 %v1138
    %v1875 = vunpack.c.l.b16 %v1139
    %v1876 = vunpack.c.h.b16 %v1139
    %v1877 = vunpack.c.l.b16 %v1140
    %v1878 = vunpack.c.h.b16 %v1140
    %v1879 = vunpack.c.l.b16 %v1141
    %v1880 = vunpack.c.h.b16 %v1141
    %v1881 = vunpack.c.l.b16 %v1142
    %v1882 = vunpack.c.h.b16 %v1142
    %v1883 = vunpack.c.l.b16 %v1143
    %v1884 = vunpack.c.h.b16 %v1143
    %v1885 = vunpack.c.l.b16 %v1144
    %v1886 = vunpack.c.h.b16 %v1144
    %v1887 = vunpack.c.l.b16 %v1145
    %v1888 = vunpack.c.h.b16 %v1145
    %v1889 = vunpack.c.l.b16 %v1146
    %v1890 = vunpack.c.h.b16 %v1146
    %v1891 = vunpack.c.l.b16 %v1147
    %v1892 = vunpack.c.h.b16 %v1147
    %v1893 = vunpack.c.l.b16 %v1148
    %v1894 = vunpack.c.h.b16 %v1148
    %v1895 = vunpack.c.l.b16 %v1149
    %v1896 = vunpack.c.h.b16 %v1149
    %v1897 = vunpack.c.l.b16 %v1150
    %v1898 = vunpack.c.h.b16 %v1150
    %v1899 = vunpack.c.l.b16 %v1151
    %v1900 = vunpack.c.h.b16 %v1151
    %v1901 = vunpack.c.l.b16 %v1152
    %v1902 = vunpack.c.h.b16 %v1152
    %v1903 = vunpack.c.l.b16 %v1153
    %v1904 = vunpack.c.h.b16 %v1153
    %v1905 = vunpack.c.l.b16 %v1154
    %v1906 = vunpack.c.h.b16 %v1154
    %v1907 = vunpack.c.l.b16 %v1155
    %v1908 = vunpack.c.h.b16 %v1155
    %v1909 = vunpack.c.l.b16 %v1156
    %v1910 = vunpack.c.h.b16 %v1156
    %v1911 = vunpack.c.l.b16 %v1157
    %v1912 = vunpack.c.h.b16 %v1157
    %v1913 = vunpack.c.l.b16 %v1158
    %v1914 = vunpack.c.h.b16 %v1158
    %v1915 = vunpack.c.l.b16 %v1159
    %v1916 = vunpack.c.h.b16 %v1159
    %v1917 = vunpack.c.l.b16 %v1160
    %v1918 = vunpack.c.h.b16 %v1160
    %v1919 = vunpack.c.l.b16 %v1161
    %v1920 = vunpack.c.h.b16 %v1161
    %v1921 = vunpack.c.l.b16 %v1162
    %v1922 = vunpack.c.h.b16 %v1162
    %v1923 = vunpack.c.l.b16 %v1163
    %v1924 = vunpack.c.h.b16 %v1163
    %v1925 = vunpack.c.l.b16 %v1164
    %v1926 = vunpack.c.h.b16 %v1164
    %v1927 = vunpack.c.l.b16 %v1165
    %v1928 = vunpack.c.h.b16 %v1165
    %v1929 = vunpack.c.l.b16 %v1166
    %v1930 = vunpack.c.h.b16 %v1166
    %v1931 = vunpack.c.l.b16 %v1167
    %v1932 = vunpack.c.h.b16 %v1167
    %v1933 = vunpack.c.l.b16 %v1168
    %v1934 = vunpack.c.h.b16 %v1168
    %v1935 = vunpack.c.l.b16 %v1169
    %v1936 = vunpack.c.h.b16 %v1169
    %v1937 = vunpack.c.l.b16 %v1170
    %v1938 = vunpack.c.h.b16 %v1170
    %v1939 = vunpack.c.l.b16 %v1171
    %v1940 = vunpack.c.h.b16 %v1171
    %v1941 = vunpack.c.l.b16 %v1172
    %v1942 = vunpack.c.h.b16 %v1172
    %v1943 = vunpack.c.l.b16 %v1173
    %v1944 = vunpack.c.h.b16 %v1173
    %v1945 = vunpack.c.l.b16 %v1174
    %v1946 = vunpack.c.h.b16 %v1174
    %v1947 = vunpack.c.l.b16 %v1175
    %v1948 = vunpack.c.h.b16 %v1175
    %v1949 = vunpack.c.l.b16 %v1176
    %v1950 = vunpack.c.h.b16 %v1176
    %v1951 = vunpack.c.l.b16 %v1177
    %v1952 = vunpack.c.h.b16 %v1177
    %v1953 = vunpack.c.l.b16 %v1178
    %v1954 = vunpack.c.h.b16 %v1178
    %v1955 = vunpack.c.l.b16 %v1179
    %v1956 = vunpack.c.h.b16 %v1179
    %v1957 = vunpack.c.l.b16 %v1180
    %v1958 = vunpack.c.h.b16 %v1180
    %v1959 = vpack.c.b16 %v1451, %v1447
    %v1960 = vpack.c.b16 %v1452, %v1448
    %v1961 = vpack.c.b16 %v1453, %v1449
    %v1962 = vpack.c.b16 %v1454, %v1450
    %v1963 = vpack.c.b16 %v1459, %v1455
    %v1964 = vpack.c.b16 %v1460, %v1456
    %v1965 = vpack.c.b16 %v1461, %v1457
    %v1966 = vpack.c.b16 %v1462, %v1458
    %v1967 = vpack.c.b16 %v1467, %v1463
    %v1968 = vpack.c.b16 %v1468, %v1464
    %v1969 = vpack.c.b16 %v1469, %v1465
    %v1970 = vpack.c.b16 %v1470, %v1466
    %v1971 = vpack.c.b16 %v1475, %v1471
    %v1972 = vpack.c.b16 %v1476, %v1472
    %v1973 = vpack.c.b16 %v1477, %v1473
    %v1974 = vpack.c.b16 %v1478, %v1474
    %v1975 = vpack.c.b16 %v1483, %v1479
    %v1976 = vpack.c.b16 %v1484, %v1480
    %v1977 = vpack.c.b16 %v1485, %v1481
    %v1978 = vpack.c.b16 %v1486, %v1482
    %v1979 = vpack.c.b16 %v1491, %v1487
    %v1980 = vpack.c.b16 %v1492, %v1488
    %v1981 = vpack.c.b16 %v1493, %v1489
    %v1982 = vpack.c.b16 %v1494, %v1490
    %v1983 = vpack.c.b16 %v1499, %v1495
    %v1984 = vpack.c.b16 %v1500, %v1496
    %v1985 = vpack.c.b16 %v1501, %v1497
    %v1986 = vpack.c.b16 %v1502, %v1498
    %v1987 = vpack.c.b16 %v1507, %v1503
    %v1988 = vpack.c.b16 %v1508, %v1504
    %v1989 = vpack.c.b16 %v1509, %v1505
    %v1990 = vpack.c.b16 %v1510, %v1506
    %v1991 = vpack.c.b16 %v1515, %v1511
    %v1992 = vpack.c.b16 %v1516, %v1512
    %v1993 = vpack.c.b16 %v1517, %v1513
    %v1994 = vpack.c.b16 %v1518, %v1514
    %v1995 = vpack.c.b16 %v1523, %v1519
    %v1996 = vpack.c.b16 %v1524, %v1520
    %v1997 = vpack.c.b16 %v1525, %v1521
    %v1998 = vpack.c.b16 %v1526, %v1522
    %v1999 = vpack.c.b16 %v1531, %v1527
    %v2000 = vpack.c.b16 %v1532, %v1528
    %v2001 = vpack.c.b16 %v1533, %v1529
    %v2002 = vpack.c.b16 %v1534, %v1530
    %v2003 = vpack.c.b16 %v1539, %v1535
    %v2004 = vpack.c.b16 %v1540, %v1536
    %v2005 = vpack.c.b16 %v1541, %v1537
    %v2006 = vpack.c.b16 %v1542, %v1538
    %v2007 = vpack.c.b16 %v1547, %v1543
    %v2008 = vpack.c.b16 %v1548, %v1544
    %v2009 = vpack.c.b16 %v1549, %v1545
    %v2010 = vpack.c.b16 %v1550, %v1546
    %v2011 = vpack.c.b16 %v1555, %v1551
    %v2012 = vpack.c.b16 %v1556, %v1552
    %v2013 = vpack.c.b16 %v1557, %v1553
    %v2014 = vpack.c.b16 %v1558, %v1554
    %v2015 = vpack.c.b16 %v1563, %v1559
    %v2016 = vpack.c.b16 %v1564, %v1560
    %v2017 = vpack.c.b16 %v1565, %v1561
    %v2018 = vpack.c.b16 %v1566, %v1562
    %v2019 = vpack.c.b16 %v1571, %v1567
    %v2020 = vpack.c.b16 %v1572, %v1568
    %v2021 = vpack.c.b16 %v1573, %v1569
    %v2022 = vpack.c.b16 %v1574, %v1570
    %v2023 = vpack.c.b16 %v1579, %v1575
    %v2024 = vpack.c.b16 %v1580, %v1576
    %v2025 = vpack.c.b16 %v1581, %v1577
    %v2026 = vpack.c.b16 %v1582, %v1578
    %v2027 = vpack.c.b16 %v1587, %v1583
    %v2028 = vpack.c.b16 %v1588, %v1584
    %v2029 = vpack.c.b16 %v1589, %v1585
    %v2030 = vpack.c.b16 %v1590, %v1586
    %v2031 = vpack.c.b16 %v1595, %v1591
    %v2032 = vpack.c.b16 %v1596, %v1592
    %v2033 = vpack.c.b16 %v1597, %v1593
    %v2034 = vpack.c.b16 %v1598, %v1594
    %v2035 = vpack.c.b16 %v1603, %v1599
    %v2036 = vpack.c.b16 %v1604, %v1600
    %v2037 = vpack.c.b16 %v1605, %v1601
    %v2038 = vpack.c.b16 %v1606, %v1602
    %v2039 = vpack.c.b16 %v1611, %v1607
    %v2040 = vpack.c.b16 %v1612, %v1608
    %v2041 = vpack.c.b16 %v1613, %v1609
    %v2042 = vpack.c.b16 %v1614, %v1610
    %v2043 = vpack.c.b16 %v1619, %v1615
    %v2044 = vpack.c.b16 %v1620, %v1616
    %v2045 = vpack.c.b16 %v1621, %v1617
    %v2046 = vpack.c.b16 %v1622, %v1618
    %v2047 = vpack.c.b16 %v1627, %v1623
    %v2048 = vpack.c.b16 %v1628, %v1624
    %v2049 = vpack.c.b16 %v1629, %v1625
    %v2050 = vpack.c.b16 %v1630, %v1626
    %v2051 = vpack.c.b16 %v1635, %v1631
    %v2052 = vpack.c.b16 %v1636, %v1632
    %v2053 = vpack.c.b16 %v1637, %v1633
    %v2054 = vpack.c.b16 %v1638, %v1634
    %v2055 = vpack.c.b16 %v1643, %v1639
    %v2056 = vpack.c.b16 %v1644, %v1640
    %v2057 = vpack.c.b16 %v1645, %v1641
    %v2058 = vpack.c.b16 %v1646, %v1642
    %v2059 = vpack.c.b16 %v1651, %v1647
    %v2060 = vpack.c.b16 %v1652, %v1648
    %v2061 = vpack.c.b16 %v1653, %v1649
    %v2062 = vpack.c.b16 %v1654, %v1650
    %v2063 = vpack.c.b16 %v1659, %v1655
    %v2064 = vpack.c.b16 %v1660, %v1656
    %v2065 = vpack.c.b16 %v1661, %v1657
    %v2066 = vpack.c.b16 %v1662, %v1658
    %v2067 = vpack.c.b16 %v1667, %v1663
    %v2068 = vpack.c.b16 %v1668, %v1664
    %v2069 = vpack.c.b16 %v1669, %v1665
    %v2070 = vpack.c.b16 %v1670, %v1666
    %v2071 = vpack.c.b16 %v1675, %v1671
    %v2072 = vpack.c.b16 %v1676, %v1672
    %v2073 = vpack.c.b16 %v1677, %v1673
    %v2074 = vpack.c.b16 %v1678, %v1674
    %v2075 = vpack.c.b16 %v1683, %v1679
    %v2076 = vpack.c.b16 %v1684, %v1680
    %v2077 = vpack.c.b16 %v1685, %v1681
    %v2078 = vpack.c.b16 %v1686, %v1682
    %v2079 = vpack.c.b16 %v1691, %v1687
    %v2080 = vpack.c.b16 %v1692, %v1688
    %v2081 = vpack.c.b16 %v1693, %v1689
    %v2082 = vpack.c.b16 %v1694, %v1690
    %v2083 = vpack.c.b16 %v1699, %v1695
    %v2084 = vpack.c.b16 %v1700, %v1696
    %v2085 = vpack.c.b16 %v1701, %v1697
    %v2086 = vpack.c.b16 %v1702, %v1698
    %v2087 = vpack.c.b16 %v1707, %v1703
    %v2088 = vpack.c.b16 %v1708, %v1704
    %v2089 = vpack.c.b16 %v1709, %v1705
    %v2090 = vpack.c.b16 %v1710, %v1706
    %v2091 = vpack.c.b16 %v1715, %v1711
    %v2092 = vpack.c.b16 %v1716, %v1712
    %v2093 = vpack.c.b16 %v1717, %v1713
    %v2094 = vpack.c.b16 %v1718, %v1714
    %v2095 = vpack.c.b16 %v1723, %v1719
    %v2096 = vpack.c.b16 %v1724, %v1720
    %v2097 = vpack.c.b16 %v1725, %v1721
    %v2098 = vpack.c.b16 %v1726, %v1722
    %v2099 = vpack.c.b16 %v1731, %v1727
    %v2100 = vpack.c.b16 %v1732, %v1728
    %v2101 = vpack.c.b16 %v1733, %v1729
    %v2102 = vpack.c.b16 %v1734, %v1730
    %v2103 = vpack.c.b16 %v1739, %v1735
    %v2104 = vpack.c.b16 %v1740, %v1736
    %v2105 = vpack.c.b16 %v1741, %v1737
    %v2106 = vpack.c.b16 %v1742, %v1738
    %v2107 = vpack.c.b16 %v1747, %v1743
    %v2108 = vpack.c.b16 %v1748, %v1744
    %v2109 = vpack.c.b16 %v1749, %v1745
    %v2110 = vpack.c.b16 %v1750, %v1746
    %v2111 = vpack.c.b16 %v1755, %v1751
    %v2112 = vpack.c.b16 %v1756, %v1752
    %v2113 = vpack.c.b16 %v1757, %v1753
    %v2114 = vpack.c.b16 %v1758, %v1754
    %v2115 = vpack.c.b16 %v1763, %v1759
    %v2116 = vpack.c.b16 %v1764, %v1760
    %v2117 = vpack.c.b16 %v1765, %v1761
    %v2118 = vpack.c.b16 %v1766, %v1762
    %v2119 = vpack.c.b16 %v1771, %v1767
    %v2120 = vpack.c.b16 %v1772, %v1768
    %v2121 = vpack.c.b16 %v1773, %v1769
    %v2122 = vpack.c.b16 %v1774, %v1770
    %v2123 = vpack.c.b16 %v1779, %v1775
    %v2124 = vpack.c.b16 %v1780, %v1776
    %v2125 = vpack.c.b16 %v1781, %v1777
    %v2126 = vpack.c.b16 %v1782, %v1778
    %v2127 = vpack.c.b16 %v1787, %v1783
    %v2128 = vpack.c.b16 %v1788, %v1784
    %v2129 = vpack.c.b16 %v1789, %v1785
    %v2130 = vpack.c.b16 %v1790, %v1786
    %v2131 = vpack.c.b16 %v1795, %v1791
    %v2132 = vpack.c.b16 %v1796, %v1792
    %v2133 = vpack.c.b16 %v1797, %v1793
    %v2134 = vpack.c.b16 %v1798, %v1794
    %v2135 = vpack.c.b16 %v1803, %v1799
    %v2136 = vpack.c.b16 %v1804, %v1800
    %v2137 = vpack.c.b16 %v1805, %v1801
    %v2138 = vpack.c.b16 %v1806, %v1802
    %v2139 = vpack.c.b16 %v1811, %v1807
    %v2140 = vpack.c.b16 %v1812, %v1808
    %v2141 = vpack.c.b16 %v1813, %v1809
    %v2142 = vpack.c.b16 %v1814, %v1810
    %v2143 = vpack.c.b16 %v1819, %v1815
    %v2144 = vpack.c.b16 %v1820, %v1816
    %v2145 = vpack.c.b16 %v1821, %v1817
    %v2146 = vpack.c.b16 %v1822, %v1818
    %v2147 = vpack.c.b16 %v1827, %v1823
    %v2148 = vpack.c.b16 %v1828, %v1824
    %v2149 = vpack.c.b16 %v1829, %v1825
    %v2150 = vpack.c.b16 %v1830, %v1826
    %v2151 = vpack.c.b16 %v1835, %v1831
    %v2152 = vpack.c.b16 %v1836, %v1832
    %v2153 = vpack.c.b16 %v1837, %v1833
    %v2154 = vpack.c.b16 %v1838, %v1834
    %v2155 = vpack.c.b16 %v1843, %v1839
    %v2156 = vpack.c.b16 %v1844, %v1840
    %v2157 = vpack.c.b16 %v1845, %v1841
    %v2158 = vpack.c.b16 %v1846, %v1842
    %v2159 = vpack.c.b16 %v1851, %v1847
    %v2160 = vpack.c.b16 %v1852, %v1848
    %v2161 = vpack.c.b16 %v1853, %v1849
    %v2162 = vpack.c.b16 %v1854, %v1850
    %v2163 = vpack.c.b16 %v1859, %v1855
    %v2164 = vpack.c.b16 %v1860, %v1856
    %v2165 = vpack.c.b16 %v1861, %v1857
    %v2166 = vpack.c.b16 %v1862, %v1858
    %v2167 = vpack.c.b16 %v1867, %v1863
    %v2168 = vpack.c.b16 %v1868, %v1864
    %v2169 = vpack.c.b16 %v1869, %v1865
    %v2170 = vpack.c.b16 %v1870, %v1866
    %v2171 = vpack.c.b16 %v1875, %v1871
    %v2172 = vpack.c.b16 %v1876, %v1872
    %v2173 = vpack.c.b16 %v1877, %v1873
    %v2174 = vpack.c.b16 %v1878, %v1874
    %v2175 = vpack.c.b16 %v1883, %v1879
    %v2176 = vpack.c.b16 %v1884, %v1880
    %v2177 = vpack.c.b16 %v1885, %v1881
    %v2178 = vpack.c.b16 %v1886, %v1882
    %v2179 = vpack.c.b16 %v1891, %v1887
    %v2180 = vpack.c.b16 %v1892, %v1888
    %v2181 = vpack.c.b16 %v1893, %v1889
    %v2182 = vpack.c.b16 %v1894, %v1890
    %v2183 = vpack.c.b16 %v1899, %v1895
    %v2184 = vpack.c.b16 %v1900, %v1896
    %v2185 = vpack.c.b16 %v1901, %v1897
    %v2186 = vpack.c.b16 %v1902, %v1898
    %v2187 = vpack.c.b16 %v1907, %v1903
    %v2188 = vpack.c.b16 %v1908, %v1904
    %v2189 = vpack.c.b16 %v1909, %v1905
    %v2190 = vpack.c.b16 %v1910, %v1906
    %v2191 = vpack.c.b16 %v1915, %v1911
    %v2192 = vpack.c.b16 %v1916, %v1912
    %v2193 = vpack.c.b16 %v1917, %v1913
    %v2194 = vpack.c.b16 %v1918, %v1914
    %v2195 = vpack.c.b16 %v1923, %v1919
    %v2196 = vpack.c.b16 %v1924, %v1920
    %v2197 = vpack.c.b16 %v1925, %v1921
    %v2198 = vpack.c.b16 %v1926, %v1922
    %v2199 = vpack.c.b16 %v1931, %v1927
    %v2200 = vpack.c.b16 %v1932, %v1928
    %v2201 = vpack.c.b16 %v1933, %v1929
    %v2202 = vpack.c.b16 %v1934, %v1930
    %v2203 = vpack.c.b16 %v1939, %v1935
    %v2204 = vpack.c.b16 %v1940, %v1936
    %v2205 = vpack.c.b16 %v1941, %v1937
    %v2206 = vpack.c.b16 %v1942, %v1938
    %v2207 = vpack.c.b16 %v1947, %v1943
    %v2208 = vpack.c.b16 %v1948, %v1944
    %v2209 = vpack.c.b16 %v1949, %v1945
    %v2210 = vpack.c.b16 %v1950, %v1946
    %v2211 = vpack.c.b16 %v1955, %v1951
    %v2212 = vpack.c.b16 %v1956, %v1952
    %v2213 = vpack.c.b16 %v1957, %v1953
    %v2214 = vpack.c.b16 %v1958, %v1954
    %2471 = vmatpush.bf16.msra.mxu0 %v1987
    %2472 = vmatpush.bf16.msra.mxu0 %v1983
    %2473 = vmatpush.bf16.msra.mxu0 %v1979
    %2474 = vmatpush.bf16.msra.mxu0 %v1975
    %2475 = vmatpush.bf16.msra.mxu0 %v1971
    %2476 = vmatpush.bf16.msra.mxu0 %v1967
    %2477 = vmatpush.bf16.msra.mxu0 %v1963
    %2478 = vmatpush.bf16.msra.mxu0 %v1959
    %2479 = vmatmul.bf16.gmra.mxu0 %v917
    %v2480 = vpop.f32.mrf.mxu0
    %v2481 = vadd.f32 %v1183, %v2480
    %v2482 = vpop.f32.mrf.mxu0
    %v2483 = vadd.f32 %v1183, %v2482
    %2484 = vdwg.mxu0
    %2485 = vmatpush.bf16.msra.mxu0 %v2019
    %2486 = vmatpush.bf16.msra.mxu0 %v2015
    %2487 = vmatpush.bf16.msra.mxu0 %v2011
    %2488 = vmatpush.bf16.msra.mxu0 %v2007
    %2489 = vmatpush.bf16.msra.mxu0 %v2003
    %2490 = vmatpush.bf16.msra.mxu0 %v1999
    %2491 = vmatpush.bf16.msra.mxu0 %v1995
    %2492 = vmatpush.bf16.msra.mxu0 %v1991
    %2493 = vmatmul.bf16.gmra.mxu0 %v918
    %v2494 = vpop.f32.mrf.mxu0
    %v2495 = vadd.f32 %v2481, %v2494
    %v2496 = vpop.f32.mrf.mxu0
    %v2497 = vadd.f32 %v2483, %v2496
    %2498 = vdwg.mxu0
    %2499 = vmatpush.bf16.msra.mxu0 %v2051
    %2500 = vmatpush.bf16.msra.mxu0 %v2047
    %2501 = vmatpush.bf16.msra.mxu0 %v2043
    %2502 = vmatpush.bf16.msra.mxu0 %v2039
    %2503 = vmatpush.bf16.msra.mxu0 %v2035
    %2504 = vmatpush.bf16.msra.mxu0 %v2031
    %2505 = vmatpush.bf16.msra.mxu0 %v2027
    %2506 = vmatpush.bf16.msra.mxu0 %v2023
    %2507 = vmatmul.bf16.gmra.mxu0 %v919
    %v2508 = vpop.f32.mrf.mxu0
    %v2509 = vadd.f32 %v2495, %v2508
    %v2510 = vpop.f32.mrf.mxu0
    %v2511 = vadd.f32 %v2497, %v2510
    %2512 = vdwg.mxu0
    %2513 = vmatpush.bf16.msra.mxu0 %v2083
    %2514 = vmatpush.bf16.msra.mxu0 %v2079
    %2515 = vmatpush.bf16.msra.mxu0 %v2075
    %2516 = vmatpush.bf16.msra.mxu0 %v2071
    %2517 = vmatpush.bf16.msra.mxu0 %v2067
    %2518 = vmatpush.bf16.msra.mxu0 %v2063
    %2519 = vmatpush.bf16.msra.mxu0 %v2059
    %2520 = vmatpush.bf16.msra.mxu0 %v2055
    %2521 = vmatmul.bf16.gmra.mxu0 %v920
    %v2522 = vpop.f32.mrf.mxu0
    %v2523 = vadd.f32 %v2509, %v2522
    %v2524 = vpop.f32.mrf.mxu0
    %v2525 = vadd.f32 %v2511, %v2524
    %2526 = vdwg.mxu0
    %2527 = vmatpush.bf16.msra.mxu0 %v2115
    %2528 = vmatpush.bf16.msra.mxu0 %v2111
    %2529 = vmatpush.bf16.msra.mxu0 %v2107
    %2530 = vmatpush.bf16.msra.mxu0 %v2103
    %2531 = vmatpush.bf16.msra.mxu0 %v2099
    %2532 = vmatpush.bf16.msra.mxu0 %v2095
    %2533 = vmatpush.bf16.msra.mxu0 %v2091
    %2534 = vmatpush.bf16.msra.mxu0 %v2087
    %2535 = vmatmul.bf16.gmra.mxu0 %v921
    %v2536 = vpop.f32.mrf.mxu0
    %v2537 = vadd.f32 %v2523, %v2536
    %v2538 = vpop.f32.mrf.mxu0
    %v2539 = vadd.f32 %v2525, %v2538
    %2540 = vdwg.mxu0
    %2541 = vmatpush.bf16.msra.mxu0 %v2147
    %2542 = vmatpush.bf16.msra.mxu0 %v2143
    %2543 = vmatpush.bf16.msra.mxu0 %v2139
    %2544 = vmatpush.bf16.msra.mxu0 %v2135
    %2545 = vmatpush.bf16.msra.mxu0 %v2131
    %2546 = vmatpush.bf16.msra.mxu0 %v2127
    %2547 = vmatpush.bf16.msra.mxu0 %v2123
    %2548 = vmatpush.bf16.msra.mxu0 %v2119
    %2549 = vmatmul.bf16.gmra.mxu0 %v922
    %v2550 = vpop.f32.mrf.mxu0
    %v2551 = vadd.f32 %v2537, %v2550
    %v2552 = vpop.f32.mrf.mxu0
    %v2553 = vadd.f32 %v2539, %v2552
    %2554 = vdwg.mxu0
    %2555 = vmatpush.bf16.msra.mxu0 %v2179
    %2556 = vmatpush.bf16.msra.mxu0 %v2175
    %2557 = vmatpush.bf16.msra.mxu0 %v2171
    %2558 = vmatpush.bf16.msra.mxu0 %v2167
    %2559 = vmatpush.bf16.msra.mxu0 %v2163
    %2560 = vmatpush.bf16.msra.mxu0 %v2159
    %2561 = vmatpush.bf16.msra.mxu0 %v2155
    %2562 = vmatpush.bf16.msra.mxu0 %v2151
    %2563 = vmatmul.bf16.gmra.mxu0 %v923
    %v2564 = vpop.f32.mrf.mxu0
    %v2565 = vadd.f32 %v2551, %v2564
    %v2566 = vpop.f32.mrf.mxu0
    %v2567 = vadd.f32 %v2553, %v2566
    %2568 = vdwg.mxu0
    %2569 = vmatpush.bf16.msra.mxu0 %v2211
    %2570 = vmatpush.bf16.msra.mxu0 %v2207
    %2571 = vmatpush.bf16.msra.mxu0 %v2203
    %2572 = vmatpush.bf16.msra.mxu0 %v2199
    %2573 = vmatpush.bf16.msra.mxu0 %v2195
    %2574 = vmatpush.bf16.msra.mxu0 %v2191
    %2575 = vmatpush.bf16.msra.mxu0 %v2187
    %2576 = vmatpush.bf16.msra.mxu0 %v2183
    %2577 = vmatmul.bf16.gmra.mxu0 %v924
    %v2578 = vpop.f32.mrf.mxu0
    %v2579 = vadd.f32 %v2565, %v2578
    %v2580 = vpop.f32.mrf.mxu0
    %v2581 = vadd.f32 %v2567, %v2580
    %2582 = vdwg.mxu0
    %2583 = vmatpush.bf16.msra.mxu0 %v1988
    %2584 = vmatpush.bf16.msra.mxu0 %v1984
    %2585 = vmatpush.bf16.msra.mxu0 %v1980
    %2586 = vmatpush.bf16.msra.mxu0 %v1976
    %2587 = vmatpush.bf16.msra.mxu0 %v1972
    %2588 = vmatpush.bf16.msra.mxu0 %v1968
    %2589 = vmatpush.bf16.msra.mxu0 %v1964
    %2590 = vmatpush.bf16.msra.mxu0 %v1960
    %2591 = vmatmul.bf16.gmra.mxu0 %v917
    %v2592 = vpop.f32.mrf.mxu0
    %v2593 = vadd.f32 %v1184, %v2592
    %v2594 = vpop.f32.mrf.mxu0
    %v2595 = vadd.f32 %v1184, %v2594
    %2596 = vdwg.mxu0
    %2597 = vmatpush.bf16.msra.mxu0 %v2020
    %2598 = vmatpush.bf16.msra.mxu0 %v2016
    %2599 = vmatpush.bf16.msra.mxu0 %v2012
    %2600 = vmatpush.bf16.msra.mxu0 %v2008
    %2601 = vmatpush.bf16.msra.mxu0 %v2004
    %2602 = vmatpush.bf16.msra.mxu0 %v2000
    %2603 = vmatpush.bf16.msra.mxu0 %v1996
    %2604 = vmatpush.bf16.msra.mxu0 %v1992
    %2605 = vmatmul.bf16.gmra.mxu0 %v918
    %v2606 = vpop.f32.mrf.mxu0
    %v2607 = vadd.f32 %v2593, %v2606
    %v2608 = vpop.f32.mrf.mxu0
    %v2609 = vadd.f32 %v2595, %v2608
    %2610 = vdwg.mxu0
    %2611 = vmatpush.bf16.msra.mxu0 %v2052
    %2612 = vmatpush.bf16.msra.mxu0 %v2048
    %2613 = vmatpush.bf16.msra.mxu0 %v2044
    %2614 = vmatpush.bf16.msra.mxu0 %v2040
    %2615 = vmatpush.bf16.msra.mxu0 %v2036
    %2616 = vmatpush.bf16.msra.mxu0 %v2032
    %2617 = vmatpush.bf16.msra.mxu0 %v2028
    %2618 = vmatpush.bf16.msra.mxu0 %v2024
    %2619 = vmatmul.bf16.gmra.mxu0 %v919
    %v2620 = vpop.f32.mrf.mxu0
    %v2621 = vadd.f32 %v2607, %v2620
    %v2622 = vpop.f32.mrf.mxu0
    %v2623 = vadd.f32 %v2609, %v2622
    %2624 = vdwg.mxu0
    %2625 = vmatpush.bf16.msra.mxu0 %v2084
    %2626 = vmatpush.bf16.msra.mxu0 %v2080
    %2627 = vmatpush.bf16.msra.mxu0 %v2076
    %2628 = vmatpush.bf16.msra.mxu0 %v2072
    %2629 = vmatpush.bf16.msra.mxu0 %v2068
    %2630 = vmatpush.bf16.msra.mxu0 %v2064
    %2631 = vmatpush.bf16.msra.mxu0 %v2060
    %2632 = vmatpush.bf16.msra.mxu0 %v2056
    %2633 = vmatmul.bf16.gmra.mxu0 %v920
    %v2634 = vpop.f32.mrf.mxu0
    %v2635 = vadd.f32 %v2621, %v2634
    %v2636 = vpop.f32.mrf.mxu0
    %v2637 = vadd.f32 %v2623, %v2636
    %2638 = vdwg.mxu0
    %2639 = vmatpush.bf16.msra.mxu0 %v2116
    %2640 = vmatpush.bf16.msra.mxu0 %v2112
    %2641 = vmatpush.bf16.msra.mxu0 %v2108
    %2642 = vmatpush.bf16.msra.mxu0 %v2104
    %2643 = vmatpush.bf16.msra.mxu0 %v2100
    %2644 = vmatpush.bf16.msra.mxu0 %v2096
    %2645 = vmatpush.bf16.msra.mxu0 %v2092
    %2646 = vmatpush.bf16.msra.mxu0 %v2088
    %2647 = vmatmul.bf16.gmra.mxu0 %v921
    %v2648 = vpop.f32.mrf.mxu0
    %v2649 = vadd.f32 %v2635, %v2648
    %v2650 = vpop.f32.mrf.mxu0
    %v2651 = vadd.f32 %v2637, %v2650
    %2652 = vdwg.mxu0
    %2653 = vmatpush.bf16.msra.mxu0 %v2148
    %2654 = vmatpush.bf16.msra.mxu0 %v2144
    %2655 = vmatpush.bf16.msra.mxu0 %v2140
    %2656 = vmatpush.bf16.msra.mxu0 %v2136
    %2657 = vmatpush.bf16.msra.mxu0 %v2132
    %2658 = vmatpush.bf16.msra.mxu0 %v2128
    %2659 = vmatpush.bf16.msra.mxu0 %v2124
    %2660 = vmatpush.bf16.msra.mxu0 %v2120
    %2661 = vmatmul.bf16.gmra.mxu0 %v922
    %v2662 = vpop.f32.mrf.mxu0
    %v2663 = vadd.f32 %v2649, %v2662
    %v2664 = vpop.f32.mrf.mxu0
    %v2665 = vadd.f32 %v2651, %v2664
    %2666 = vdwg.mxu0
    %2667 = vmatpush.bf16.msra.mxu0 %v2180
    %2668 = vmatpush.bf16.msra.mxu0 %v2176
    %2669 = vmatpush.bf16.msra.mxu0 %v2172
    %2670 = vmatpush.bf16.msra.mxu0 %v2168
    %2671 = vmatpush.bf16.msra.mxu0 %v2164
    %2672 = vmatpush.bf16.msra.mxu0 %v2160
    %2673 = vmatpush.bf16.msra.mxu0 %v2156
    %2674 = vmatpush.bf16.msra.mxu0 %v2152
    %2675 = vmatmul.bf16.gmra.mxu0 %v923
    %v2676 = vpop.f32.mrf.mxu0
    %v2677 = vadd.f32 %v2663, %v2676
    %v2678 = vpop.f32.mrf.mxu0
    %v2679 = vadd.f32 %v2665, %v2678
    %2680 = vdwg.mxu0
    %2681 = vmatpush.bf16.msra.mxu0 %v2212
    %2682 = vmatpush.bf16.msra.mxu0 %v2208
    %2683 = vmatpush.bf16.msra.mxu0 %v2204
    %2684 = vmatpush.bf16.msra.mxu0 %v2200
    %2685 = vmatpush.bf16.msra.mxu0 %v2196
    %2686 = vmatpush.bf16.msra.mxu0 %v2192
    %2687 = vmatpush.bf16.msra.mxu0 %v2188
    %2688 = vmatpush.bf16.msra.mxu0 %v2184
    %2689 = vmatmul.bf16.gmra.mxu0 %v924
    %v2690 = vpop.f32.mrf.mxu0
    %v2691 = vadd.f32 %v2677, %v2690
    %v2692 = vpop.f32.mrf.mxu0
    %v2693 = vadd.f32 %v2679, %v2692
    %2694 = vdwg.mxu0
    %2695 = vmatpush.bf16.msra.mxu0 %v1989
    %2696 = vmatpush.bf16.msra.mxu0 %v1985
    %2697 = vmatpush.bf16.msra.mxu0 %v1981
    %2698 = vmatpush.bf16.msra.mxu0 %v1977
    %2699 = vmatpush.bf16.msra.mxu0 %v1973
    %2700 = vmatpush.bf16.msra.mxu0 %v1969
    %2701 = vmatpush.bf16.msra.mxu0 %v1965
    %2702 = vmatpush.bf16.msra.mxu0 %v1961
    %2703 = vmatmul.bf16.gmra.mxu0 %v917
    %v2704 = vpop.f32.mrf.mxu0
    %v2705 = vadd.f32 %v1185, %v2704
    %v2706 = vpop.f32.mrf.mxu0
    %v2707 = vadd.f32 %v1185, %v2706
    %2708 = vdwg.mxu0
    %2709 = vmatpush.bf16.msra.mxu0 %v2021
    %2710 = vmatpush.bf16.msra.mxu0 %v2017
    %2711 = vmatpush.bf16.msra.mxu0 %v2013
    %2712 = vmatpush.bf16.msra.mxu0 %v2009
    %2713 = vmatpush.bf16.msra.mxu0 %v2005
    %2714 = vmatpush.bf16.msra.mxu0 %v2001
    %2715 = vmatpush.bf16.msra.mxu0 %v1997
    %2716 = vmatpush.bf16.msra.mxu0 %v1993
    %2717 = vmatmul.bf16.gmra.mxu0 %v918
    %v2718 = vpop.f32.mrf.mxu0
    %v2719 = vadd.f32 %v2705, %v2718
    %v2720 = vpop.f32.mrf.mxu0
    %v2721 = vadd.f32 %v2707, %v2720
    %2722 = vdwg.mxu0
    %2723 = vmatpush.bf16.msra.mxu0 %v2053
    %2724 = vmatpush.bf16.msra.mxu0 %v2049
    %2725 = vmatpush.bf16.msra.mxu0 %v2045
    %2726 = vmatpush.bf16.msra.mxu0 %v2041
    %2727 = vmatpush.bf16.msra.mxu0 %v2037
    %2728 = vmatpush.bf16.msra.mxu0 %v2033
    %2729 = vmatpush.bf16.msra.mxu0 %v2029
    %2730 = vmatpush.bf16.msra.mxu0 %v2025
    %2731 = vmatmul.bf16.gmra.mxu0 %v919
    %v2732 = vpop.f32.mrf.mxu0
    %v2733 = vadd.f32 %v2719, %v2732
    %v2734 = vpop.f32.mrf.mxu0
    %v2735 = vadd.f32 %v2721, %v2734
    %2736 = vdwg.mxu0
    %2737 = vmatpush.bf16.msra.mxu0 %v2085
    %2738 = vmatpush.bf16.msra.mxu0 %v2081
    %2739 = vmatpush.bf16.msra.mxu0 %v2077
    %2740 = vmatpush.bf16.msra.mxu0 %v2073
    %2741 = vmatpush.bf16.msra.mxu0 %v2069
    %2742 = vmatpush.bf16.msra.mxu0 %v2065
    %2743 = vmatpush.bf16.msra.mxu0 %v2061
    %2744 = vmatpush.bf16.msra.mxu0 %v2057
    %2745 = vmatmul.bf16.gmra.mxu0 %v920
    %v2746 = vpop.f32.mrf.mxu0
    %v2747 = vadd.f32 %v2733, %v2746
    %v2748 = vpop.f32.mrf.mxu0
    %v2749 = vadd.f32 %v2735, %v2748
    %2750 = vdwg.mxu0
    %2751 = vmatpush.bf16.msra.mxu0 %v2117
    %2752 = vmatpush.bf16.msra.mxu0 %v2113
    %2753 = vmatpush.bf16.msra.mxu0 %v2109
    %2754 = vmatpush.bf16.msra.mxu0 %v2105
    %2755 = vmatpush.bf16.msra.mxu0 %v2101
    %2756 = vmatpush.bf16.msra.mxu0 %v2097
    %2757 = vmatpush.bf16.msra.mxu0 %v2093
    %2758 = vmatpush.bf16.msra.mxu0 %v2089
    %2759 = vmatmul.bf16.gmra.mxu0 %v921
    %v2760 = vpop.f32.mrf.mxu0
    %v2761 = vadd.f32 %v2747, %v2760
    %v2762 = vpop.f32.mrf.mxu0
    %v2763 = vadd.f32 %v2749, %v2762
    %2764 = vdwg.mxu0
    %2765 = vmatpush.bf16.msra.mxu0 %v2149
    %2766 = vmatpush.bf16.msra.mxu0 %v2145
    %2767 = vmatpush.bf16.msra.mxu0 %v2141
    %2768 = vmatpush.bf16.msra.mxu0 %v2137
    %2769 = vmatpush.bf16.msra.mxu0 %v2133
    %2770 = vmatpush.bf16.msra.mxu0 %v2129
    %2771 = vmatpush.bf16.msra.mxu0 %v2125
    %2772 = vmatpush.bf16.msra.mxu0 %v2121
    %2773 = vmatmul.bf16.gmra.mxu0 %v922
    %v2774 = vpop.f32.mrf.mxu0
    %v2775 = vadd.f32 %v2761, %v2774
    %v2776 = vpop.f32.mrf.mxu0
    %v2777 = vadd.f32 %v2763, %v2776
    %2778 = vdwg.mxu0
    %2779 = vmatpush.bf16.msra.mxu0 %v2181
    %2780 = vmatpush.bf16.msra.mxu0 %v2177
    %2781 = vmatpush.bf16.msra.mxu0 %v2173
    %2782 = vmatpush.bf16.msra.mxu0 %v2169
    %2783 = vmatpush.bf16.msra.mxu0 %v2165
    %2784 = vmatpush.bf16.msra.mxu0 %v2161
    %2785 = vmatpush.bf16.msra.mxu0 %v2157
    %2786 = vmatpush.bf16.msra.mxu0 %v2153
    %2787 = vmatmul.bf16.gmra.mxu0 %v923
    %v2788 = vpop.f32.mrf.mxu0
    %v2789 = vadd.f32 %v2775, %v2788
    %v2790 = vpop.f32.mrf.mxu0
    %v2791 = vadd.f32 %v2777, %v2790
    %2792 = vdwg.mxu0
    %2793 = vmatpush.bf16.msra.mxu0 %v2213
    %2794 = vmatpush.bf16.msra.mxu0 %v2209
    %2795 = vmatpush.bf16.msra.mxu0 %v2205
    %2796 = vmatpush.bf16.msra.mxu0 %v2201
    %2797 = vmatpush.bf16.msra.mxu0 %v2197
    %2798 = vmatpush.bf16.msra.mxu0 %v2193
    %2799 = vmatpush.bf16.msra.mxu0 %v2189
    %2800 = vmatpush.bf16.msra.mxu0 %v2185
    %2801 = vmatmul.bf16.gmra.mxu0 %v924
    %v2802 = vpop.f32.mrf.mxu0
    %v2803 = vadd.f32 %v2789, %v2802
    %v2804 = vpop.f32.mrf.mxu0
    %v2805 = vadd.f32 %v2791, %v2804
    %2806 = vdwg.mxu0
    %2807 = vmatpush.bf16.msra.mxu0 %v1990
    %2808 = vmatpush.bf16.msra.mxu0 %v1986
    %2809 = vmatpush.bf16.msra.mxu0 %v1982
    %2810 = vmatpush.bf16.msra.mxu0 %v1978
    %2811 = vmatpush.bf16.msra.mxu0 %v1974
    %2812 = vmatpush.bf16.msra.mxu0 %v1970
    %2813 = vmatpush.bf16.msra.mxu0 %v1966
    %2814 = vmatpush.bf16.msra.mxu0 %v1962
    %2815 = vmatmul.bf16.gmra.mxu0 %v917
    %v2816 = vpop.f32.mrf.mxu0
    %v2817 = vadd.f32 %v1186, %v2816
    %v2818 = vpop.f32.mrf.mxu0
    %v2819 = vadd.f32 %v1186, %v2818
    %2820 = vdwg.mxu0
    %2821 = vmatpush.bf16.msra.mxu0 %v2022
    %2822 = vmatpush.bf16.msra.mxu0 %v2018
    %2823 = vmatpush.bf16.msra.mxu0 %v2014
    %2824 = vmatpush.bf16.msra.mxu0 %v2010
    %2825 = vmatpush.bf16.msra.mxu0 %v2006
    %2826 = vmatpush.bf16.msra.mxu0 %v2002
    %2827 = vmatpush.bf16.msra.mxu0 %v1998
    %2828 = vmatpush.bf16.msra.mxu0 %v1994
    %2829 = vmatmul.bf16.gmra.mxu0 %v918
    %v2830 = vpop.f32.mrf.mxu0
    %v2831 = vadd.f32 %v2817, %v2830
    %v2832 = vpop.f32.mrf.mxu0
    %v2833 = vadd.f32 %v2819, %v2832
    %2834 = vdwg.mxu0
    %2835 = vmatpush.bf16.msra.mxu0 %v2054
    %2836 = vmatpush.bf16.msra.mxu0 %v2050
    %2837 = vmatpush.bf16.msra.mxu0 %v2046
    %2838 = vmatpush.bf16.msra.mxu0 %v2042
    %2839 = vmatpush.bf16.msra.mxu0 %v2038
    %2840 = vmatpush.bf16.msra.mxu0 %v2034
    %2841 = vmatpush.bf16.msra.mxu0 %v2030
    %2842 = vmatpush.bf16.msra.mxu0 %v2026
    %2843 = vmatmul.bf16.gmra.mxu0 %v919
    %v2844 = vpop.f32.mrf.mxu0
    %v2845 = vadd.f32 %v2831, %v2844
    %v2846 = vpop.f32.mrf.mxu0
    %v2847 = vadd.f32 %v2833, %v2846
    %2848 = vdwg.mxu0
    %2849 = vmatpush.bf16.msra.mxu0 %v2086
    %2850 = vmatpush.bf16.msra.mxu0 %v2082
    %2851 = vmatpush.bf16.msra.mxu0 %v2078
    %2852 = vmatpush.bf16.msra.mxu0 %v2074
    %2853 = vmatpush.bf16.msra.mxu0 %v2070
    %2854 = vmatpush.bf16.msra.mxu0 %v2066
    %2855 = vmatpush.bf16.msra.mxu0 %v2062
    %2856 = vmatpush.bf16.msra.mxu0 %v2058
    %2857 = vmatmul.bf16.gmra.mxu0 %v920
    %v2858 = vpop.f32.mrf.mxu0
    %v2859 = vadd.f32 %v2845, %v2858
    %v2860 = vpop.f32.mrf.mxu0
    %v2861 = vadd.f32 %v2847, %v2860
    %2862 = vdwg.mxu0
    %2863 = vmatpush.bf16.msra.mxu0 %v2118
    %2864 = vmatpush.bf16.msra.mxu0 %v2114
    %2865 = vmatpush.bf16.msra.mxu0 %v2110
    %2866 = vmatpush.bf16.msra.mxu0 %v2106
    %2867 = vmatpush.bf16.msra.mxu0 %v2102
    %2868 = vmatpush.bf16.msra.mxu0 %v2098
    %2869 = vmatpush.bf16.msra.mxu0 %v2094
    %2870 = vmatpush.bf16.msra.mxu0 %v2090
    %2871 = vmatmul.bf16.gmra.mxu0 %v921
    %v2872 = vpop.f32.mrf.mxu0
    %v2873 = vadd.f32 %v2859, %v2872
    %v2874 = vpop.f32.mrf.mxu0
    %v2875 = vadd.f32 %v2861, %v2874
    %2876 = vdwg.mxu0
    %2877 = vmatpush.bf16.msra.mxu0 %v2150
    %2878 = vmatpush.bf16.msra.mxu0 %v2146
    %2879 = vmatpush.bf16.msra.mxu0 %v2142
    %2880 = vmatpush.bf16.msra.mxu0 %v2138
    %2881 = vmatpush.bf16.msra.mxu0 %v2134
    %2882 = vmatpush.bf16.msra.mxu0 %v2130
    %2883 = vmatpush.bf16.msra.mxu0 %v2126
    %2884 = vmatpush.bf16.msra.mxu0 %v2122
    %2885 = vmatmul.bf16.gmra.mxu0 %v922
    %v2886 = vpop.f32.mrf.mxu0
    %v2887 = vadd.f32 %v2873, %v2886
    %v2888 = vpop.f32.mrf.mxu0
    %v2889 = vadd.f32 %v2875, %v2888
    %2890 = vdwg.mxu0
    %2891 = vmatpush.bf16.msra.mxu0 %v2182
    %2892 = vmatpush.bf16.msra.mxu0 %v2178
    %2893 = vmatpush.bf16.msra.mxu0 %v2174
    %2894 = vmatpush.bf16.msra.mxu0 %v2170
    %2895 = vmatpush.bf16.msra.mxu0 %v2166
    %2896 = vmatpush.bf16.msra.mxu0 %v2162
    %2897 = vmatpush.bf16.msra.mxu0 %v2158
    %2898 = vmatpush.bf16.msra.mxu0 %v2154
    %2899 = vmatmul.bf16.gmra.mxu0 %v923
    %v2900 = vpop.f32.mrf.mxu0
    %v2901 = vadd.f32 %v2887, %v2900
    %v2902 = vpop.f32.mrf.mxu0
    %v2903 = vadd.f32 %v2889, %v2902
    %2904 = vdwg.mxu0
    %2905 = vmatpush.bf16.msra.mxu0 %v2214
    %2906 = vmatpush.bf16.msra.mxu0 %v2210
    %2907 = vmatpush.bf16.msra.mxu0 %v2206
    %2908 = vmatpush.bf16.msra.mxu0 %v2202
    %2909 = vmatpush.bf16.msra.mxu0 %v2198
    %2910 = vmatpush.bf16.msra.mxu0 %v2194
    %2911 = vmatpush.bf16.msra.mxu0 %v2190
    %2912 = vmatpush.bf16.msra.mxu0 %v2186
    %2913 = vmatmul.bf16.gmra.mxu0 %v924
    %v2914 = vpop.f32.mrf.mxu0
    %v2915 = vadd.f32 %v2901, %v2914
    %v2916 = vpop.f32.mrf.mxu0
    %v2917 = vadd.f32 %v2903, %v2916
    %2918 = vdwg.mxu0
    %v2919 = vld [vmem:[%s7] sm:$0xf]
    %v2920 = vld [vmem:[#allocation14] sm:$0xf]
    %v2921 = vadd.f32 %v2579, %v2691
    %v2922 = vadd.f32 %v2921, %v2803
    %v2923 = vadd.f32 %v2922, %v2915
    %2924 = vadd.xlane.f32.xlu0 %v2923
    %v2925 = vpop.xlane.xlu0 %2924
    %v2926 = vadd.f32 %v2581, %v2693
    %v2927 = vadd.f32 %v2926, %v2805
    %v2928 = vadd.f32 %v2927, %v2917
    %2929 = vadd.xlane.f32.xlu0 %v2928
    %v2930 = vpop.xlane.xlu0 %2929
    %v2931 = vrcp.pop 512.0
    %v2932 = vmul.f32 512.0, %v2931
    %v2933 = vsub.f32 1.0, %v2932
    %v2934 = vmul.f32 %v2931, %v2933
    %v2935 = vadd.f32 %v2931, %v2934
    %vm2936 = vweird.f32 %v2931
    %v2937 = vsel %vm2936, %v2931, %v2935
    %v2938 = vmul.f32 %v2925, %v2937
    %v2939 = vmul.f32 %v2930, %v2937
    %v2940 = vsub.f32 %v2579, %v2938
    %v2941 = vsub.f32 %v2691, %v2938
    %v2942 = vsub.f32 %v2803, %v2938
    %v2943 = vsub.f32 %v2915, %v2938
    %v2944 = vsub.f32 %v2581, %v2939
    %v2945 = vsub.f32 %v2693, %v2939
    %v2946 = vsub.f32 %v2805, %v2939
    %v2947 = vsub.f32 %v2917, %v2939
    %v2948 = vmul.f32 %v2940, %v2940
    %v2949 = vmul.f32 %v2941, %v2941
    %v2950 = vmul.f32 %v2942, %v2942
    %v2951 = vmul.f32 %v2943, %v2943
    %v2952 = vmul.f32 %v2944, %v2944
    %v2953 = vmul.f32 %v2945, %v2945
    %v2954 = vmul.f32 %v2946, %v2946
    %v2955 = vmul.f32 %v2947, %v2947
    %v2956 = vadd.f32 %v2948, %v2949
    %v2957 = vadd.f32 %v2956, %v2950
    %v2958 = vadd.f32 %v2957, %v2951
    %2959 = vadd.xlane.f32.xlu0 %v2958
    %v2960 = vpop.xlane.xlu0 %2959
    %v2961 = vadd.f32 %v2952, %v2953
    %v2962 = vadd.f32 %v2961, %v2954
    %v2963 = vadd.f32 %v2962, %v2955
    %2964 = vadd.xlane.f32.xlu0 %v2963
    %v2965 = vpop.xlane.xlu0 %2964
    %v2966 = vmul.f32 %v2960, %v2937
    %v2967 = vmul.f32 %v2965, %v2937
    %v2968 = vadd.f32 %v2966, 1e-05
    %v2969 = vadd.f32 %v2967, 1e-05
    %v2970 = vrsqrt.pop %v2968
    %v2971 = vmul.f32 %v2970, %v2968
    %v2972 = vmul.f32 %v2971, %v2970
    %v2973 = vmul.f32 0.5, %v2972
    %v2974 = vsub.f32 1.5, %v2973
    %v2975 = vmul.f32 %v2970, %v2974
    %vm2976 = vweird.f32 %v2968
    %vm2977 = vweird.f32 %v2970
    %vm2978 = vmor %vm2976, %vm2977
    %v2979 = vsel %vm2978, %v2970, %v2975
    %v2980 = vrsqrt.pop %v2969
    %v2981 = vmul.f32 %v2980, %v2969
    %v2982 = vmul.f32 %v2981, %v2980
    %v2983 = vmul.f32 0.5, %v2982
    %v2984 = vsub.f32 1.5, %v2983
    %v2985 = vmul.f32 %v2980, %v2984
    %vm2986 = vweird.f32 %v2969
    %vm2987 = vweird.f32 %v2980
    %vm2988 = vmor %vm2986, %vm2987
    %v2989 = vsel %vm2988, %v2980, %v2985
    %v2990 = vmul.f32 %v2940, %v2979
    %v2991 = vmul.f32 %v2941, %v2979
    %v2992 = vmul.f32 %v2942, %v2979
    %v2993 = vmul.f32 %v2943, %v2979
    %v2994 = vmul.f32 %v2944, %v2989
    %v2995 = vmul.f32 %v2945, %v2989
    %v2996 = vmul.f32 %v2946, %v2989
    %v2997 = vmul.f32 %v2947, %v2989
    %v2999 = vperm.slane %v2919, 0
    %v3000 = vperm.slane %v2919, 1
    %v3001 = vperm.slane %v2919, 2
    %v3002 = vperm.slane %v2919, 3
    %v3007 = vmul.f32 %v2990, %v2999
    %v3008 = vmul.f32 %v2991, %v3000
    %v3009 = vmul.f32 %v2992, %v3001
    %v3010 = vmul.f32 %v2993, %v3002
    %v3011 = vmul.f32 %v2994, %v2999
    %v3012 = vmul.f32 %v2995, %v3000
    %v3013 = vmul.f32 %v2996, %v3001
    %v3014 = vmul.f32 %v2997, %v3002
    %v3016 = vperm.slane %v2920, 0
    %v3017 = vperm.slane %v2920, 1
    %v3018 = vperm.slane %v2920, 2
    %v3019 = vperm.slane %v2920, 3
    %v3024 = vadd.f32 %v3007, %v3016
    %v3025 = vadd.f32 %v3008, %v3017
    %v3026 = vadd.f32 %v3009, %v3018
    %v3027 = vadd.f32 %v3010, %v3019
    %v3028 = vadd.f32 %v3011, %v3016
    %v3029 = vadd.f32 %v3012, %v3017
    %v3030 = vadd.f32 %v3013, %v3018
    %v3031 = vadd.f32 %v3014, %v3019
    %v3032 = vmul.f32 %v3024, 0.2
    %v3033 = vmul.f32 %v3025, 0.2
    %v3034 = vmul.f32 %v3026, 0.2
    %v3035 = vmul.f32 %v3027, 0.2
    %v3036 = vmul.f32 %v3028, 0.2
    %v3037 = vmul.f32 %v3029, 0.2
    %v3038 = vmul.f32 %v3030, 0.2
    %v3039 = vmul.f32 %v3031, 0.2
    %v3040 = vmax.f32 %v3024, %v3032
    %v3041 = vmax.f32 %v3025, %v3033
    %v3042 = vmax.f32 %v3026, %v3034
    %v3043 = vmax.f32 %v3027, %v3035
    %v3044 = vmax.f32 %v3028, %v3036
    %v3045 = vmax.f32 %v3029, %v3037
    %v3046 = vmax.f32 %v3030, %v3038
    %v3047 = vmax.f32 %v3031, %v3039
    %v3048 = vpack.c.bf16 %v3044, %v3040
    %v3049 = vpack.c.bf16 %v3045, %v3041
    %v3050 = vpack.c.bf16 %v3046, %v3042
    %v3051 = vpack.c.bf16 %v3047, %v3043
    %v3052 = vld [vmem:[#allocation15] sm:$0xff]
    %v3053 = vld [vmem:[#allocation15 + $0x8] sm:$0xff]
    %v3054 = vld [vmem:[#allocation15 + $0x10] sm:$0xff]
    %v3055 = vld [vmem:[#allocation15 + $0x18] sm:$0xff]
    %v3056 = vld [vmem:[#allocation15 + $0x20] sm:$0xff]
    %v3057 = vld [vmem:[#allocation15 + $0x28] sm:$0xff]
    %v3058 = vld [vmem:[#allocation15 + $0x30] sm:$0xff]
    %v3059 = vld [vmem:[#allocation15 + $0x38] sm:$0xff]
    %v3060 = vld [vmem:[#allocation15 + $0x40] sm:$0xff]
    %v3061 = vld [vmem:[#allocation15 + $0x48] sm:$0xff]
    %v3062 = vld [vmem:[#allocation15 + $0x50] sm:$0xff]
    %v3063 = vld [vmem:[#allocation15 + $0x58] sm:$0xff]
    %v3064 = vld [vmem:[#allocation15 + $0x60] sm:$0xff]
    %v3065 = vld [vmem:[#allocation15 + $0x68] sm:$0xff]
    %v3066 = vld [vmem:[#allocation15 + $0x70] sm:$0xff]
    %v3067 = vld [vmem:[#allocation15 + $0x78] sm:$0xff]
    %v3068 = vld [vmem:[#allocation15 + $0x80] sm:$0xff]
    %v3069 = vld [vmem:[#allocation15 + $0x88] sm:$0xff]
    %v3070 = vld [vmem:[#allocation15 + $0x90] sm:$0xff]
    %v3071 = vld [vmem:[#allocation15 + $0x98] sm:$0xff]
    %v3072 = vld [vmem:[#allocation15 + $0xa0] sm:$0xff]
    %v3073 = vld [vmem:[#allocation15 + $0xa8] sm:$0xff]
    %v3074 = vld [vmem:[#allocation15 + $0xb0] sm:$0xff]
    %v3075 = vld [vmem:[#allocation15 + $0xb8] sm:$0xff]
    %v3076 = vld [vmem:[#allocation15 + $0xc0] sm:$0xff]
    %v3077 = vld [vmem:[#allocation15 + $0xc8] sm:$0xff]
    %v3078 = vld [vmem:[#allocation15 + $0xd0] sm:$0xff]
    %v3079 = vld [vmem:[#allocation15 + $0xd8] sm:$0xff]
    %v3080 = vld [vmem:[#allocation15 + $0xe0] sm:$0xff]
    %v3081 = vld [vmem:[#allocation15 + $0xe8] sm:$0xff]
    %v3082 = vld [vmem:[#allocation15 + $0xf0] sm:$0xff]
    %v3083 = vld [vmem:[#allocation15 + $0xf8] sm:$0xff]
    %v3084 = vld [vmem:[#allocation15 + $0x100] sm:$0xff]
    %v3085 = vld [vmem:[#allocation15 + $0x108] sm:$0xff]
    %v3086 = vld [vmem:[#allocation15 + $0x110] sm:$0xff]
    %v3087 = vld [vmem:[#allocation15 + $0x118] sm:$0xff]
    %v3088 = vld [vmem:[#allocation15 + $0x120] sm:$0xff]
    %v3089 = vld [vmem:[#allocation15 + $0x128] sm:$0xff]
    %v3090 = vld [vmem:[#allocation15 + $0x130] sm:$0xff]
    %v3091 = vld [vmem:[#allocation15 + $0x138] sm:$0xff]
    %v3092 = vld [vmem:[#allocation15 + $0x140] sm:$0xff]
    %v3093 = vld [vmem:[#allocation15 + $0x148] sm:$0xff]
    %v3094 = vld [vmem:[#allocation15 + $0x150] sm:$0xff]
    %v3095 = vld [vmem:[#allocation15 + $0x158] sm:$0xff]
    %v3096 = vld [vmem:[#allocation15 + $0x160] sm:$0xff]
    %v3097 = vld [vmem:[#allocation15 + $0x168] sm:$0xff]
    %v3098 = vld [vmem:[#allocation15 + $0x170] sm:$0xff]
    %v3099 = vld [vmem:[#allocation15 + $0x178] sm:$0xff]
    %v3100 = vld [vmem:[#allocation15 + $0x180] sm:$0xff]
    %v3101 = vld [vmem:[#allocation15 + $0x188] sm:$0xff]
    %v3102 = vld [vmem:[#allocation15 + $0x190] sm:$0xff]
    %v3103 = vld [vmem:[#allocation15 + $0x198] sm:$0xff]
    %v3104 = vld [vmem:[#allocation15 + $0x1a0] sm:$0xff]
    %v3105 = vld [vmem:[#allocation15 + $0x1a8] sm:$0xff]
    %v3106 = vld [vmem:[#allocation15 + $0x1b0] sm:$0xff]
    %v3107 = vld [vmem:[#allocation15 + $0x1b8] sm:$0xff]
    %v3108 = vld [vmem:[#allocation15 + $0x1c0] sm:$0xff]
    %v3109 = vld [vmem:[#allocation15 + $0x1c8] sm:$0xff]
    %v3110 = vld [vmem:[#allocation15 + $0x1d0] sm:$0xff]
    %v3111 = vld [vmem:[#allocation15 + $0x1d8] sm:$0xff]
    %v3112 = vld [vmem:[#allocation15 + $0x1e0] sm:$0xff]
    %v3113 = vld [vmem:[#allocation15 + $0x1e8] sm:$0xff]
    %v3114 = vld [vmem:[#allocation15 + $0x1f0] sm:$0xff]
    %v3115 = vld [vmem:[#allocation15 + $0x1f8] sm:$0xff]
    %v3116 = vld [vmem:[%s10] sm:$0x3]
    %v3118 = vperm.slane %v3116, 0
    %v3119 = vperm.slane %v3116, 1
    %v3186 = vunpack.c.l.b16 %v3052
    %v3187 = vunpack.c.h.b16 %v3052
    %v3188 = vunpack.c.l.b16 %v3053
    %v3189 = vunpack.c.h.b16 %v3053
    %v3190 = vunpack.c.l.b16 %v3054
    %v3191 = vunpack.c.h.b16 %v3054
    %v3192 = vunpack.c.l.b16 %v3055
    %v3193 = vunpack.c.h.b16 %v3055
    %v3194 = vunpack.c.l.b16 %v3056
    %v3195 = vunpack.c.h.b16 %v3056
    %v3196 = vunpack.c.l.b16 %v3057
    %v3197 = vunpack.c.h.b16 %v3057
    %v3198 = vunpack.c.l.b16 %v3058
    %v3199 = vunpack.c.h.b16 %v3058
    %v3200 = vunpack.c.l.b16 %v3059
    %v3201 = vunpack.c.h.b16 %v3059
    %v3202 = vunpack.c.l.b16 %v3060
    %v3203 = vunpack.c.h.b16 %v3060
    %v3204 = vunpack.c.l.b16 %v3061
    %v3205 = vunpack.c.h.b16 %v3061
    %v3206 = vunpack.c.l.b16 %v3062
    %v3207 = vunpack.c.h.b16 %v3062
    %v3208 = vunpack.c.l.b16 %v3063
    %v3209 = vunpack.c.h.b16 %v3063
    %v3210 = vunpack.c.l.b16 %v3064
    %v3211 = vunpack.c.h.b16 %v3064
    %v3212 = vunpack.c.l.b16 %v3065
    %v3213 = vunpack.c.h.b16 %v3065
    %v3214 = vunpack.c.l.b16 %v3066
    %v3215 = vunpack.c.h.b16 %v3066
    %v3216 = vunpack.c.l.b16 %v3067
    %v3217 = vunpack.c.h.b16 %v3067
    %v3218 = vunpack.c.l.b16 %v3068
    %v3219 = vunpack.c.h.b16 %v3068
    %v3220 = vunpack.c.l.b16 %v3069
    %v3221 = vunpack.c.h.b16 %v3069
    %v3222 = vunpack.c.l.b16 %v3070
    %v3223 = vunpack.c.h.b16 %v3070
    %v3224 = vunpack.c.l.b16 %v3071
    %v3225 = vunpack.c.h.b16 %v3071
    %v3226 = vunpack.c.l.b16 %v3072
    %v3227 = vunpack.c.h.b16 %v3072
    %v3228 = vunpack.c.l.b16 %v3073
    %v3229 = vunpack.c.h.b16 %v3073
    %v3230 = vunpack.c.l.b16 %v3074
    %v3231 = vunpack.c.h.b16 %v3074
    %v3232 = vunpack.c.l.b16 %v3075
    %v3233 = vunpack.c.h.b16 %v3075
    %v3234 = vunpack.c.l.b16 %v3076
    %v3235 = vunpack.c.h.b16 %v3076
    %v3236 = vunpack.c.l.b16 %v3077
    %v3237 = vunpack.c.h.b16 %v3077
    %v3238 = vunpack.c.l.b16 %v3078
    %v3239 = vunpack.c.h.b16 %v3078
    %v3240 = vunpack.c.l.b16 %v3079
    %v3241 = vunpack.c.h.b16 %v3079
    %v3242 = vunpack.c.l.b16 %v3080
    %v3243 = vunpack.c.h.b16 %v3080
    %v3244 = vunpack.c.l.b16 %v3081
    %v3245 = vunpack.c.h.b16 %v3081
    %v3246 = vunpack.c.l.b16 %v3082
    %v3247 = vunpack.c.h.b16 %v3082
    %v3248 = vunpack.c.l.b16 %v3083
    %v3249 = vunpack.c.h.b16 %v3083
    %v3250 = vunpack.c.l.b16 %v3084
    %v3251 = vunpack.c.h.b16 %v3084
    %v3252 = vunpack.c.l.b16 %v3085
    %v3253 = vunpack.c.h.b16 %v3085
    %v3254 = vunpack.c.l.b16 %v3086
    %v3255 = vunpack.c.h.b16 %v3086
    %v3256 = vunpack.c.l.b16 %v3087
    %v3257 = vunpack.c.h.b16 %v3087
    %v3258 = vunpack.c.l.b16 %v3088
    %v3259 = vunpack.c.h.b16 %v3088
    %v3260 = vunpack.c.l.b16 %v3089
    %v3261 = vunpack.c.h.b16 %v3089
    %v3262 = vunpack.c.l.b16 %v3090
    %v3263 = vunpack.c.h.b16 %v3090
    %v3264 = vunpack.c.l.b16 %v3091
    %v3265 = vunpack.c.h.b16 %v3091
    %v3266 = vunpack.c.l.b16 %v3092
    %v3267 = vunpack.c.h.b16 %v3092
    %v3268 = vunpack.c.l.b16 %v3093
    %v3269 = vunpack.c.h.b16 %v3093
    %v3270 = vunpack.c.l.b16 %v3094
    %v3271 = vunpack.c.h.b16 %v3094
    %v3272 = vunpack.c.l.b16 %v3095
    %v3273 = vunpack.c.h.b16 %v3095
    %v3274 = vunpack.c.l.b16 %v3096
    %v3275 = vunpack.c.h.b16 %v3096
    %v3276 = vunpack.c.l.b16 %v3097
    %v3277 = vunpack.c.h.b16 %v3097
    %v3278 = vunpack.c.l.b16 %v3098
    %v3279 = vunpack.c.h.b16 %v3098
    %v3280 = vunpack.c.l.b16 %v3099
    %v3281 = vunpack.c.h.b16 %v3099
    %v3282 = vunpack.c.l.b16 %v3100
    %v3283 = vunpack.c.h.b16 %v3100
    %v3284 = vunpack.c.l.b16 %v3101
    %v3285 = vunpack.c.h.b16 %v3101
    %v3286 = vunpack.c.l.b16 %v3102
    %v3287 = vunpack.c.h.b16 %v3102
    %v3288 = vunpack.c.l.b16 %v3103
    %v3289 = vunpack.c.h.b16 %v3103
    %v3290 = vunpack.c.l.b16 %v3104
    %v3291 = vunpack.c.h.b16 %v3104
    %v3292 = vunpack.c.l.b16 %v3105
    %v3293 = vunpack.c.h.b16 %v3105
    %v3294 = vunpack.c.l.b16 %v3106
    %v3295 = vunpack.c.h.b16 %v3106
    %v3296 = vunpack.c.l.b16 %v3107
    %v3297 = vunpack.c.h.b16 %v3107
    %v3298 = vunpack.c.l.b16 %v3108
    %v3299 = vunpack.c.h.b16 %v3108
    %v3300 = vunpack.c.l.b16 %v3109
    %v3301 = vunpack.c.h.b16 %v3109
    %v3302 = vunpack.c.l.b16 %v3110
    %v3303 = vunpack.c.h.b16 %v3110
    %v3304 = vunpack.c.l.b16 %v3111
    %v3305 = vunpack.c.h.b16 %v3111
    %v3306 = vunpack.c.l.b16 %v3112
    %v3307 = vunpack.c.h.b16 %v3112
    %v3308 = vunpack.c.l.b16 %v3113
    %v3309 = vunpack.c.h.b16 %v3113
    %v3310 = vunpack.c.l.b16 %v3114
    %v3311 = vunpack.c.h.b16 %v3114
    %v3312 = vunpack.c.l.b16 %v3115
    %v3313 = vunpack.c.h.b16 %v3115
    %v3314 = vpack.c.b16 %v3188, %v3186
    %v3315 = vpack.c.b16 %v3189, %v3187
    %v3316 = vpack.c.b16 %v3192, %v3190
    %v3317 = vpack.c.b16 %v3193, %v3191
    %v3318 = vpack.c.b16 %v3196, %v3194
    %v3319 = vpack.c.b16 %v3197, %v3195
    %v3320 = vpack.c.b16 %v3200, %v3198
    %v3321 = vpack.c.b16 %v3201, %v3199
    %v3322 = vpack.c.b16 %v3204, %v3202
    %v3323 = vpack.c.b16 %v3205, %v3203
    %v3324 = vpack.c.b16 %v3208, %v3206
    %v3325 = vpack.c.b16 %v3209, %v3207
    %v3326 = vpack.c.b16 %v3212, %v3210
    %v3327 = vpack.c.b16 %v3213, %v3211
    %v3328 = vpack.c.b16 %v3216, %v3214
    %v3329 = vpack.c.b16 %v3217, %v3215
    %v3330 = vpack.c.b16 %v3220, %v3218
    %v3331 = vpack.c.b16 %v3221, %v3219
    %v3332 = vpack.c.b16 %v3224, %v3222
    %v3333 = vpack.c.b16 %v3225, %v3223
    %v3334 = vpack.c.b16 %v3228, %v3226
    %v3335 = vpack.c.b16 %v3229, %v3227
    %v3336 = vpack.c.b16 %v3232, %v3230
    %v3337 = vpack.c.b16 %v3233, %v3231
    %v3338 = vpack.c.b16 %v3236, %v3234
    %v3339 = vpack.c.b16 %v3237, %v3235
    %v3340 = vpack.c.b16 %v3240, %v3238
    %v3341 = vpack.c.b16 %v3241, %v3239
    %v3342 = vpack.c.b16 %v3244, %v3242
    %v3343 = vpack.c.b16 %v3245, %v3243
    %v3344 = vpack.c.b16 %v3248, %v3246
    %v3345 = vpack.c.b16 %v3249, %v3247
    %v3346 = vpack.c.b16 %v3252, %v3250
    %v3347 = vpack.c.b16 %v3253, %v3251
    %v3348 = vpack.c.b16 %v3256, %v3254
    %v3349 = vpack.c.b16 %v3257, %v3255
    %v3350 = vpack.c.b16 %v3260, %v3258
    %v3351 = vpack.c.b16 %v3261, %v3259
    %v3352 = vpack.c.b16 %v3264, %v3262
    %v3353 = vpack.c.b16 %v3265, %v3263
    %v3354 = vpack.c.b16 %v3268, %v3266
    %v3355 = vpack.c.b16 %v3269, %v3267
    %v3356 = vpack.c.b16 %v3272, %v3270
    %v3357 = vpack.c.b16 %v3273, %v3271
    %v3358 = vpack.c.b16 %v3276, %v3274
    %v3359 = vpack.c.b16 %v3277, %v3275
    %v3360 = vpack.c.b16 %v3280, %v3278
    %v3361 = vpack.c.b16 %v3281, %v3279
    %v3362 = vpack.c.b16 %v3284, %v3282
    %v3363 = vpack.c.b16 %v3285, %v3283
    %v3364 = vpack.c.b16 %v3288, %v3286
    %v3365 = vpack.c.b16 %v3289, %v3287
    %v3366 = vpack.c.b16 %v3292, %v3290
    %v3367 = vpack.c.b16 %v3293, %v3291
    %v3368 = vpack.c.b16 %v3296, %v3294
    %v3369 = vpack.c.b16 %v3297, %v3295
    %v3370 = vpack.c.b16 %v3300, %v3298
    %v3371 = vpack.c.b16 %v3301, %v3299
    %v3372 = vpack.c.b16 %v3304, %v3302
    %v3373 = vpack.c.b16 %v3305, %v3303
    %v3374 = vpack.c.b16 %v3308, %v3306
    %v3375 = vpack.c.b16 %v3309, %v3307
    %v3376 = vpack.c.b16 %v3312, %v3310
    %v3377 = vpack.c.b16 %v3313, %v3311
    %3442 = vmatpush.bf16.msra.mxu0 %v3328
    %3443 = vmatpush.bf16.msra.mxu0 %v3326
    %3444 = vmatpush.bf16.msra.mxu0 %v3324
    %3445 = vmatpush.bf16.msra.mxu0 %v3322
    %3446 = vmatpush.bf16.msra.mxu0 %v3320
    %3447 = vmatpush.bf16.msra.mxu0 %v3318
    %3448 = vmatpush.bf16.msra.mxu0 %v3316
    %3449 = vmatpush.bf16.msra.mxu0 %v3314
    %3450 = vmatmul.bf16.gmra.mxu0 %v3048
    %v3451 = vpop.f32.mrf.mxu0
    %v3452 = vadd.f32 %v3118, %v3451
    %v3453 = vpop.f32.mrf.mxu0
    %v3454 = vadd.f32 %v3118, %v3453
    %3455 = vdwg.mxu0
    %3456 = vmatpush.bf16.msra.mxu0 %v3344
    %3457 = vmatpush.bf16.msra.mxu0 %v3342
    %3458 = vmatpush.bf16.msra.mxu0 %v3340
    %3459 = vmatpush.bf16.msra.mxu0 %v3338
    %3460 = vmatpush.bf16.msra.mxu0 %v3336
    %3461 = vmatpush.bf16.msra.mxu0 %v3334
    %3462 = vmatpush.bf16.msra.mxu0 %v3332
    %3463 = vmatpush.bf16.msra.mxu0 %v3330
    %3464 = vmatmul.bf16.gmra.mxu0 %v3049
    %v3465 = vpop.f32.mrf.mxu0
    %v3466 = vadd.f32 %v3452, %v3465
    %v3467 = vpop.f32.mrf.mxu0
    %v3468 = vadd.f32 %v3454, %v3467
    %3469 = vdwg.mxu0
    %3470 = vmatpush.bf16.msra.mxu0 %v3360
    %3471 = vmatpush.bf16.msra.mxu0 %v3358
    %3472 = vmatpush.bf16.msra.mxu0 %v3356
    %3473 = vmatpush.bf16.msra.mxu0 %v3354
    %3474 = vmatpush.bf16.msra.mxu0 %v3352
    %3475 = vmatpush.bf16.msra.mxu0 %v3350
    %3476 = vmatpush.bf16.msra.mxu0 %v3348
    %3477 = vmatpush.bf16.msra.mxu0 %v3346
    %3478 = vmatmul.bf16.gmra.mxu0 %v3050
    %v3479 = vpop.f32.mrf.mxu0
    %v3480 = vadd.f32 %v3466, %v3479
    %v3481 = vpop.f32.mrf.mxu0
    %v3482 = vadd.f32 %v3468, %v3481
    %3483 = vdwg.mxu0
    %3484 = vmatpush.bf16.msra.mxu0 %v3376
    %3485 = vmatpush.bf16.msra.mxu0 %v3374
    %3486 = vmatpush.bf16.msra.mxu0 %v3372
    %3487 = vmatpush.bf16.msra.mxu0 %v3370
    %3488 = vmatpush.bf16.msra.mxu0 %v3368
    %3489 = vmatpush.bf16.msra.mxu0 %v3366
    %3490 = vmatpush.bf16.msra.mxu0 %v3364
    %3491 = vmatpush.bf16.msra.mxu0 %v3362
    %3492 = vmatmul.bf16.gmra.mxu0 %v3051
    %v3493 = vpop.f32.mrf.mxu0
    %v3494 = vadd.f32 %v3480, %v3493
    %v3495 = vpop.f32.mrf.mxu0
    %v3496 = vadd.f32 %v3482, %v3495
    %3497 = vdwg.mxu0
    %3498 = vmatpush.bf16.msra.mxu0 %v3329
    %3499 = vmatpush.bf16.msra.mxu0 %v3327
    %3500 = vmatpush.bf16.msra.mxu0 %v3325
    %3501 = vmatpush.bf16.msra.mxu0 %v3323
    %3502 = vmatpush.bf16.msra.mxu0 %v3321
    %3503 = vmatpush.bf16.msra.mxu0 %v3319
    %3504 = vmatpush.bf16.msra.mxu0 %v3317
    %3505 = vmatpush.bf16.msra.mxu0 %v3315
    %3506 = vmatmul.bf16.gmra.mxu0 %v3048
    %v3507 = vpop.f32.mrf.mxu0
    %v3508 = vadd.f32 %v3119, %v3507
    %v3509 = vpop.f32.mrf.mxu0
    %v3510 = vadd.f32 %v3119, %v3509
    %3511 = vdwg.mxu0
    %3512 = vmatpush.bf16.msra.mxu0 %v3345
    %3513 = vmatpush.bf16.msra.mxu0 %v3343
    %3514 = vmatpush.bf16.msra.mxu0 %v3341
    %3515 = vmatpush.bf16.msra.mxu0 %v3339
    %3516 = vmatpush.bf16.msra.mxu0 %v3337
    %3517 = vmatpush.bf16.msra.mxu0 %v3335
    %3518 = vmatpush.bf16.msra.mxu0 %v3333
    %3519 = vmatpush.bf16.msra.mxu0 %v3331
    %3520 = vmatmul.bf16.gmra.mxu0 %v3049
    %v3521 = vpop.f32.mrf.mxu0
    %v3522 = vadd.f32 %v3508, %v3521
    %v3523 = vpop.f32.mrf.mxu0
    %v3524 = vadd.f32 %v3510, %v3523
    %3525 = vdwg.mxu0
    %3526 = vmatpush.bf16.msra.mxu0 %v3361
    %3527 = vmatpush.bf16.msra.mxu0 %v3359
    %3528 = vmatpush.bf16.msra.mxu0 %v3357
    %3529 = vmatpush.bf16.msra.mxu0 %v3355
    %3530 = vmatpush.bf16.msra.mxu0 %v3353
    %3531 = vmatpush.bf16.msra.mxu0 %v3351
    %3532 = vmatpush.bf16.msra.mxu0 %v3349
    %3533 = vmatpush.bf16.msra.mxu0 %v3347
    %3534 = vmatmul.bf16.gmra.mxu0 %v3050
    %v3535 = vpop.f32.mrf.mxu0
    %v3536 = vadd.f32 %v3522, %v3535
    %v3537 = vpop.f32.mrf.mxu0
    %v3538 = vadd.f32 %v3524, %v3537
    %3539 = vdwg.mxu0
    %3540 = vmatpush.bf16.msra.mxu0 %v3377
    %3541 = vmatpush.bf16.msra.mxu0 %v3375
    %3542 = vmatpush.bf16.msra.mxu0 %v3373
    %3543 = vmatpush.bf16.msra.mxu0 %v3371
    %3544 = vmatpush.bf16.msra.mxu0 %v3369
    %3545 = vmatpush.bf16.msra.mxu0 %v3367
    %3546 = vmatpush.bf16.msra.mxu0 %v3365
    %3547 = vmatpush.bf16.msra.mxu0 %v3363
    %3548 = vmatmul.bf16.gmra.mxu0 %v3051
    %v3549 = vpop.f32.mrf.mxu0
    %v3550 = vadd.f32 %v3536, %v3549
    %v3551 = vpop.f32.mrf.mxu0
    %v3552 = vadd.f32 %v3538, %v3551
    %3553 = vdwg.mxu0
    %v3554 = vld [vmem:[%s11] sm:$0x3]
    %v3555 = vld [vmem:[#allocation17] sm:$0x3]
    %v3556 = vadd.f32 %v3494, %v3550
    %3557 = vadd.xlane.f32.xlu0 %v3556
    %v3558 = vpop.xlane.xlu0 %3557
    %v3559 = vadd.f32 %v3496, %v3552
    %3560 = vadd.xlane.f32.xlu0 %v3559
    %v3561 = vpop.xlane.xlu0 %3560
    %v3562 = vrcp.pop 256.0
    %v3563 = vmul.f32 256.0, %v3562
    %v3564 = vsub.f32 1.0, %v3563
    %v3565 = vmul.f32 %v3562, %v3564
    %v3566 = vadd.f32 %v3562, %v3565
    %vm3567 = vweird.f32 %v3562
    %v3568 = vsel %vm3567, %v3562, %v3566
    %v3569 = vmul.f32 %v3558, %v3568
    %v3570 = vmul.f32 %v3561, %v3568
    %v3571 = vsub.f32 %v3494, %v3569
    %v3572 = vsub.f32 %v3550, %v3569
    %v3573 = vsub.f32 %v3496, %v3570
    %v3574 = vsub.f32 %v3552, %v3570
    %v3575 = vmul.f32 %v3571, %v3571
    %v3576 = vmul.f32 %v3572, %v3572
    %v3577 = vmul.f32 %v3573, %v3573
    %v3578 = vmul.f32 %v3574, %v3574
    %v3579 = vadd.f32 %v3575, %v3576
    %3580 = vadd.xlane.f32.xlu0 %v3579
    %v3581 = vpop.xlane.xlu0 %3580
    %v3582 = vadd.f32 %v3577, %v3578
    %3583 = vadd.xlane.f32.xlu0 %v3582
    %v3584 = vpop.xlane.xlu0 %3583
    %v3585 = vmul.f32 %v3581, %v3568
    %v3586 = vmul.f32 %v3584, %v3568
    %v3587 = vadd.f32 %v3585, 1e-05
    %v3588 = vadd.f32 %v3586, 1e-05
    %v3589 = vrsqrt.pop %v3587
    %v3590 = vmul.f32 %v3589, %v3587
    %v3591 = vmul.f32 %v3590, %v3589
    %v3592 = vmul.f32 0.5, %v3591
    %v3593 = vsub.f32 1.5, %v3592
    %v3594 = vmul.f32 %v3589, %v3593
    %vm3595 = vweird.f32 %v3587
    %vm3596 = vweird.f32 %v3589
    %vm3597 = vmor %vm3595, %vm3596
    %v3598 = vsel %vm3597, %v3589, %v3594
    %v3599 = vrsqrt.pop %v3588
    %v3600 = vmul.f32 %v3599, %v3588
    %v3601 = vmul.f32 %v3600, %v3599
    %v3602 = vmul.f32 0.5, %v3601
    %v3603 = vsub.f32 1.5, %v3602
    %v3604 = vmul.f32 %v3599, %v3603
    %vm3605 = vweird.f32 %v3588
    %vm3606 = vweird.f32 %v3599
    %vm3607 = vmor %vm3605, %vm3606
    %v3608 = vsel %vm3607, %v3599, %v3604
    %v3609 = vmul.f32 %v3571, %v3598
    %v3610 = vmul.f32 %v3572, %v3598
    %v3611 = vmul.f32 %v3573, %v3608
    %v3612 = vmul.f32 %v3574, %v3608
    %v3614 = vperm.slane %v3554, 0
    %v3615 = vperm.slane %v3554, 1
    %v3618 = vmul.f32 %v3609, %v3614
    %v3619 = vmul.f32 %v3610, %v3615
    %v3620 = vmul.f32 %v3611, %v3614
    %v3621 = vmul.f32 %v3612, %v3615
    %v3623 = vperm.slane %v3555, 0
    %v3624 = vperm.slane %v3555, 1
    %v3627 = vadd.f32 %v3618, %v3623
    %v3628 = vadd.f32 %v3619, %v3624
    %v3629 = vadd.f32 %v3620, %v3623
    %v3630 = vadd.f32 %v3621, %v3624
    %v3631 = vmul.f32 %v3627, 0.2
    %v3632 = vmul.f32 %v3628, 0.2
    %v3633 = vmul.f32 %v3629, 0.2
    %v3634 = vmul.f32 %v3630, 0.2
    %v3635 = vmax.f32 %v3627, %v3631
    %v3636 = vmax.f32 %v3628, %v3632
    %v3637 = vmax.f32 %v3629, %v3633
    %v3638 = vmax.f32 %v3630, %v3634
    %v3639 = vld [vmem:[%s13] sm:$0x3]
    %v3641 = vperm.slane %v3639, 0
    %v3642 = vperm.slane %v3639, 1
    %v3645 = vmul.f32 %v3635, %v3641
    %v3646 = vmul.f32 %v3636, %v3642
    %v3647 = vmul.f32 %v3637, %v3641
    %v3648 = vmul.f32 %v3638, %v3642
    %v3649 = vadd.f32 %v3645, %v3646
    %3650 = vadd.xlane.f32.xlu0 %v3649
    %v3651 = vpop.xlane.xlu0 %3650
    %v3652 = vadd.f32 %v3647, %v3648
    %3653 = vadd.xlane.f32.xlu0 %v3652
    %v3654 = vpop.xlane.xlu0 %3653
    %v3655 = vld [vmem:[#allocation2] sm:$0x1]
    %3657 = vset.pattern.permute.xlu0 0
    %3658 = vperm.xlu0 %3657, %v3655
    %v3659 = vpop.permute.xlu0 %3658
    %v3661 = vperm.slane %v3659, 0
    %v3662 = vadd.f32 %v3651, %v3661
    %v3663 = vadd.f32 %v3654, %v3661
    %v3666 = vlaneseq
    %v3667 = vand.u32 %v3666, 127
    %v3668 = vperm.slane %v3662, %v3667
    %v3669 = vadd.s32 %v3667, 4294967288
    %v3670 = vperm.slane %v3663, %v3669
    %vm3671 = vcmask 130112
    %v3672 = vsel %vm3671, %v3670, %v3668
    %vm3674 = vcmask 122880
    %3675 = vst.msk [vmem:[#allocation18] sm:$0x1] %vm3674, %v3672
    // Predicated region
    $region98: #{tpu_custom_call.1} parent=1 // pred_check
      _
    $region99: #{tpu_custom_call.1} parent=1 // pred_check_branch
      %3677 = sbr.rel (0) target = $region101
    $region100: #{tpu_custom_call.1} parent=1 // pred_region
      %3679 = vsyncadd [#allocation5], 0
      %s3681 = sshll.u32 [#allocation18], 4
      %s3682 = int_to_ptr.vmem [resolvable:$true] %s3681
      %s3683 = sshll.u32 %s15, 4
      %s3684 = int_to_ptr.hbm [resolvable:$true] %s3683
      %3686 = dma.vmem_to_hbm [thread:$0]  %s3682, 16, %s3684, [#allocation5]
    $region101: #{tpu_custom_call.1} parent=1 // pred_fallthru
      _
    // Predicated region
    $region102: #{tpu_custom_call.1} parent=1 // pred_check
      _
    $region103: #{tpu_custom_call.1} parent=1 // pred_check_branch
      %3688 = sbr.rel (0) target = $region105
    $region104: #{tpu_custom_call.1} parent=1 // pred_region
      %3690 = dma.done [#allocation5], 16
    $region105: #{tpu_custom_call.1} parent=1 // pred_fallthru
      _
    %3691 = vsyncpa [#allocation4], 1
    %3692 = vsyncpa [#allocation7], 1
    %3693 = vsyncpa [#allocation10], 1
    %3694 = vsyncpa [#allocation13], 1
    %3695 = vsyncpa [#allocation16], 1
    %3696 = vsyncpa [#allocation5], 1

</llo_original>
